<compile_context>
chip_gen: v6e
topology: v6e:2x2x1
jax: 0.10.0
libtpu: 0.0.40
codegen_flags: <defaults>
</compile_context>

<pallas_src>
import numpy as np
import jax
import jax.numpy as jnp
from jax import lax
from jax.experimental import pallas as pl
from jax.experimental.pallas import tpu as pltpu


# ----------------------------------------------------------------------------
# Static network geometry (LeNet on 3x32x32)
# ----------------------------------------------------------------------------
C1_IN, C1_OUT, K = 3, 6, 5
C2_IN, C2_OUT = 6, 16
H0 = W0 = 32
H1 = W1 = H0 - K + 1           # 28  (conv1 output)
HP1 = WP1 = H1 // 2            # 14  (pool1 output)
H2 = W2 = HP1 - K + 1          # 10  (conv2 output)
HP2 = WP2 = H2 // 2            # 5   (pool2 output)
FC_IN = C2_OUT * HP2 * WP2     # 400
FC1, FC2, FC3 = 120, 84, 10

LANES = 128                    # padded K / FC width (lane-dense)
N_PAD = 256                    # padded conv-output / pool-selector width
BB = 16                        # samples per grid step (multiple of 16 keeps bf16
                               # sublane tiles aligned; sweepable 16/32)
MXU_DTYPE = jnp.bfloat16       # MXU operand dtype; accumulation stays f32


# ----------------------------------------------------------------------------
# Fused kernel: conv1 -> pool1 -> conv2 -> pool2 -> fc1 -> fc2 -> fc3
# ----------------------------------------------------------------------------
def _net_kernel(x_ref, w1_ref, b1_ref, se1_ref, w2_ref, b2_ref, se2_ref,
                fw1_ref, fb1_ref, fw2_ref, fb2_ref, fw3_ref, fb3_ref, o_ref):
    f32 = jnp.float32
    mxu = MXU_DTYPE

    # ---- conv1 + bias + ReLU : rows (h, b), lanes c*32+w (pad 96->128) -----
    xflat = x_ref[...]                                     # (H0*BB, 128) bf16
    acc = jnp.dot(xflat[0:H1 * BB], w1_ref[0], preferred_element_type=f32)
    for dh in range(1, K):                                 # aligned slices: dh*BB % 16 == 0
        acc += jnp.dot(xflat[dh * BB:(dh + H1) * BB], w1_ref[dh],
                       preferred_element_type=f32)
    acc = jnp.maximum(acc + b1_ref[...], 0.0)              # (H1*BB, 256) f32

    # ---- pool1: cols via one concat 0/1-selector matmul, rows via reshape --
    cs = jnp.dot(acc.astype(mxu), se1_ref[...], preferred_element_type=f32)
    cols = jnp.maximum(cs[:, :LANES], cs[:, LANES:])       # (H1*BB, 128)
    c3 = cols.reshape(HP1, 2 * BB, LANES)                  # tile-aligned split
    pooled1 = jnp.maximum(c3[:, :BB, :], c3[:, BB:, :]).reshape(HP1 * BB, LANES)
    p1 = pooled1.astype(mxu)                               # lanes c*14+q (pad 84->128)

    # ---- conv2 + bias + ReLU ------------------------------------------------
    acc2 = jnp.dot(p1[0:H2 * BB], w2_ref[0], preferred_element_type=f32)
    for dh in range(1, K):
        acc2 += jnp.dot(p1[dh * BB:(dh + H2) * BB], w2_ref[dh],
                        preferred_element_type=f32)
    acc2 = jnp.maximum(acc2 + b2_ref[...], 0.0)            # (H2*BB, 256) f32

    # ---- pool2 ---------------------------------------------------------------
    cs2 = jnp.dot(acc2.astype(mxu), se2_ref[...], preferred_element_type=f32)
    cols2 = jnp.maximum(cs2[:, :LANES], cs2[:, LANES:])    # (H2*BB, 128)
    c23 = cols2.reshape(HP2, 2 * BB, LANES)
    pooled2 = jnp.maximum(c23[:, :BB, :], c23[:, BB:, :]).reshape(HP2 * BB, LANES)
    p2 = pooled2.astype(mxu)                               # rows (r, b), lanes c*5+q

    # ---- fc1 (+ReLU) as 5 row-slice matmuls, then fc2 (+ReLU), fc3 ----------
    h = jnp.dot(p2[0:BB], fw1_ref[0], preferred_element_type=f32)
    for r in range(1, HP2):
        h += jnp.dot(p2[r * BB:(r + 1) * BB], fw1_ref[r],
                     preferred_element_type=f32)
    h = jnp.maximum(h + fb1_ref[...], 0.0)                 # (BB, 128)
    h = jnp.dot(h.astype(mxu), fw2_ref[...], preferred_element_type=f32) + fb2_ref[...]
    h = jnp.maximum(h, 0.0)
    o_ref[...] = (jnp.dot(h.astype(mxu), fw3_ref[...], preferred_element_type=f32)
                  + fb3_ref[...])                          # (BB, 128), cols 0..9 valid


# ----------------------------------------------------------------------------
# pallas_call wrapper
# ----------------------------------------------------------------------------
_CONST_KEYS = ("w1", "b1", "se1", "w2", "b2", "se2",
               "fw1", "fb1", "fw2", "fb2", "fw3", "fb3")


def _const_spec(arr):
    return pl.BlockSpec(arr.shape, lambda i: (0,) * arr.ndim)


def net_forward(kp, x):
    """x: (B, 3, 32, 32) NCHW float32 -> logits (B, 10)."""
    B = x.shape[0]
    Bp = ((B + BB - 1) // BB) * BB
    nblk = Bp // BB

    # NCHW -> per-block (H0*BB, C*W0) rows ordered (h, b); pad lanes 96 -> 128.
    xp = jnp.pad(x, ((0, Bp - B), (0, 0), (0, 0), (0, 0)))
    xp = xp.reshape(nblk, BB, C1_IN, H0, W0)
    xp = jnp.transpose(xp, (0, 3, 1, 2, 4))                # (nblk, H0, BB, C, W0)
    xp = xp.reshape(nblk * H0 * BB, C1_IN * W0)
    xp = jnp.pad(xp, ((0, 0), (0, LANES - C1_IN * W0))).astype(MXU_DTYPE)

    mm = 2 * 128 * N_PAD * BB * K * (H1 + H2)              # banded conv matmuls
    pool = 2 * N_PAD * N_PAD * BB * (H1 + H2)              # pool column selectors
    fc = 2 * BB * 128 * 128 * (HP2 + 2)                    # fc1(5) + fc2 + fc3
    flops = nblk * (mm + pool + fc)
    const_bytes = sum(int(kp[k].size) * kp[k].dtype.itemsize for k in _CONST_KEYS)
    bytes_accessed = int(xp.size) * xp.dtype.itemsize + Bp * LANES * 4 + const_bytes

    out = pl.pallas_call(
        _net_kernel,
        out_shape=jax.ShapeDtypeStruct((Bp, LANES), jnp.float32),
        grid=(nblk,),
        in_specs=[pl.BlockSpec((H0 * BB, LANES), lambda i: (i, 0))]
                 + [_const_spec(kp[k]) for k in _CONST_KEYS],
        out_specs=pl.BlockSpec((BB, LANES), lambda i: (i, 0)),
        compiler_params=pltpu.CompilerParams(dimension_semantics=("parallel",)),
        cost_estimate=pl.CostEstimate(flops=int(flops), transcendentals=0,
                                      bytes_accessed=int(bytes_accessed)),
    )(xp, *[kp[k] for k in _CONST_KEYS])
    return out[:B, :FC3]


# ----------------------------------------------------------------------------
# One-time parameter preprocessing (PyTorch layout -> kernel layout)
# ----------------------------------------------------------------------------
def _banded_conv_weights(w, win):
    """(Cout,Cin,KH,KW) -> (KH, Cin*win, Cout*wo) banded conv-as-matmul weights."""
    w = np.asarray(w, np.float32)
    cout, cin, kh, kw = w.shape
    wo = win - kw + 1
    wb = np.zeros((kh, cin * win, cout * wo), np.float32)
    wt = np.transpose(w, (2, 3, 1, 0))                     # (kh, kw, cin, cout)
    for dh in range(kh):
        for dw in range(kw):
            for j in range(wo):
                wb[dh, (j + dw)::win, j::wo] = wt[dh, dw]
    return wb


def _pad2(a, rows, cols):
    a = np.asarray(a, np.float32)
    out = np.zeros(a.shape[:-2] + (rows, cols), np.float32)
    out[..., :a.shape[-2], :a.shape[-1]] = a
    return out


def _pool_col_selector(nch, wo):
    """Concatenated even|odd column 0/1 selector, (N_PAD, N_PAD); exact in bf16."""
    wp = wo // 2
    s = np.zeros((N_PAD, N_PAD), np.float32)
    for c in range(nch):
        for q in range(wp):
            s[c * wo + 2 * q, c * wp + q] = 1.0                    # even -> [0,128)
            s[c * wo + 2 * q + 1, LANES + c * wp + q] = 1.0        # odd  -> [128,256)
    return s


def prepare_params(params):
    # Banded conv weights: K padded 96/84 -> 128, N padded 168/160 -> 256.
    w1 = _pad2(_banded_conv_weights(params["conv1_w"], W0), LANES, N_PAD)
    w2 = _pad2(_banded_conv_weights(params["conv2_w"], WP1), LANES, N_PAD)
    b1 = np.zeros((1, N_PAD), np.float32)
    b1[0, :C1_OUT * W1] = np.repeat(np.asarray(params["conv1_b"], np.float32), W1)
    b2 = np.zeros((1, N_PAD), np.float32)
    b2[0, :C2_OUT * W2] = np.repeat(np.asarray(params["conv2_b"], np.float32), W2)

    se1 = _pool_col_selector(C1_OUT, W1)
    se2 = _pool_col_selector(C2_OUT, W2)

    # fc1 split by pooled row r: kernel lane layout is c*5+q, torch flat is c*25+r*5+q.
    f1t = np.asarray(params["fc1_w"], np.float32).T        # (400, 120)
    fw1 = np.zeros((HP2, LANES, LANES), np.float32)
    for r in range(HP2):
        for c in range(C2_OUT):
            for q in range(WP2):
                fw1[r, c * WP2 + q, :FC1] = f1t[c * HP2 * WP2 + r * WP2 + q, :]
    fb1 = np.zeros((1, LANES), np.float32)
    fb1[0, :FC1] = np.asarray(params["fc1_b"], np.float32)
    fw2 = _pad2(np.asarray(params["fc2_w"], np.float32).T, LANES, LANES)
    fb2 = np.zeros((1, LANES), np.float32)
    fb2[0, :FC2] = np.asarray(params["fc2_b"], np.float32)
    fw3 = _pad2(np.asarray(params["fc3_w"], np.float32).T, LANES, LANES)
    fb3 = np.zeros((1, LANES), np.float32)
    fb3[0, :FC3] = np.asarray(params["fc3_b"], np.float32)

    kp = {"w1": w1, "b1": b1, "se1": se1, "w2": w2, "b2": b2, "se2": se2,
          "fw1": fw1, "fb1": fb1, "fw2": fw2, "fb2": fb2, "fw3": fw3, "fb3": fb3}
    bf16_keys = {"w1", "se1", "w2", "se2", "fw1", "fw2", "fw3"}   # MXU operands
    return {k: jnp.asarray(v, MXU_DTYPE if k in bf16_keys else jnp.float32)
            for k, v in kp.items()}


# ----------------------------------------------------------------------------
# Parameter init and pure-JAX f32 reference
# ----------------------------------------------------------------------------
def init_params(key):
    ks = jax.random.split(key, 10)
    p = {}
    p["conv1_w"] = 0.1 * jax.random.normal(ks[0], (6, 3, 5, 5), jnp.float32)
    p["conv1_b"] = 0.1 * jax.random.normal(ks[1], (6,), jnp.float32)
    p["conv2_w"] = 0.1 * jax.random.normal(ks[2], (16, 6, 5, 5), jnp.float32)
    p["conv2_b"] = 0.1 * jax.random.normal(ks[3], (16,), jnp.float32)
    p["fc1_w"] = 0.05 * jax.random.normal(ks[4], (120, 16 * 5 * 5), jnp.float32)
    p["fc1_b"] = 0.05 * jax.random.normal(ks[5], (120,), jnp.float32)
    p["fc2_w"] = 0.05 * jax.random.normal(ks[6], (84, 120), jnp.float32)
    p["fc2_b"] = 0.05 * jax.random.normal(ks[7], (84,), jnp.float32)
    p["fc3_w"] = 0.05 * jax.random.normal(ks[8], (10, 84), jnp.float32)
    p["fc3_b"] = 0.05 * jax.random.normal(ks[9], (10,), jnp.float32)
    return p


def reference_forward(params, x):
    """Plain-JAX f32 reference matching the PyTorch Net forward."""
    prec = lax.Precision.HIGHEST

    def conv_relu(x, w, b):
        y = lax.conv_general_dilated(x, w, (1, 1), "VALID",
                                     dimension_numbers=("NCHW", "OIHW", "NCHW"),
                                     precision=prec)
        return jax.nn.relu(y + b[None, :, None, None])

    def pool(x):
        return lax.reduce_window(x, -jnp.inf, lax.max,
                                 (1, 1, 2, 2), (1, 1, 2, 2), "VALID")

    x = pool(conv_relu(x, params["conv1_w"], params["conv1_b"]))
    x = pool(conv_relu(x, params["conv2_w"], params["conv2_b"]))
    x = x.reshape(x.shape[0], -1)
    x = jax.nn.relu(jnp.dot(x, params["fc1_w"].T, precision=prec) + params["fc1_b"])
    x = jax.nn.relu(jnp.dot(x, params["fc2_w"].T, precision=prec) + params["fc2_b"])
    return jnp.dot(x, params["fc3_w"].T, precision=prec) + params["fc3_b"]


if __name__ == "__main__":
    key = jax.random.PRNGKey(0)
    k_param, k_input = jax.random.split(key)
    params = init_params(k_param)
    kparams = prepare_params(params)       # one-time layout / padding / bf16 prep

    # CIFAR-style NCHW input, batch=2 (32x32 required so flatten == 16*5*5).
    x = jax.random.normal(k_input, (2, C1_IN, H0, W0), dtype=jnp.float32)

    logits = jax.block_until_ready(jax.jit(net_forward)(kparams, x))
    assert logits.shape == (2, FC3) and logits.dtype == jnp.float32

    ref = jax.block_until_ready(jax.jit(reference_forward)(params, x))
    err = float(jnp.max(jnp.abs(logits - ref)))
    # MXU operands are bf16 (f32 accumulation, f32 elementwise); tolerance covers
    # bf16 rounding of inputs/weights/activations. Selectors & flatten perm are exact.
    assert jnp.allclose(logits, ref, rtol=2e-2, atol=2e-2), (
        f"mismatch vs reference, max abs err = {err}")
    print("KERNEL_OK")
</pallas_src>

<mosaic_0001>
module attributes {stable_mosaic.version = 11 : i64} {
  func.func @_net_kernel(%arg0: i32, %arg1: memref<512x128xbf16, #tpu.memory_space<vmem>>, %arg2: memref<5x128x256xbf16, #tpu.memory_space<vmem>>, %arg3: memref<1x256xf32, #tpu.memory_space<vmem>>, %arg4: memref<256x256xbf16, #tpu.memory_space<vmem>>, %arg5: memref<5x128x256xbf16, #tpu.memory_space<vmem>>, %arg6: memref<1x256xf32, #tpu.memory_space<vmem>>, %arg7: memref<256x256xbf16, #tpu.memory_space<vmem>>, %arg8: memref<5x128x128xbf16, #tpu.memory_space<vmem>>, %arg9: memref<1x128xf32, #tpu.memory_space<vmem>>, %arg10: memref<128x128xbf16, #tpu.memory_space<vmem>>, %arg11: memref<1x128xf32, #tpu.memory_space<vmem>>, %arg12: memref<128x128xbf16, #tpu.memory_space<vmem>>, %arg13: memref<1x128xf32, #tpu.memory_space<vmem>>, %arg14: memref<16x128xf32, #tpu.memory_space<vmem>>) attributes {dimension_semantics = [#tpu.dimension_semantics<parallel>], iteration_bounds = array<i64: 1>, scalar_prefetch = 0 : i64, scratch_operands = 0 : i64, tpu.core_type = #tpu.core_type<tc>, window_params = [{transform_indices = @transform_0, window_bounds = array<i64: 512, 128>}, {pipeline_mode = #tpu.pipeline_mode<synchronous>, transform_indices = @transform_1, window_bounds = array<i64: 5, 128, 256>}, {pipeline_mode = #tpu.pipeline_mode<synchronous>, transform_indices = @transform_2, window_bounds = array<i64: 1, 256>}, {pipeline_mode = #tpu.pipeline_mode<synchronous>, transform_indices = @transform_3, window_bounds = array<i64: 256, 256>}, {pipeline_mode = #tpu.pipeline_mode<synchronous>, transform_indices = @transform_4, window_bounds = array<i64: 5, 128, 256>}, {pipeline_mode = #tpu.pipeline_mode<synchronous>, transform_indices = @transform_5, window_bounds = array<i64: 1, 256>}, {pipeline_mode = #tpu.pipeline_mode<synchronous>, transform_indices = @transform_6, window_bounds = array<i64: 256, 256>}, {pipeline_mode = #tpu.pipeline_mode<synchronous>, transform_indices = @transform_7, window_bounds = array<i64: 5, 128, 128>}, {pipeline_mode = #tpu.pipeline_mode<synchronous>, transform_indices = @transform_8, window_bounds = array<i64: 1, 128>}, {pipeline_mode = #tpu.pipeline_mode<synchronous>, transform_indices = @transform_9, window_bounds = array<i64: 128, 128>}, {pipeline_mode = #tpu.pipeline_mode<synchronous>, transform_indices = @transform_10, window_bounds = array<i64: 1, 128>}, {pipeline_mode = #tpu.pipeline_mode<synchronous>, transform_indices = @transform_11, window_bounds = array<i64: 128, 128>}, {pipeline_mode = #tpu.pipeline_mode<synchronous>, transform_indices = @transform_12, window_bounds = array<i64: 1, 128>}, {transform_indices = @transform_13, window_bounds = array<i64: 16, 128>}]} {
    %c0 = arith.constant 0 : index
    %c0_0 = arith.constant 0 : index
    %0 = vector.load %arg1[%c0, %c0_0] : memref<512x128xbf16, #tpu.memory_space<vmem>>, vector<512x128xbf16>
    %1 = vector.extract_strided_slice %0 {offsets = [0, 0], sizes = [448, 128], strides = [1, 1]} : vector<512x128xbf16> to vector<448x128xbf16>
    %c0_1 = arith.constant 0 : index
    %c0_2 = arith.constant 0 : index
    %c0_3 = arith.constant 0 : index
    %2 = vector.load %arg2[%c0_1, %c0_2, %c0_3] : memref<5x128x256xbf16, #tpu.memory_space<vmem>>, vector<1x128x256xbf16>
    %3 = vector.shape_cast %2 : vector<1x128x256xbf16> to vector<128x256xbf16>
    %cst = arith.constant dense<0.000000e+00> : vector<448x256xf32>
    %4 = tpu.matmul %1, %3, %cst {dimension_numbers = #tpu.dot_dimension_numbers<[1], [0], [0], [1], [0, 0, 1, 1], [], []>} : vector<448x128xbf16>, vector<128x256xbf16>, vector<448x256xf32> -> vector<448x256xf32>
    %5 = vector.extract_strided_slice %0 {offsets = [16, 0], sizes = [448, 128], strides = [1, 1]} : vector<512x128xbf16> to vector<448x128xbf16>
    %c1 = arith.constant 1 : index
    %c0_4 = arith.constant 0 : index
    %c0_5 = arith.constant 0 : index
    %6 = vector.load %arg2[%c1, %c0_4, %c0_5] : memref<5x128x256xbf16, #tpu.memory_space<vmem>>, vector<1x128x256xbf16>
    %7 = vector.shape_cast %6 : vector<1x128x256xbf16> to vector<128x256xbf16>
    %cst_6 = arith.constant dense<0.000000e+00> : vector<448x256xf32>
    %8 = tpu.matmul %5, %7, %cst_6 {dimension_numbers = #tpu.dot_dimension_numbers<[1], [0], [0], [1], [0, 0, 1, 1], [], []>} : vector<448x128xbf16>, vector<128x256xbf16>, vector<448x256xf32> -> vector<448x256xf32>
    %9 = arith.addf %4, %8 : vector<448x256xf32>
    %10 = vector.extract_strided_slice %0 {offsets = [32, 0], sizes = [448, 128], strides = [1, 1]} : vector<512x128xbf16> to vector<448x128xbf16>
    %c2 = arith.constant 2 : index
    %c0_7 = arith.constant 0 : index
    %c0_8 = arith.constant 0 : index
    %11 = vector.load %arg2[%c2, %c0_7, %c0_8] : memref<5x128x256xbf16, #tpu.memory_space<vmem>>, vector<1x128x256xbf16>
    %12 = vector.shape_cast %11 : vector<1x128x256xbf16> to vector<128x256xbf16>
    %cst_9 = arith.constant dense<0.000000e+00> : vector<448x256xf32>
    %13 = tpu.matmul %10, %12, %cst_9 {dimension_numbers = #tpu.dot_dimension_numbers<[1], [0], [0], [1], [0, 0, 1, 1], [], []>} : vector<448x128xbf16>, vector<128x256xbf16>, vector<448x256xf32> -> vector<448x256xf32>
    %14 = arith.addf %9, %13 : vector<448x256xf32>
    %15 = vector.extract_strided_slice %0 {offsets = [48, 0], sizes = [448, 128], strides = [1, 1]} : vector<512x128xbf16> to vector<448x128xbf16>
    %c3 = arith.constant 3 : index
    %c0_10 = arith.constant 0 : index
    %c0_11 = arith.constant 0 : index
    %16 = vector.load %arg2[%c3, %c0_10, %c0_11] : memref<5x128x256xbf16, #tpu.memory_space<vmem>>, vector<1x128x256xbf16>
    %17 = vector.shape_cast %16 : vector<1x128x256xbf16> to vector<128x256xbf16>
    %cst_12 = arith.constant dense<0.000000e+00> : vector<448x256xf32>
    %18 = tpu.matmul %15, %17, %cst_12 {dimension_numbers = #tpu.dot_dimension_numbers<[1], [0], [0], [1], [0, 0, 1, 1], [], []>} : vector<448x128xbf16>, vector<128x256xbf16>, vector<448x256xf32> -> vector<448x256xf32>
    %19 = arith.addf %14, %18 : vector<448x256xf32>
    %20 = vector.extract_strided_slice %0 {offsets = [64, 0], sizes = [448, 128], strides = [1, 1]} : vector<512x128xbf16> to vector<448x128xbf16>
    %c4 = arith.constant 4 : index
    %c0_13 = arith.constant 0 : index
    %c0_14 = arith.constant 0 : index
    %21 = vector.load %arg2[%c4, %c0_13, %c0_14] : memref<5x128x256xbf16, #tpu.memory_space<vmem>>, vector<1x128x256xbf16>
    %22 = vector.shape_cast %21 : vector<1x128x256xbf16> to vector<128x256xbf16>
    %cst_15 = arith.constant dense<0.000000e+00> : vector<448x256xf32>
    %23 = tpu.matmul %20, %22, %cst_15 {dimension_numbers = #tpu.dot_dimension_numbers<[1], [0], [0], [1], [0, 0, 1, 1], [], []>} : vector<448x128xbf16>, vector<128x256xbf16>, vector<448x256xf32> -> vector<448x256xf32>
    %24 = arith.addf %19, %23 : vector<448x256xf32>
    %c0_16 = arith.constant 0 : index
    %c0_17 = arith.constant 0 : index
    %25 = vector.load %arg3[%c0_16, %c0_17] : memref<1x256xf32, #tpu.memory_space<vmem>>, vector<1x256xf32>
    %26 = vector.broadcast %25 : vector<1x256xf32> to vector<448x256xf32>
    %27 = arith.addf %24, %26 : vector<448x256xf32>
    %cst_18 = arith.constant 0.000000e+00 : f32
    %28 = vector.broadcast %cst_18 : f32 to vector<448x256xf32>
    %29 = arith.maximumf %27, %28 : vector<448x256xf32>
    %30 = arith.truncf %29 : vector<448x256xf32> to vector<448x256xbf16>
    %c0_19 = arith.constant 0 : index
    %c0_20 = arith.constant 0 : index
    %31 = vector.load %arg4[%c0_19, %c0_20] : memref<256x256xbf16, #tpu.memory_space<vmem>>, vector<256x256xbf16>
    %cst_21 = arith.constant dense<0.000000e+00> : vector<448x256xf32>
    %32 = tpu.matmul %30, %31, %cst_21 {dimension_numbers = #tpu.dot_dimension_numbers<[1], [0], [0], [1], [0, 0, 1, 1], [], []>} : vector<448x256xbf16>, vector<256x256xbf16>, vector<448x256xf32> -> vector<448x256xf32>
    %33 = vector.extract_strided_slice %32 {offsets = [0, 0], sizes = [448, 128], strides = [1, 1]} : vector<448x256xf32> to vector<448x128xf32>
    %34 = vector.extract_strided_slice %32 {offsets = [0, 128], sizes = [448, 128], strides = [1, 1]} : vector<448x256xf32> to vector<448x128xf32>
    %35 = arith.maximumf %33, %34 : vector<448x128xf32>
    %36 = vector.shape_cast %35 : vector<448x128xf32> to vector<14x32x128xf32>
    %37 = vector.extract_strided_slice %36 {offsets = [0, 0, 0], sizes = [14, 16, 128], strides = [1, 1, 1]} : vector<14x32x128xf32> to vector<14x16x128xf32>
    %38 = vector.extract_strided_slice %36 {offsets = [0, 16, 0], sizes = [14, 16, 128], strides = [1, 1, 1]} : vector<14x32x128xf32> to vector<14x16x128xf32>
    %39 = arith.maximumf %37, %38 : vector<14x16x128xf32>
    %40 = vector.shape_cast %39 : vector<14x16x128xf32> to vector<224x128xf32>
    %41 = arith.truncf %40 : vector<224x128xf32> to vector<224x128xbf16>
    %42 = vector.extract_strided_slice %41 {offsets = [0, 0], sizes = [160, 128], strides = [1, 1]} : vector<224x128xbf16> to vector<160x128xbf16>
    %c0_22 = arith.constant 0 : index
    %c0_23 = arith.constant 0 : index
    %c0_24 = arith.constant 0 : index
    %43 = vector.load %arg5[%c0_22, %c0_23, %c0_24] : memref<5x128x256xbf16, #tpu.memory_space<vmem>>, vector<1x128x256xbf16>
    %44 = vector.shape_cast %43 : vector<1x128x256xbf16> to vector<128x256xbf16>
    %cst_25 = arith.constant dense<0.000000e+00> : vector<160x256xf32>
    %45 = tpu.matmul %42, %44, %cst_25 {dimension_numbers = #tpu.dot_dimension_numbers<[1], [0], [0], [1], [0, 0, 1, 1], [], []>} : vector<160x128xbf16>, vector<128x256xbf16>, vector<160x256xf32> -> vector<160x256xf32>
    %46 = vector.extract_strided_slice %41 {offsets = [16, 0], sizes = [160, 128], strides = [1, 1]} : vector<224x128xbf16> to vector<160x128xbf16>
    %c1_26 = arith.constant 1 : index
    %c0_27 = arith.constant 0 : index
    %c0_28 = arith.constant 0 : index
    %47 = vector.load %arg5[%c1_26, %c0_27, %c0_28] : memref<5x128x256xbf16, #tpu.memory_space<vmem>>, vector<1x128x256xbf16>
    %48 = vector.shape_cast %47 : vector<1x128x256xbf16> to vector<128x256xbf16>
    %cst_29 = arith.constant dense<0.000000e+00> : vector<160x256xf32>
    %49 = tpu.matmul %46, %48, %cst_29 {dimension_numbers = #tpu.dot_dimension_numbers<[1], [0], [0], [1], [0, 0, 1, 1], [], []>} : vector<160x128xbf16>, vector<128x256xbf16>, vector<160x256xf32> -> vector<160x256xf32>
    %50 = arith.addf %45, %49 : vector<160x256xf32>
    %51 = vector.extract_strided_slice %41 {offsets = [32, 0], sizes = [160, 128], strides = [1, 1]} : vector<224x128xbf16> to vector<160x128xbf16>
    %c2_30 = arith.constant 2 : index
    %c0_31 = arith.constant 0 : index
    %c0_32 = arith.constant 0 : index
    %52 = vector.load %arg5[%c2_30, %c0_31, %c0_32] : memref<5x128x256xbf16, #tpu.memory_space<vmem>>, vector<1x128x256xbf16>
    %53 = vector.shape_cast %52 : vector<1x128x256xbf16> to vector<128x256xbf16>
    %cst_33 = arith.constant dense<0.000000e+00> : vector<160x256xf32>
    %54 = tpu.matmul %51, %53, %cst_33 {dimension_numbers = #tpu.dot_dimension_numbers<[1], [0], [0], [1], [0, 0, 1, 1], [], []>} : vector<160x128xbf16>, vector<128x256xbf16>, vector<160x256xf32> -> vector<160x256xf32>
    %55 = arith.addf %50, %54 : vector<160x256xf32>
    %56 = vector.extract_strided_slice %41 {offsets = [48, 0], sizes = [160, 128], strides = [1, 1]} : vector<224x128xbf16> to vector<160x128xbf16>
    %c3_34 = arith.constant 3 : index
    %c0_35 = arith.constant 0 : index
    %c0_36 = arith.constant 0 : index
    %57 = vector.load %arg5[%c3_34, %c0_35, %c0_36] : memref<5x128x256xbf16, #tpu.memory_space<vmem>>, vector<1x128x256xbf16>
    %58 = vector.shape_cast %57 : vector<1x128x256xbf16> to vector<128x256xbf16>
    %cst_37 = arith.constant dense<0.000000e+00> : vector<160x256xf32>
    %59 = tpu.matmul %56, %58, %cst_37 {dimension_numbers = #tpu.dot_dimension_numbers<[1], [0], [0], [1], [0, 0, 1, 1], [], []>} : vector<160x128xbf16>, vector<128x256xbf16>, vector<160x256xf32> -> vector<160x256xf32>
    %60 = arith.addf %55, %59 : vector<160x256xf32>
    %61 = vector.extract_strided_slice %41 {offsets = [64, 0], sizes = [160, 128], strides = [1, 1]} : vector<224x128xbf16> to vector<160x128xbf16>
    %c4_38 = arith.constant 4 : index
    %c0_39 = arith.constant 0 : index
    %c0_40 = arith.constant 0 : index
    %62 = vector.load %arg5[%c4_38, %c0_39, %c0_40] : memref<5x128x256xbf16, #tpu.memory_space<vmem>>, vector<1x128x256xbf16>
    %63 = vector.shape_cast %62 : vector<1x128x256xbf16> to vector<128x256xbf16>
    %cst_41 = arith.constant dense<0.000000e+00> : vector<160x256xf32>
    %64 = tpu.matmul %61, %63, %cst_41 {dimension_numbers = #tpu.dot_dimension_numbers<[1], [0], [0], [1], [0, 0, 1, 1], [], []>} : vector<160x128xbf16>, vector<128x256xbf16>, vector<160x256xf32> -> vector<160x256xf32>
    %65 = arith.addf %60, %64 : vector<160x256xf32>
    %c0_42 = arith.constant 0 : index
    %c0_43 = arith.constant 0 : index
    %66 = vector.load %arg6[%c0_42, %c0_43] : memref<1x256xf32, #tpu.memory_space<vmem>>, vector<1x256xf32>
    %67 = vector.broadcast %66 : vector<1x256xf32> to vector<160x256xf32>
    %68 = arith.addf %65, %67 : vector<160x256xf32>
    %cst_44 = arith.constant 0.000000e+00 : f32
    %69 = vector.broadcast %cst_44 : f32 to vector<160x256xf32>
    %70 = arith.maximumf %68, %69 : vector<160x256xf32>
    %71 = arith.truncf %70 : vector<160x256xf32> to vector<160x256xbf16>
    %c0_45 = arith.constant 0 : index
    %c0_46 = arith.constant 0 : index
    %72 = vector.load %arg7[%c0_45, %c0_46] : memref<256x256xbf16, #tpu.memory_space<vmem>>, vector<256x256xbf16>
    %cst_47 = arith.constant dense<0.000000e+00> : vector<160x256xf32>
    %73 = tpu.matmul %71, %72, %cst_47 {dimension_numbers = #tpu.dot_dimension_numbers<[1], [0], [0], [1], [0, 0, 1, 1], [], []>} : vector<160x256xbf16>, vector<256x256xbf16>, vector<160x256xf32> -> vector<160x256xf32>
    %74 = vector.extract_strided_slice %73 {offsets = [0, 0], sizes = [160, 128], strides = [1, 1]} : vector<160x256xf32> to vector<160x128xf32>
    %75 = vector.extract_strided_slice %73 {offsets = [0, 128], sizes = [160, 128], strides = [1, 1]} : vector<160x256xf32> to vector<160x128xf32>
    %76 = arith.maximumf %74, %75 : vector<160x128xf32>
    %77 = vector.shape_cast %76 : vector<160x128xf32> to vector<5x32x128xf32>
    %78 = vector.extract_strided_slice %77 {offsets = [0, 0, 0], sizes = [5, 16, 128], strides = [1, 1, 1]} : vector<5x32x128xf32> to vector<5x16x128xf32>
    %79 = vector.extract_strided_slice %77 {offsets = [0, 16, 0], sizes = [5, 16, 128], strides = [1, 1, 1]} : vector<5x32x128xf32> to vector<5x16x128xf32>
    %80 = arith.maximumf %78, %79 : vector<5x16x128xf32>
    %81 = vector.shape_cast %80 : vector<5x16x128xf32> to vector<80x128xf32>
    %82 = arith.truncf %81 : vector<80x128xf32> to vector<80x128xbf16>
    %83 = vector.extract_strided_slice %82 {offsets = [0, 0], sizes = [16, 128], strides = [1, 1]} : vector<80x128xbf16> to vector<16x128xbf16>
    %c0_48 = arith.constant 0 : index
    %c0_49 = arith.constant 0 : index
    %c0_50 = arith.constant 0 : index
    %84 = vector.load %arg8[%c0_48, %c0_49, %c0_50] : memref<5x128x128xbf16, #tpu.memory_space<vmem>>, vector<1x128x128xbf16>
    %85 = vector.shape_cast %84 : vector<1x128x128xbf16> to vector<128x128xbf16>
    %cst_51 = arith.constant dense<0.000000e+00> : vector<16x128xf32>
    %86 = tpu.matmul %83, %85, %cst_51 {dimension_numbers = #tpu.dot_dimension_numbers<[1], [0], [0], [1], [0, 0, 1, 1], [], []>} : vector<16x128xbf16>, vector<128x128xbf16>, vector<16x128xf32> -> vector<16x128xf32>
    %87 = vector.extract_strided_slice %82 {offsets = [16, 0], sizes = [16, 128], strides = [1, 1]} : vector<80x128xbf16> to vector<16x128xbf16>
    %c1_52 = arith.constant 1 : index
    %c0_53 = arith.constant 0 : index
    %c0_54 = arith.constant 0 : index
    %88 = vector.load %arg8[%c1_52, %c0_53, %c0_54] : memref<5x128x128xbf16, #tpu.memory_space<vmem>>, vector<1x128x128xbf16>
    %89 = vector.shape_cast %88 : vector<1x128x128xbf16> to vector<128x128xbf16>
    %cst_55 = arith.constant dense<0.000000e+00> : vector<16x128xf32>
    %90 = tpu.matmul %87, %89, %cst_55 {dimension_numbers = #tpu.dot_dimension_numbers<[1], [0], [0], [1], [0, 0, 1, 1], [], []>} : vector<16x128xbf16>, vector<128x128xbf16>, vector<16x128xf32> -> vector<16x128xf32>
    %91 = arith.addf %86, %90 : vector<16x128xf32>
    %92 = vector.extract_strided_slice %82 {offsets = [32, 0], sizes = [16, 128], strides = [1, 1]} : vector<80x128xbf16> to vector<16x128xbf16>
    %c2_56 = arith.constant 2 : index
    %c0_57 = arith.constant 0 : index
    %c0_58 = arith.constant 0 : index
    %93 = vector.load %arg8[%c2_56, %c0_57, %c0_58] : memref<5x128x128xbf16, #tpu.memory_space<vmem>>, vector<1x128x128xbf16>
    %94 = vector.shape_cast %93 : vector<1x128x128xbf16> to vector<128x128xbf16>
    %cst_59 = arith.constant dense<0.000000e+00> : vector<16x128xf32>
    %95 = tpu.matmul %92, %94, %cst_59 {dimension_numbers = #tpu.dot_dimension_numbers<[1], [0], [0], [1], [0, 0, 1, 1], [], []>} : vector<16x128xbf16>, vector<128x128xbf16>, vector<16x128xf32> -> vector<16x128xf32>
    %96 = arith.addf %91, %95 : vector<16x128xf32>
    %97 = vector.extract_strided_slice %82 {offsets = [48, 0], sizes = [16, 128], strides = [1, 1]} : vector<80x128xbf16> to vector<16x128xbf16>
    %c3_60 = arith.constant 3 : index
    %c0_61 = arith.constant 0 : index
    %c0_62 = arith.constant 0 : index
    %98 = vector.load %arg8[%c3_60, %c0_61, %c0_62] : memref<5x128x128xbf16, #tpu.memory_space<vmem>>, vector<1x128x128xbf16>
    %99 = vector.shape_cast %98 : vector<1x128x128xbf16> to vector<128x128xbf16>
    %cst_63 = arith.constant dense<0.000000e+00> : vector<16x128xf32>
    %100 = tpu.matmul %97, %99, %cst_63 {dimension_numbers = #tpu.dot_dimension_numbers<[1], [0], [0], [1], [0, 0, 1, 1], [], []>} : vector<16x128xbf16>, vector<128x128xbf16>, vector<16x128xf32> -> vector<16x128xf32>
    %101 = arith.addf %96, %100 : vector<16x128xf32>
    %102 = vector.extract_strided_slice %82 {offsets = [64, 0], sizes = [16, 128], strides = [1, 1]} : vector<80x128xbf16> to vector<16x128xbf16>
    %c4_64 = arith.constant 4 : index
    %c0_65 = arith.constant 0 : index
    %c0_66 = arith.constant 0 : index
    %103 = vector.load %arg8[%c4_64, %c0_65, %c0_66] : memref<5x128x128xbf16, #tpu.memory_space<vmem>>, vector<1x128x128xbf16>
    %104 = vector.shape_cast %103 : vector<1x128x128xbf16> to vector<128x128xbf16>
    %cst_67 = arith.constant dense<0.000000e+00> : vector<16x128xf32>
    %105 = tpu.matmul %102, %104, %cst_67 {dimension_numbers = #tpu.dot_dimension_numbers<[1], [0], [0], [1], [0, 0, 1, 1], [], []>} : vector<16x128xbf16>, vector<128x128xbf16>, vector<16x128xf32> -> vector<16x128xf32>
    %106 = arith.addf %101, %105 : vector<16x128xf32>
    %c0_68 = arith.constant 0 : index
    %c0_69 = arith.constant 0 : index
    %107 = vector.load %arg9[%c0_68, %c0_69] : memref<1x128xf32, #tpu.memory_space<vmem>>, vector<1x128xf32>
    %108 = vector.broadcast %107 : vector<1x128xf32> to vector<16x128xf32>
    %109 = arith.addf %106, %108 : vector<16x128xf32>
    %cst_70 = arith.constant 0.000000e+00 : f32
    %110 = vector.broadcast %cst_70 : f32 to vector<16x128xf32>
    %111 = arith.maximumf %109, %110 : vector<16x128xf32>
    %112 = arith.truncf %111 : vector<16x128xf32> to vector<16x128xbf16>
    %c0_71 = arith.constant 0 : index
    %c0_72 = arith.constant 0 : index
    %113 = vector.load %arg10[%c0_71, %c0_72] : memref<128x128xbf16, #tpu.memory_space<vmem>>, vector<128x128xbf16>
    %cst_73 = arith.constant dense<0.000000e+00> : vector<16x128xf32>
    %114 = tpu.matmul %112, %113, %cst_73 {dimension_numbers = #tpu.dot_dimension_numbers<[1], [0], [0], [1], [0, 0, 1, 1], [], []>} : vector<16x128xbf16>, vector<128x128xbf16>, vector<16x128xf32> -> vector<16x128xf32>
    %c0_74 = arith.constant 0 : index
    %c0_75 = arith.constant 0 : index
    %115 = vector.load %arg11[%c0_74, %c0_75] : memref<1x128xf32, #tpu.memory_space<vmem>>, vector<1x128xf32>
    %116 = vector.broadcast %115 : vector<1x128xf32> to vector<16x128xf32>
    %117 = arith.addf %114, %116 : vector<16x128xf32>
    %cst_76 = arith.constant 0.000000e+00 : f32
    %118 = vector.broadcast %cst_76 : f32 to vector<16x128xf32>
    %119 = arith.maximumf %117, %118 : vector<16x128xf32>
    %120 = arith.truncf %119 : vector<16x128xf32> to vector<16x128xbf16>
    %c0_77 = arith.constant 0 : index
    %c0_78 = arith.constant 0 : index
    %121 = vector.load %arg12[%c0_77, %c0_78] : memref<128x128xbf16, #tpu.memory_space<vmem>>, vector<128x128xbf16>
    %cst_79 = arith.constant dense<0.000000e+00> : vector<16x128xf32>
    %122 = tpu.matmul %120, %121, %cst_79 {dimension_numbers = #tpu.dot_dimension_numbers<[1], [0], [0], [1], [0, 0, 1, 1], [], []>} : vector<16x128xbf16>, vector<128x128xbf16>, vector<16x128xf32> -> vector<16x128xf32>
    %c0_80 = arith.constant 0 : index
    %c0_81 = arith.constant 0 : index
    %123 = vector.load %arg13[%c0_80, %c0_81] : memref<1x128xf32, #tpu.memory_space<vmem>>, vector<1x128xf32>
    %124 = vector.broadcast %123 : vector<1x128xf32> to vector<16x128xf32>
    %125 = arith.addf %122, %124 : vector<16x128xf32>
    %c0_82 = arith.constant 0 : index
    %c0_83 = arith.constant 0 : index
    %126 = vector.load %arg14[%c0_82, %c0_83] : memref<16x128xf32, #tpu.memory_space<vmem>>, vector<16x128xf32>
    tpu.vector_store %arg14[%c0_82, %c0_83], %125 {strides = array<i32>} : memref<16x128xf32, #tpu.memory_space<vmem>>, vector<16x128xf32>,
    return
  }
  func.func @transform_0(%arg0: i32) -> (i32, i32) {
    %c0_i32 = arith.constant 0 : i32
    %c0_i32_0 = arith.constant 0 : i32
    return %arg0, %c0_i32 : i32, i32
  }
  func.func @transform_1(%arg0: i32) -> (i32, i32, i32) {
    %c0_i32 = arith.constant 0 : i32
    %c0_i32_0 = arith.constant 0 : i32
    %c0_i32_1 = arith.constant 0 : i32
    %c0_i32_2 = arith.constant 0 : i32
    return %c0_i32, %c0_i32_0, %c0_i32_1 : i32, i32, i32
  }
  func.func @transform_2(%arg0: i32) -> (i32, i32) {
    %c0_i32 = arith.constant 0 : i32
    %c0_i32_0 = arith.constant 0 : i32
    %c0_i32_1 = arith.constant 0 : i32
    return %c0_i32, %c0_i32_0 : i32, i32
  }
  func.func @transform_3(%arg0: i32) -> (i32, i32) {
    %c0_i32 = arith.constant 0 : i32
    %c0_i32_0 = arith.constant 0 : i32
    %c0_i32_1 = arith.constant 0 : i32
    return %c0_i32, %c0_i32_0 : i32, i32
  }
  func.func @transform_4(%arg0: i32) -> (i32, i32, i32) {
    %c0_i32 = arith.constant 0 : i32
    %c0_i32_0 = arith.constant 0 : i32
    %c0_i32_1 = arith.constant 0 : i32
    %c0_i32_2 = arith.constant 0 : i32
    return %c0_i32, %c0_i32_0, %c0_i32_1 : i32, i32, i32
  }
  func.func @transform_5(%arg0: i32) -> (i32, i32) {
    %c0_i32 = arith.constant 0 : i32
    %c0_i32_0 = arith.constant 0 : i32
    %c0_i32_1 = arith.constant 0 : i32
    return %c0_i32, %c0_i32_0 : i32, i32
  }
  func.func @transform_6(%arg0: i32) -> (i32, i32) {
    %c0_i32 = arith.constant 0 : i32
    %c0_i32_0 = arith.constant 0 : i32
    %c0_i32_1 = arith.constant 0 : i32
    return %c0_i32, %c0_i32_0 : i32, i32
  }
  func.func @transform_7(%arg0: i32) -> (i32, i32, i32) {
    %c0_i32 = arith.constant 0 : i32
    %c0_i32_0 = arith.constant 0 : i32
    %c0_i32_1 = arith.constant 0 : i32
    %c0_i32_2 = arith.constant 0 : i32
    return %c0_i32, %c0_i32_0, %c0_i32_1 : i32, i32, i32
  }
  func.func @transform_8(%arg0: i32) -> (i32, i32) {
    %c0_i32 = arith.constant 0 : i32
    %c0_i32_0 = arith.constant 0 : i32
    %c0_i32_1 = arith.constant 0 : i32
    return %c0_i32, %c0_i32_0 : i32, i32
  }
  func.func @transform_9(%arg0: i32) -> (i32, i32) {
    %c0_i32 = arith.constant 0 : i32
    %c0_i32_0 = arith.constant 0 : i32
    %c0_i32_1 = arith.constant 0 : i32
    return %c0_i32, %c0_i32_0 : i32, i32
  }
  func.func @transform_10(%arg0: i32) -> (i32, i32) {
    %c0_i32 = arith.constant 0 : i32
    %c0_i32_0 = arith.constant 0 : i32
    %c0_i32_1 = arith.constant 0 : i32
    return %c0_i32, %c0_i32_0 : i32, i32
  }
  func.func @transform_11(%arg0: i32) -> (i32, i32) {
    %c0_i32 = arith.constant 0 : i32
    %c0_i32_0 = arith.constant 0 : i32
    %c0_i32_1 = arith.constant 0 : i32
    return %c0_i32, %c0_i32_0 : i32, i32
  }
  func.func @transform_12(%arg0: i32) -> (i32, i32) {
    %c0_i32 = arith.constant 0 : i32
    %c0_i32_0 = arith.constant 0 : i32
    %c0_i32_1 = arith.constant 0 : i32
    return %c0_i32, %c0_i32_0 : i32, i32
  }
  func.func @transform_13(%arg0: i32) -> (i32, i32) {
    %c0_i32 = arith.constant 0 : i32
    %c0_i32_0 = arith.constant 0 : i32
    return %arg0, %c0_i32 : i32, i32
  }
}

</mosaic_0001>

<llo_original>
// kernel: net_forward.1
$region0: #{net_forward.1}
  #allocation0 [shape = 'u32[]', space=smem, size = 0x4, offset = 0x4, fixed_abs, tag = 'smem constant byte address 0x4 - core index']
  #allocation1 [shape = 'u32[144,128]{1,0:T(1,128)}', space=vmem, size = 0x12000, scoped, tag = 'internal scratch']
  %s0 = inlined_call_operand.vmem [shape: bf16[512,128], index: 0, kind: input, shape index: {}]
  %s1 = inlined_call_operand.vmem [shape: bf16[5,128,256], index: 1, kind: input, shape index: {}]
  %s2 = inlined_call_operand.vmem [shape: f32[1,256], index: 2, kind: input, shape index: {}]
  %s3 = inlined_call_operand.vmem [shape: bf16[256,256], index: 3, kind: input, shape index: {}]
  %s4 = inlined_call_operand.vmem [shape: bf16[5,128,256], index: 4, kind: input, shape index: {}]
  %s5 = inlined_call_operand.vmem [shape: f32[1,256], index: 5, kind: input, shape index: {}]
  %s6 = inlined_call_operand.vmem [shape: bf16[256,256], index: 6, kind: input, shape index: {}]
  %s7 = inlined_call_operand.vmem [shape: bf16[5,128,128], index: 7, kind: input, shape index: {}]
  %s8 = inlined_call_operand.vmem [shape: f32[1,128], index: 8, kind: input, shape index: {}]
  %s9 = inlined_call_operand.vmem [shape: bf16[128,128], index: 9, kind: input, shape index: {}]
  %s10 = inlined_call_operand.vmem [shape: f32[1,128], index: 10, kind: input, shape index: {}]
  %s11 = inlined_call_operand.vmem [shape: bf16[128,128], index: 11, kind: input, shape index: {}]
  %s12 = inlined_call_operand.vmem [shape: f32[1,128], index: 12, kind: input, shape index: {}]
  %s13 = inlined_call_operand.vmem [shape: f32[16,128], index: 13, kind: output, shape index: {}]
  %s14 = sld [smem:[#allocation0]]
  $region62: #{net_forward.1} parent=0
    _
  %s16 = ssub.s32 1, %s14
  %s17 = scalar_select 0, %s16, %s14
  // Predicated region
  $region2: #{net_forward.1} parent=0 // pred_check
    _
  $region3: #{net_forward.1} parent=0 // pred_check_branch
    %19 = sbr.rel (0) target = $region5
  $region4: #{net_forward.1} parent=0 // pred_region
    _
  $region5: #{net_forward.1} parent=0 // pred_fallthru
    _
  // Predicated region
  $region6: #{net_forward.1} parent=0 // pred_check
    _
  $region7: #{net_forward.1} parent=0 // pred_check_branch
    %21 = sbr.rel (0) target = $region9
  $region8: #{net_forward.1} parent=0 // pred_region
    _
  $region9: #{net_forward.1} parent=0 // pred_fallthru
    _
  // Predicated region
  $region10: #{net_forward.1} parent=0 // pred_check
    _
  $region11: #{net_forward.1} parent=0 // pred_check_branch
    %23 = sbr.rel (0) target = $region13
  $region12: #{net_forward.1} parent=0 // pred_region
    _
  $region13: #{net_forward.1} parent=0 // pred_fallthru
    _
  // Predicated region
  $region14: #{net_forward.1} parent=0 // pred_check
    _
  $region15: #{net_forward.1} parent=0 // pred_check_branch
    %25 = sbr.rel (0) target = $region17
  $region16: #{net_forward.1} parent=0 // pred_region
    _
  $region17: #{net_forward.1} parent=0 // pred_fallthru
    _
  // Predicated region
  $region18: #{net_forward.1} parent=0 // pred_check
    _
  $region19: #{net_forward.1} parent=0 // pred_check_branch
    %27 = sbr.rel (0) target = $region21
  $region20: #{net_forward.1} parent=0 // pred_region
    _
  $region21: #{net_forward.1} parent=0 // pred_fallthru
    _
  // Predicated region
  $region22: #{net_forward.1} parent=0 // pred_check
    _
  $region23: #{net_forward.1} parent=0 // pred_check_branch
    %29 = sbr.rel (0) target = $region25
  $region24: #{net_forward.1} parent=0 // pred_region
    _
  $region25: #{net_forward.1} parent=0 // pred_fallthru
    _
  // Predicated region
  $region26: #{net_forward.1} parent=0 // pred_check
    _
  $region27: #{net_forward.1} parent=0 // pred_check_branch
    %31 = sbr.rel (0) target = $region29
  $region28: #{net_forward.1} parent=0 // pred_region
    _
  $region29: #{net_forward.1} parent=0 // pred_fallthru
    _
  // Predicated region
  $region30: #{net_forward.1} parent=0 // pred_check
    _
  $region31: #{net_forward.1} parent=0 // pred_check_branch
    %33 = sbr.rel (0) target = $region33
  $region32: #{net_forward.1} parent=0 // pred_region
    _
  $region33: #{net_forward.1} parent=0 // pred_fallthru
    _
  // Predicated region
  $region34: #{net_forward.1} parent=0 // pred_check
    _
  $region35: #{net_forward.1} parent=0 // pred_check_branch
    %35 = sbr.rel (0) target = $region37
  $region36: #{net_forward.1} parent=0 // pred_region
    _
  $region37: #{net_forward.1} parent=0 // pred_fallthru
    _
  // Predicated region
  $region38: #{net_forward.1} parent=0 // pred_check
    _
  $region39: #{net_forward.1} parent=0 // pred_check_branch
    %37 = sbr.rel (0) target = $region41
  $region40: #{net_forward.1} parent=0 // pred_region
    _
  $region41: #{net_forward.1} parent=0 // pred_fallthru
    _
  // Predicated region
  $region42: #{net_forward.1} parent=0 // pred_check
    _
  $region43: #{net_forward.1} parent=0 // pred_check_branch
    %39 = sbr.rel (0) target = $region45
  $region44: #{net_forward.1} parent=0 // pred_region
    _
  $region45: #{net_forward.1} parent=0 // pred_fallthru
    _
  // Predicated region
  $region46: #{net_forward.1} parent=0 // pred_check
    _
  $region47: #{net_forward.1} parent=0 // pred_check_branch
    %41 = sbr.rel (0) target = $region49
  $region48: #{net_forward.1} parent=0 // pred_region
    _
  $region49: #{net_forward.1} parent=0 // pred_fallthru
    _
  // Predicated region
  $region50: #{net_forward.1} parent=0 // pred_check
    _
  $region51: #{net_forward.1} parent=0 // pred_check_branch
    %43 = sbr.rel (0) target = $region53
  $region52: #{net_forward.1} parent=0 // pred_region
    _
  $region53: #{net_forward.1} parent=0 // pred_fallthru
    _
  %v45 = vld [vmem:[%s0] sm:$0xf]
  %v46 = vld [vmem:[%s0 + $0x4] sm:$0xf]
  %v47 = vld [vmem:[%s0 + $0x8] sm:$0xf]
  %v48 = vld [vmem:[%s0 + $0xc] sm:$0xf]
  %v49 = vld [vmem:[%s0 + $0x10] sm:$0xf]
  %v50 = vld [vmem:[%s0 + $0x14] sm:$0xf]
  %v51 = vld [vmem:[%s0 + $0x18] sm:$0xf]
  %v52 = vld [vmem:[%s0 + $0x1c] sm:$0xf]
  %v53 = vld [vmem:[%s0 + $0x20] sm:$0xf]
  %v54 = vld [vmem:[%s0 + $0x24] sm:$0xf]
  %v55 = vld [vmem:[%s0 + $0x28] sm:$0xf]
  %v56 = vld [vmem:[%s0 + $0x2c] sm:$0xf]
  %v57 = vld [vmem:[%s0 + $0x30] sm:$0xf]
  %v58 = vld [vmem:[%s0 + $0x34] sm:$0xf]
  %v59 = vld [vmem:[%s0 + $0x38] sm:$0xf]
  %v60 = vld [vmem:[%s0 + $0x3c] sm:$0xf]
  %v61 = vld [vmem:[%s0 + $0x40] sm:$0xf]
  %v62 = vld [vmem:[%s0 + $0x44] sm:$0xf]
  %v63 = vld [vmem:[%s0 + $0x48] sm:$0xf]
  %v64 = vld [vmem:[%s0 + $0x4c] sm:$0xf]
  %v65 = vld [vmem:[%s0 + $0x50] sm:$0xf]
  %v66 = vld [vmem:[%s0 + $0x54] sm:$0xf]
  %v67 = vld [vmem:[%s0 + $0x58] sm:$0xf]
  %v68 = vld [vmem:[%s0 + $0x5c] sm:$0xf]
  %v69 = vld [vmem:[%s0 + $0x60] sm:$0xf]
  %v70 = vld [vmem:[%s0 + $0x64] sm:$0xf]
  %v71 = vld [vmem:[%s0 + $0x68] sm:$0xf]
  %v72 = vld [vmem:[%s0 + $0x6c] sm:$0xf]
  %v73 = vld [vmem:[%s0 + $0x70] sm:$0xf]
  %v74 = vld [vmem:[%s0 + $0x74] sm:$0xf]
  %v75 = vld [vmem:[%s0 + $0x78] sm:$0xf]
  %v76 = vld [vmem:[%s0 + $0x7c] sm:$0xf]
  %v77 = vld [vmem:[%s0 + $0x80] sm:$0xf]
  %v78 = vld [vmem:[%s0 + $0x84] sm:$0xf]
  %v79 = vld [vmem:[%s0 + $0x88] sm:$0xf]
  %v80 = vld [vmem:[%s0 + $0x8c] sm:$0xf]
  %v81 = vld [vmem:[%s0 + $0x90] sm:$0xf]
  %v82 = vld [vmem:[%s0 + $0x94] sm:$0xf]
  %v83 = vld [vmem:[%s0 + $0x98] sm:$0xf]
  %v84 = vld [vmem:[%s0 + $0x9c] sm:$0xf]
  %v85 = vld [vmem:[%s0 + $0xa0] sm:$0xf]
  %v86 = vld [vmem:[%s0 + $0xa4] sm:$0xf]
  %v87 = vld [vmem:[%s0 + $0xa8] sm:$0xf]
  %v88 = vld [vmem:[%s0 + $0xac] sm:$0xf]
  %v89 = vld [vmem:[%s0 + $0xb0] sm:$0xf]
  %v90 = vld [vmem:[%s0 + $0xb4] sm:$0xf]
  %v91 = vld [vmem:[%s0 + $0xb8] sm:$0xf]
  %v92 = vld [vmem:[%s0 + $0xbc] sm:$0xf]
  %v93 = vld [vmem:[%s0 + $0xc0] sm:$0xf]
  %v94 = vld [vmem:[%s0 + $0xc4] sm:$0xf]
  %v95 = vld [vmem:[%s0 + $0xc8] sm:$0xf]
  %v96 = vld [vmem:[%s0 + $0xcc] sm:$0xf]
  %v97 = vld [vmem:[%s0 + $0xd0] sm:$0xf]
  %v98 = vld [vmem:[%s0 + $0xd4] sm:$0xf]
  %v99 = vld [vmem:[%s0 + $0xd8] sm:$0xf]
  %v100 = vld [vmem:[%s0 + $0xdc] sm:$0xf]
  %v101 = vld [vmem:[%s0 + $0xe0] sm:$0xf]
  %v102 = vld [vmem:[%s0 + $0xe4] sm:$0xf]
  %v103 = vld [vmem:[%s0 + $0xe8] sm:$0xf]
  %v104 = vld [vmem:[%s0 + $0xec] sm:$0xf]
  %v105 = vld [vmem:[%s0 + $0xf0] sm:$0xf]
  %v106 = vld [vmem:[%s0 + $0xf4] sm:$0xf]
  %v107 = vld [vmem:[%s0 + $0xf8] sm:$0xf]
  %v108 = vld [vmem:[%s0 + $0xfc] sm:$0xf]
  %v109 = vld [vmem:[%s1] sm:$0xff]
  %v110 = vld [vmem:[%s1 + $0x8] sm:$0xff]
  %v111 = vld [vmem:[%s1 + $0x10] sm:$0xff]
  %v112 = vld [vmem:[%s1 + $0x18] sm:$0xff]
  %v113 = vld [vmem:[%s1 + $0x20] sm:$0xff]
  %v114 = vld [vmem:[%s1 + $0x28] sm:$0xff]
  %v115 = vld [vmem:[%s1 + $0x30] sm:$0xff]
  %v116 = vld [vmem:[%s1 + $0x38] sm:$0xff]
  %v117 = vld [vmem:[%s1 + $0x40] sm:$0xff]
  %v118 = vld [vmem:[%s1 + $0x48] sm:$0xff]
  %v119 = vld [vmem:[%s1 + $0x50] sm:$0xff]
  %v120 = vld [vmem:[%s1 + $0x58] sm:$0xff]
  %v121 = vld [vmem:[%s1 + $0x60] sm:$0xff]
  %v122 = vld [vmem:[%s1 + $0x68] sm:$0xff]
  %v123 = vld [vmem:[%s1 + $0x70] sm:$0xff]
  %v124 = vld [vmem:[%s1 + $0x78] sm:$0xff]
  %s125 = scalar_lea.vmem %s1, 128
  %v126 = vld [vmem:[%s125] sm:$0xff]
  %v127 = vld [vmem:[%s125 + $0x8] sm:$0xff]
  %v128 = vld [vmem:[%s125 + $0x10] sm:$0xff]
  %v129 = vld [vmem:[%s125 + $0x18] sm:$0xff]
  %v130 = vld [vmem:[%s125 + $0x20] sm:$0xff]
  %v131 = vld [vmem:[%s125 + $0x28] sm:$0xff]
  %v132 = vld [vmem:[%s125 + $0x30] sm:$0xff]
  %v133 = vld [vmem:[%s125 + $0x38] sm:$0xff]
  %v134 = vld [vmem:[%s125 + $0x40] sm:$0xff]
  %v135 = vld [vmem:[%s125 + $0x48] sm:$0xff]
  %v136 = vld [vmem:[%s125 + $0x50] sm:$0xff]
  %v137 = vld [vmem:[%s125 + $0x58] sm:$0xff]
  %v138 = vld [vmem:[%s125 + $0x60] sm:$0xff]
  %v139 = vld [vmem:[%s125 + $0x68] sm:$0xff]
  %v140 = vld [vmem:[%s125 + $0x70] sm:$0xff]
  %v141 = vld [vmem:[%s125 + $0x78] sm:$0xff]
  %v198 = vunpack.c.l.b16 %v47
  %v199 = vunpack.c.l.b16 %v48
  %v200 = vunpack.c.l.b16 %v49
  %v201 = vunpack.c.l.b16 %v50
  %v202 = vunpack.c.l.b16 %v51
  %v203 = vunpack.c.l.b16 %v52
  %v204 = vunpack.c.l.b16 %v53
  %v205 = vunpack.c.l.b16 %v54
  %v206 = vunpack.c.l.b16 %v55
  %v207 = vunpack.c.l.b16 %v56
  %v208 = vunpack.c.l.b16 %v57
  %v209 = vunpack.c.l.b16 %v58
  %v210 = vunpack.c.l.b16 %v59
  %v211 = vunpack.c.l.b16 %v60
  %v212 = vunpack.c.l.b16 %v61
  %v213 = vunpack.c.l.b16 %v62
  %v214 = vunpack.c.l.b16 %v63
  %v215 = vunpack.c.l.b16 %v64
  %v216 = vunpack.c.l.b16 %v65
  %v217 = vunpack.c.l.b16 %v66
  %v218 = vunpack.c.l.b16 %v67
  %v219 = vunpack.c.l.b16 %v68
  %v220 = vunpack.c.l.b16 %v69
  %v221 = vunpack.c.l.b16 %v70
  %v222 = vunpack.c.l.b16 %v71
  %v223 = vunpack.c.l.b16 %v72
  %v224 = vunpack.c.l.b16 %v73
  %v225 = vunpack.c.l.b16 %v74
  %v226 = vunpack.c.l.b16 %v75
  %v227 = vunpack.c.l.b16 %v76
  %v228 = vunpack.c.l.b16 %v77
  %v229 = vunpack.c.l.b16 %v78
  %v230 = vunpack.c.l.b16 %v79
  %v231 = vunpack.c.l.b16 %v80
  %v232 = vunpack.c.l.b16 %v81
  %v233 = vunpack.c.l.b16 %v82
  %v234 = vunpack.c.l.b16 %v83
  %v235 = vunpack.c.l.b16 %v84
  %v236 = vunpack.c.l.b16 %v85
  %v237 = vunpack.c.l.b16 %v86
  %v238 = vunpack.c.l.b16 %v87
  %v239 = vunpack.c.l.b16 %v88
  %v240 = vunpack.c.l.b16 %v89
  %v241 = vunpack.c.l.b16 %v90
  %v242 = vunpack.c.l.b16 %v91
  %v243 = vunpack.c.l.b16 %v92
  %v244 = vunpack.c.l.b16 %v93
  %v245 = vunpack.c.l.b16 %v94
  %v246 = vunpack.c.l.b16 %v95
  %v247 = vunpack.c.l.b16 %v96
  %v248 = vunpack.c.l.b16 %v97
  %v249 = vunpack.c.l.b16 %v98
  %v250 = vunpack.c.l.b16 %v99
  %v251 = vunpack.c.l.b16 %v100
  %v252 = vunpack.c.l.b16 %v101
  %v253 = vunpack.c.l.b16 %v102
  %v254 = vpack.c.b16 %v199, %v198
  %v255 = vpack.c.b16 %v201, %v200
  %v256 = vpack.c.b16 %v203, %v202
  %v257 = vpack.c.b16 %v205, %v204
  %v258 = vpack.c.b16 %v207, %v206
  %v259 = vpack.c.b16 %v209, %v208
  %v260 = vpack.c.b16 %v211, %v210
  %v261 = vpack.c.b16 %v213, %v212
  %v262 = vpack.c.b16 %v215, %v214
  %v263 = vpack.c.b16 %v217, %v216
  %v264 = vpack.c.b16 %v219, %v218
  %v265 = vpack.c.b16 %v221, %v220
  %v266 = vpack.c.b16 %v223, %v222
  %v267 = vpack.c.b16 %v225, %v224
  %v268 = vpack.c.b16 %v227, %v226
  %v269 = vpack.c.b16 %v229, %v228
  %v270 = vpack.c.b16 %v231, %v230
  %v271 = vpack.c.b16 %v233, %v232
  %v272 = vpack.c.b16 %v235, %v234
  %v273 = vpack.c.b16 %v237, %v236
  %v274 = vpack.c.b16 %v239, %v238
  %v275 = vpack.c.b16 %v241, %v240
  %v276 = vpack.c.b16 %v243, %v242
  %v277 = vpack.c.b16 %v245, %v244
  %v278 = vpack.c.b16 %v247, %v246
  %v279 = vpack.c.b16 %v249, %v248
  %v280 = vpack.c.b16 %v251, %v250
  %v281 = vpack.c.b16 %v253, %v252
  %v326 = vunpack.c.l.b16 %v126
  %v327 = vunpack.c.h.b16 %v126
  %v328 = vunpack.c.l.b16 %v127
  %v329 = vunpack.c.h.b16 %v127
  %v330 = vunpack.c.l.b16 %v128
  %v331 = vunpack.c.h.b16 %v128
  %v332 = vunpack.c.l.b16 %v129
  %v333 = vunpack.c.h.b16 %v129
  %v334 = vunpack.c.l.b16 %v130
  %v335 = vunpack.c.h.b16 %v130
  %v336 = vunpack.c.l.b16 %v131
  %v337 = vunpack.c.h.b16 %v131
  %v338 = vunpack.c.l.b16 %v132
  %v339 = vunpack.c.h.b16 %v132
  %v340 = vunpack.c.l.b16 %v133
  %v341 = vunpack.c.h.b16 %v133
  %v342 = vunpack.c.l.b16 %v134
  %v343 = vunpack.c.h.b16 %v134
  %v344 = vunpack.c.l.b16 %v135
  %v345 = vunpack.c.h.b16 %v135
  %v346 = vunpack.c.l.b16 %v136
  %v347 = vunpack.c.h.b16 %v136
  %v348 = vunpack.c.l.b16 %v137
  %v349 = vunpack.c.h.b16 %v137
  %v350 = vunpack.c.l.b16 %v138
  %v351 = vunpack.c.h.b16 %v138
  %v352 = vunpack.c.l.b16 %v139
  %v353 = vunpack.c.h.b16 %v139
  %v354 = vunpack.c.l.b16 %v140
  %v355 = vunpack.c.h.b16 %v140
  %v356 = vunpack.c.l.b16 %v141
  %v357 = vunpack.c.h.b16 %v141
  %v358 = vpack.c.b16 %v328, %v326
  %v359 = vpack.c.b16 %v329, %v327
  %v360 = vpack.c.b16 %v332, %v330
  %v361 = vpack.c.b16 %v333, %v331
  %v362 = vpack.c.b16 %v336, %v334
  %v363 = vpack.c.b16 %v337, %v335
  %v364 = vpack.c.b16 %v340, %v338
  %v365 = vpack.c.b16 %v341, %v339
  %v366 = vpack.c.b16 %v344, %v342
  %v367 = vpack.c.b16 %v345, %v343
  %v368 = vpack.c.b16 %v348, %v346
  %v369 = vpack.c.b16 %v349, %v347
  %v370 = vpack.c.b16 %v352, %v350
  %v371 = vpack.c.b16 %v353, %v351
  %v372 = vpack.c.b16 %v356, %v354
  %v373 = vpack.c.b16 %v357, %v355
  %390 = vmatprep.subr.bf16.mxu0 %v373
  %391 = vmatpush1.bf16.msra.mxu0 %v372
  %392 = vmatprep.subr.bf16.mxu0 %v371
  %393 = vmatpush1.bf16.msra.mxu0 %v370
  %394 = vmatprep.subr.bf16.mxu0 %v369
  %395 = vmatpush1.bf16.msra.mxu0 %v368
  %396 = vmatprep.subr.bf16.mxu0 %v367
  %397 = vmatpush1.bf16.msra.mxu0 %v366
  %398 = vmatprep.subr.bf16.mxu0 %v365
  %399 = vmatpush1.bf16.msra.mxu0 %v364
  %400 = vmatprep.subr.bf16.mxu0 %v363
  %401 = vmatpush1.bf16.msra.mxu0 %v362
  %402 = vmatprep.subr.bf16.mxu0 %v361
  %403 = vmatpush1.bf16.msra.mxu0 %v360
  %404 = vmatprep.subr.bf16.mxu0 %v359
  %405 = vmatpush1.bf16.msra.mxu0 %v358
  %406 = vmatprep.subr.bf16.mxu0 0
  %407 = vmatpush2.bf16.msra.mxu0 0
  %408 = vmatprep.subr.bf16.mxu0 0
  %409 = vmatpush2.bf16.msra.mxu0 0
  %410 = vmatprep.subr.bf16.mxu0 0
  %411 = vmatpush2.bf16.msra.mxu0 0
  %412 = vmatprep.subr.bf16.mxu0 0
  %413 = vmatpush2.bf16.msra.mxu0 0
  %414 = vmatprep.subr.bf16.mxu0 0
  %415 = vmatpush2.bf16.msra.mxu0 0
  %416 = vmatprep.subr.bf16.mxu0 0
  %417 = vmatpush2.bf16.msra.mxu0 0
  %418 = vmatprep.subr.bf16.mxu0 0
  %419 = vmatpush2.bf16.msra.mxu0 0
  %420 = vmatprep.subr.bf16.mxu0 0
  %421 = vmatpush2.bf16.msra.mxu0 0
  %422 = vmatprep.mubr.bf16.mxu0 0
  %423 = vmatmul.mubr.bf16.gmra.mxu0 %v254
  %v424 = vpop.f32.mrf.mxu0
  %v425 = vadd.f32 0.0, %v424
  %v426 = vpop.f32.mrf.mxu0
  %v427 = vadd.f32 0.0, %v426
  %v428 = vpop.f32.mrf.mxu0
  %v429 = vadd.f32 0.0, %v428
  %v430 = vpop.f32.mrf.mxu0
  %v431 = vadd.f32 0.0, %v430
  %432 = vmatprep.mubr.bf16.mxu0 0
  %433 = vmatmul.mubr.bf16.gmra.mxu0 %v255
  %v434 = vpop.f32.mrf.mxu0
  %v435 = vadd.f32 0.0, %v434
  %v436 = vpop.f32.mrf.mxu0
  %v437 = vadd.f32 0.0, %v436
  %v438 = vpop.f32.mrf.mxu0
  %v439 = vadd.f32 0.0, %v438
  %v440 = vpop.f32.mrf.mxu0
  %v441 = vadd.f32 0.0, %v440
  %442 = vmatprep.mubr.bf16.mxu0 0
  %443 = vmatmul.mubr.bf16.gmra.mxu0 %v256
  %v444 = vpop.f32.mrf.mxu0
  %v445 = vadd.f32 0.0, %v444
  %v446 = vpop.f32.mrf.mxu0
  %v447 = vadd.f32 0.0, %v446
  %v448 = vpop.f32.mrf.mxu0
  %v449 = vadd.f32 0.0, %v448
  %v450 = vpop.f32.mrf.mxu0
  %v451 = vadd.f32 0.0, %v450
  %452 = vmatprep.mubr.bf16.mxu0 0
  %453 = vmatmul.mubr.bf16.gmra.mxu0 %v257
  %v454 = vpop.f32.mrf.mxu0
  %v455 = vadd.f32 0.0, %v454
  %v456 = vpop.f32.mrf.mxu0
  %v457 = vadd.f32 0.0, %v456
  %v458 = vpop.f32.mrf.mxu0
  %v459 = vadd.f32 0.0, %v458
  %v460 = vpop.f32.mrf.mxu0
  %v461 = vadd.f32 0.0, %v460
  %462 = vmatprep.mubr.bf16.mxu0 0
  %463 = vmatmul.mubr.bf16.gmra.mxu0 %v258
  %v464 = vpop.f32.mrf.mxu0
  %v465 = vadd.f32 0.0, %v464
  %v466 = vpop.f32.mrf.mxu0
  %v467 = vadd.f32 0.0, %v466
  %v468 = vpop.f32.mrf.mxu0
  %v469 = vadd.f32 0.0, %v468
  %v470 = vpop.f32.mrf.mxu0
  %v471 = vadd.f32 0.0, %v470
  %472 = vmatprep.mubr.bf16.mxu0 0
  %473 = vmatmul.mubr.bf16.gmra.mxu0 %v259
  %v474 = vpop.f32.mrf.mxu0
  %v475 = vadd.f32 0.0, %v474
  %v476 = vpop.f32.mrf.mxu0
  %v477 = vadd.f32 0.0, %v476
  %v478 = vpop.f32.mrf.mxu0
  %v479 = vadd.f32 0.0, %v478
  %v480 = vpop.f32.mrf.mxu0
  %v481 = vadd.f32 0.0, %v480
  %482 = vmatprep.mubr.bf16.mxu0 0
  %483 = vmatmul.mubr.bf16.gmra.mxu0 %v260
  %v484 = vpop.f32.mrf.mxu0
  %v485 = vadd.f32 0.0, %v484
  %v486 = vpop.f32.mrf.mxu0
  %v487 = vadd.f32 0.0, %v486
  %v488 = vpop.f32.mrf.mxu0
  %v489 = vadd.f32 0.0, %v488
  %v490 = vpop.f32.mrf.mxu0
  %v491 = vadd.f32 0.0, %v490
  %492 = vmatprep.mubr.bf16.mxu0 0
  %493 = vmatmul.mubr.bf16.gmra.mxu0 %v261
  %v494 = vpop.f32.mrf.mxu0
  %v495 = vadd.f32 0.0, %v494
  %v496 = vpop.f32.mrf.mxu0
  %v497 = vadd.f32 0.0, %v496
  %v498 = vpop.f32.mrf.mxu0
  %v499 = vadd.f32 0.0, %v498
  %v500 = vpop.f32.mrf.mxu0
  %v501 = vadd.f32 0.0, %v500
  %502 = vmatprep.mubr.bf16.mxu0 0
  %503 = vmatmul.mubr.bf16.gmra.mxu0 %v262
  %v504 = vpop.f32.mrf.mxu0
  %v505 = vadd.f32 0.0, %v504
  %v506 = vpop.f32.mrf.mxu0
  %v507 = vadd.f32 0.0, %v506
  %v508 = vpop.f32.mrf.mxu0
  %v509 = vadd.f32 0.0, %v508
  %v510 = vpop.f32.mrf.mxu0
  %v511 = vadd.f32 0.0, %v510
  %512 = vmatprep.mubr.bf16.mxu0 0
  %513 = vmatmul.mubr.bf16.gmra.mxu0 %v263
  %v514 = vpop.f32.mrf.mxu0
  %v515 = vadd.f32 0.0, %v514
  %v516 = vpop.f32.mrf.mxu0
  %v517 = vadd.f32 0.0, %v516
  %v518 = vpop.f32.mrf.mxu0
  %v519 = vadd.f32 0.0, %v518
  %v520 = vpop.f32.mrf.mxu0
  %v521 = vadd.f32 0.0, %v520
  %522 = vmatprep.mubr.bf16.mxu0 0
  %523 = vmatmul.mubr.bf16.gmra.mxu0 %v264
  %v524 = vpop.f32.mrf.mxu0
  %v525 = vadd.f32 0.0, %v524
  %v526 = vpop.f32.mrf.mxu0
  %v527 = vadd.f32 0.0, %v526
  %v528 = vpop.f32.mrf.mxu0
  %v529 = vadd.f32 0.0, %v528
  %v530 = vpop.f32.mrf.mxu0
  %v531 = vadd.f32 0.0, %v530
  %532 = vmatprep.mubr.bf16.mxu0 0
  %533 = vmatmul.mubr.bf16.gmra.mxu0 %v265
  %v534 = vpop.f32.mrf.mxu0
  %v535 = vadd.f32 0.0, %v534
  %v536 = vpop.f32.mrf.mxu0
  %v537 = vadd.f32 0.0, %v536
  %v538 = vpop.f32.mrf.mxu0
  %v539 = vadd.f32 0.0, %v538
  %v540 = vpop.f32.mrf.mxu0
  %v541 = vadd.f32 0.0, %v540
  %542 = vmatprep.mubr.bf16.mxu0 0
  %543 = vmatmul.mubr.bf16.gmra.mxu0 %v266
  %v544 = vpop.f32.mrf.mxu0
  %v545 = vadd.f32 0.0, %v544
  %v546 = vpop.f32.mrf.mxu0
  %v547 = vadd.f32 0.0, %v546
  %v548 = vpop.f32.mrf.mxu0
  %v549 = vadd.f32 0.0, %v548
  %v550 = vpop.f32.mrf.mxu0
  %v551 = vadd.f32 0.0, %v550
  %552 = vmatprep.mubr.bf16.mxu0 0
  %553 = vmatmul.mubr.bf16.gmra.mxu0 %v267
  %v554 = vpop.f32.mrf.mxu0
  %v555 = vadd.f32 0.0, %v554
  %v556 = vpop.f32.mrf.mxu0
  %v557 = vadd.f32 0.0, %v556
  %v558 = vpop.f32.mrf.mxu0
  %v559 = vadd.f32 0.0, %v558
  %v560 = vpop.f32.mrf.mxu0
  %v561 = vadd.f32 0.0, %v560
  %562 = vmatprep.mubr.bf16.mxu0 0
  %563 = vmatmul.mubr.bf16.gmra.mxu0 %v268
  %v564 = vpop.f32.mrf.mxu0
  %v565 = vadd.f32 0.0, %v564
  %v566 = vpop.f32.mrf.mxu0
  %v567 = vadd.f32 0.0, %v566
  %v568 = vpop.f32.mrf.mxu0
  %v569 = vadd.f32 0.0, %v568
  %v570 = vpop.f32.mrf.mxu0
  %v571 = vadd.f32 0.0, %v570
  %572 = vmatprep.mubr.bf16.mxu0 0
  %573 = vmatmul.mubr.bf16.gmra.mxu0 %v269
  %v574 = vpop.f32.mrf.mxu0
  %v575 = vadd.f32 0.0, %v574
  %v576 = vpop.f32.mrf.mxu0
  %v577 = vadd.f32 0.0, %v576
  %v578 = vpop.f32.mrf.mxu0
  %v579 = vadd.f32 0.0, %v578
  %v580 = vpop.f32.mrf.mxu0
  %v581 = vadd.f32 0.0, %v580
  %582 = vmatprep.mubr.bf16.mxu0 0
  %583 = vmatmul.mubr.bf16.gmra.mxu0 %v270
  %v584 = vpop.f32.mrf.mxu0
  %v585 = vadd.f32 0.0, %v584
  %v586 = vpop.f32.mrf.mxu0
  %v587 = vadd.f32 0.0, %v586
  %v588 = vpop.f32.mrf.mxu0
  %v589 = vadd.f32 0.0, %v588
  %v590 = vpop.f32.mrf.mxu0
  %v591 = vadd.f32 0.0, %v590
  %592 = vmatprep.mubr.bf16.mxu0 0
  %593 = vmatmul.mubr.bf16.gmra.mxu0 %v271
  %v594 = vpop.f32.mrf.mxu0
  %v595 = vadd.f32 0.0, %v594
  %v596 = vpop.f32.mrf.mxu0
  %v597 = vadd.f32 0.0, %v596
  %v598 = vpop.f32.mrf.mxu0
  %v599 = vadd.f32 0.0, %v598
  %v600 = vpop.f32.mrf.mxu0
  %v601 = vadd.f32 0.0, %v600
  %602 = vmatprep.mubr.bf16.mxu0 0
  %603 = vmatmul.mubr.bf16.gmra.mxu0 %v272
  %v604 = vpop.f32.mrf.mxu0
  %v605 = vadd.f32 0.0, %v604
  %v606 = vpop.f32.mrf.mxu0
  %v607 = vadd.f32 0.0, %v606
  %v608 = vpop.f32.mrf.mxu0
  %v609 = vadd.f32 0.0, %v608
  %v610 = vpop.f32.mrf.mxu0
  %v611 = vadd.f32 0.0, %v610
  %612 = vmatprep.mubr.bf16.mxu0 0
  %613 = vmatmul.mubr.bf16.gmra.mxu0 %v273
  %v614 = vpop.f32.mrf.mxu0
  %v615 = vadd.f32 0.0, %v614
  %v616 = vpop.f32.mrf.mxu0
  %v617 = vadd.f32 0.0, %v616
  %v618 = vpop.f32.mrf.mxu0
  %v619 = vadd.f32 0.0, %v618
  %v620 = vpop.f32.mrf.mxu0
  %v621 = vadd.f32 0.0, %v620
  %622 = vmatprep.mubr.bf16.mxu0 0
  %623 = vmatmul.mubr.bf16.gmra.mxu0 %v274
  %v624 = vpop.f32.mrf.mxu0
  %v625 = vadd.f32 0.0, %v624
  %v626 = vpop.f32.mrf.mxu0
  %v627 = vadd.f32 0.0, %v626
  %v628 = vpop.f32.mrf.mxu0
  %v629 = vadd.f32 0.0, %v628
  %v630 = vpop.f32.mrf.mxu0
  %v631 = vadd.f32 0.0, %v630
  %632 = vmatprep.mubr.bf16.mxu0 0
  %633 = vmatmul.mubr.bf16.gmra.mxu0 %v275
  %v634 = vpop.f32.mrf.mxu0
  %v635 = vadd.f32 0.0, %v634
  %v636 = vpop.f32.mrf.mxu0
  %v637 = vadd.f32 0.0, %v636
  %v638 = vpop.f32.mrf.mxu0
  %v639 = vadd.f32 0.0, %v638
  %v640 = vpop.f32.mrf.mxu0
  %v641 = vadd.f32 0.0, %v640
  %642 = vmatprep.mubr.bf16.mxu0 0
  %643 = vmatmul.mubr.bf16.gmra.mxu0 %v276
  %v644 = vpop.f32.mrf.mxu0
  %v645 = vadd.f32 0.0, %v644
  %v646 = vpop.f32.mrf.mxu0
  %v647 = vadd.f32 0.0, %v646
  %v648 = vpop.f32.mrf.mxu0
  %v649 = vadd.f32 0.0, %v648
  %v650 = vpop.f32.mrf.mxu0
  %v651 = vadd.f32 0.0, %v650
  %652 = vmatprep.mubr.bf16.mxu0 0
  %653 = vmatmul.mubr.bf16.gmra.mxu0 %v277
  %v654 = vpop.f32.mrf.mxu0
  %v655 = vadd.f32 0.0, %v654
  %v656 = vpop.f32.mrf.mxu0
  %v657 = vadd.f32 0.0, %v656
  %v658 = vpop.f32.mrf.mxu0
  %v659 = vadd.f32 0.0, %v658
  %v660 = vpop.f32.mrf.mxu0
  %v661 = vadd.f32 0.0, %v660
  %662 = vmatprep.mubr.bf16.mxu0 0
  %663 = vmatmul.mubr.bf16.gmra.mxu0 %v278
  %v664 = vpop.f32.mrf.mxu0
  %v665 = vadd.f32 0.0, %v664
  %v666 = vpop.f32.mrf.mxu0
  %v667 = vadd.f32 0.0, %v666
  %v668 = vpop.f32.mrf.mxu0
  %v669 = vadd.f32 0.0, %v668
  %v670 = vpop.f32.mrf.mxu0
  %v671 = vadd.f32 0.0, %v670
  %672 = vmatprep.mubr.bf16.mxu0 0
  %673 = vmatmul.mubr.bf16.gmra.mxu0 %v279
  %v674 = vpop.f32.mrf.mxu0
  %v675 = vadd.f32 0.0, %v674
  %v676 = vpop.f32.mrf.mxu0
  %v677 = vadd.f32 0.0, %v676
  %v678 = vpop.f32.mrf.mxu0
  %v679 = vadd.f32 0.0, %v678
  %v680 = vpop.f32.mrf.mxu0
  %v681 = vadd.f32 0.0, %v680
  %682 = vmatprep.mubr.bf16.mxu0 0
  %683 = vmatmul.mubr.bf16.gmra.mxu0 %v280
  %v684 = vpop.f32.mrf.mxu0
  %v685 = vadd.f32 0.0, %v684
  %v686 = vpop.f32.mrf.mxu0
  %v687 = vadd.f32 0.0, %v686
  %v688 = vpop.f32.mrf.mxu0
  %v689 = vadd.f32 0.0, %v688
  %v690 = vpop.f32.mrf.mxu0
  %v691 = vadd.f32 0.0, %v690
  %692 = vmatprep.mubr.bf16.mxu0 0
  %693 = vmatmul.mubr.bf16.gmra.mxu0 %v281
  %v694 = vpop.f32.mrf.mxu0
  %v695 = vadd.f32 0.0, %v694
  %v696 = vpop.f32.mrf.mxu0
  %v697 = vadd.f32 0.0, %v696
  %v698 = vpop.f32.mrf.mxu0
  %v699 = vadd.f32 0.0, %v698
  %v700 = vpop.f32.mrf.mxu0
  %v701 = vadd.f32 0.0, %v700
  %702 = vdwg.mxu0
  %v705 = vunpack.c.l.b16 %v45
  %v706 = vunpack.c.l.b16 %v46
  %v707 = vpack.c.b16 %v706, %v705
  %v725 = vunpack.c.l.b16 %v109
  %v726 = vunpack.c.h.b16 %v109
  %v727 = vunpack.c.l.b16 %v110
  %v728 = vunpack.c.h.b16 %v110
  %v729 = vunpack.c.l.b16 %v111
  %v730 = vunpack.c.h.b16 %v111
  %v731 = vunpack.c.l.b16 %v112
  %v732 = vunpack.c.h.b16 %v112
  %v733 = vunpack.c.l.b16 %v113
  %v734 = vunpack.c.h.b16 %v113
  %v735 = vunpack.c.l.b16 %v114
  %v736 = vunpack.c.h.b16 %v114
  %v737 = vunpack.c.l.b16 %v115
  %v738 = vunpack.c.h.b16 %v115
  %v739 = vunpack.c.l.b16 %v116
  %v740 = vunpack.c.h.b16 %v116
  %v741 = vunpack.c.l.b16 %v117
  %v742 = vunpack.c.h.b16 %v117
  %v743 = vunpack.c.l.b16 %v118
  %v744 = vunpack.c.h.b16 %v118
  %v745 = vunpack.c.l.b16 %v119
  %v746 = vunpack.c.h.b16 %v119
  %v747 = vunpack.c.l.b16 %v120
  %v748 = vunpack.c.h.b16 %v120
  %v749 = vunpack.c.l.b16 %v121
  %v750 = vunpack.c.h.b16 %v121
  %v751 = vunpack.c.l.b16 %v122
  %v752 = vunpack.c.h.b16 %v122
  %v753 = vunpack.c.l.b16 %v123
  %v754 = vunpack.c.h.b16 %v123
  %v755 = vunpack.c.l.b16 %v124
  %v756 = vunpack.c.h.b16 %v124
  %v757 = vpack.c.b16 %v727, %v725
  %v758 = vpack.c.b16 %v728, %v726
  %v759 = vpack.c.b16 %v731, %v729
  %v760 = vpack.c.b16 %v732, %v730
  %v761 = vpack.c.b16 %v735, %v733
  %v762 = vpack.c.b16 %v736, %v734
  %v763 = vpack.c.b16 %v739, %v737
  %v764 = vpack.c.b16 %v740, %v738
  %v765 = vpack.c.b16 %v743, %v741
  %v766 = vpack.c.b16 %v744, %v742
  %v767 = vpack.c.b16 %v747, %v745
  %v768 = vpack.c.b16 %v748, %v746
  %v769 = vpack.c.b16 %v751, %v749
  %v770 = vpack.c.b16 %v752, %v750
  %v771 = vpack.c.b16 %v755, %v753
  %v772 = vpack.c.b16 %v756, %v754
  %789 = vmatprep.subr.bf16.mxu0 %v772
  %790 = vmatpush1.bf16.msra.mxu0 %v771
  %791 = vmatprep.subr.bf16.mxu0 %v770
  %792 = vmatpush1.bf16.msra.mxu0 %v769
  %793 = vmatprep.subr.bf16.mxu0 %v768
  %794 = vmatpush1.bf16.msra.mxu0 %v767
  %795 = vmatprep.subr.bf16.mxu0 %v766
  %796 = vmatpush1.bf16.msra.mxu0 %v765
  %797 = vmatprep.subr.bf16.mxu0 %v764
  %798 = vmatpush1.bf16.msra.mxu0 %v763
  %799 = vmatprep.subr.bf16.mxu0 %v762
  %800 = vmatpush1.bf16.msra.mxu0 %v761
  %801 = vmatprep.subr.bf16.mxu0 %v760
  %802 = vmatpush1.bf16.msra.mxu0 %v759
  %803 = vmatprep.subr.bf16.mxu0 %v758
  %804 = vmatpush1.bf16.msra.mxu0 %v757
  %805 = vmatprep.subr.bf16.mxu0 0
  %806 = vmatpush2.bf16.msra.mxu0 0
  %807 = vmatprep.subr.bf16.mxu0 0
  %808 = vmatpush2.bf16.msra.mxu0 0
  %809 = vmatprep.subr.bf16.mxu0 0
  %810 = vmatpush2.bf16.msra.mxu0 0
  %811 = vmatprep.subr.bf16.mxu0 0
  %812 = vmatpush2.bf16.msra.mxu0 0
  %813 = vmatprep.subr.bf16.mxu0 0
  %814 = vmatpush2.bf16.msra.mxu0 0
  %815 = vmatprep.subr.bf16.mxu0 0
  %816 = vmatpush2.bf16.msra.mxu0 0
  %817 = vmatprep.subr.bf16.mxu0 0
  %818 = vmatpush2.bf16.msra.mxu0 0
  %819 = vmatprep.subr.bf16.mxu0 0
  %820 = vmatpush2.bf16.msra.mxu0 0
  %821 = vmatprep.mubr.bf16.mxu0 0
  %822 = vmatmul.mubr.bf16.gmra.mxu0 %v707
  %v823 = vpop.f32.mrf.mxu0
  %v824 = vadd.f32 %v425, %v823
  %v825 = vpop.f32.mrf.mxu0
  %v826 = vadd.f32 %v427, %v825
  %v827 = vpop.f32.mrf.mxu0
  %v828 = vadd.f32 %v429, %v827
  %v829 = vpop.f32.mrf.mxu0
  %v830 = vadd.f32 %v431, %v829
  %831 = vmatprep.mubr.bf16.mxu0 0
  %832 = vmatmul.mubr.bf16.gmra.mxu0 %v254
  %v833 = vpop.f32.mrf.mxu0
  %v834 = vadd.f32 %v435, %v833
  %v835 = vpop.f32.mrf.mxu0
  %v836 = vadd.f32 %v437, %v835
  %v837 = vpop.f32.mrf.mxu0
  %v838 = vadd.f32 %v439, %v837
  %v839 = vpop.f32.mrf.mxu0
  %v840 = vadd.f32 %v441, %v839
  %841 = vmatprep.mubr.bf16.mxu0 0
  %842 = vmatmul.mubr.bf16.gmra.mxu0 %v255
  %v843 = vpop.f32.mrf.mxu0
  %v844 = vadd.f32 %v445, %v843
  %v845 = vpop.f32.mrf.mxu0
  %v846 = vadd.f32 %v447, %v845
  %v847 = vpop.f32.mrf.mxu0
  %v848 = vadd.f32 %v449, %v847
  %v849 = vpop.f32.mrf.mxu0
  %v850 = vadd.f32 %v451, %v849
  %851 = vmatprep.mubr.bf16.mxu0 0
  %852 = vmatmul.mubr.bf16.gmra.mxu0 %v256
  %v853 = vpop.f32.mrf.mxu0
  %v854 = vadd.f32 %v455, %v853
  %v855 = vpop.f32.mrf.mxu0
  %v856 = vadd.f32 %v457, %v855
  %v857 = vpop.f32.mrf.mxu0
  %v858 = vadd.f32 %v459, %v857
  %v859 = vpop.f32.mrf.mxu0
  %v860 = vadd.f32 %v461, %v859
  %861 = vmatprep.mubr.bf16.mxu0 0
  %862 = vmatmul.mubr.bf16.gmra.mxu0 %v257
  %v863 = vpop.f32.mrf.mxu0
  %v864 = vadd.f32 %v465, %v863
  %v865 = vpop.f32.mrf.mxu0
  %v866 = vadd.f32 %v467, %v865
  %v867 = vpop.f32.mrf.mxu0
  %v868 = vadd.f32 %v469, %v867
  %v869 = vpop.f32.mrf.mxu0
  %v870 = vadd.f32 %v471, %v869
  %871 = vmatprep.mubr.bf16.mxu0 0
  %872 = vmatmul.mubr.bf16.gmra.mxu0 %v258
  %v873 = vpop.f32.mrf.mxu0
  %v874 = vadd.f32 %v475, %v873
  %v875 = vpop.f32.mrf.mxu0
  %v876 = vadd.f32 %v477, %v875
  %v877 = vpop.f32.mrf.mxu0
  %v878 = vadd.f32 %v479, %v877
  %v879 = vpop.f32.mrf.mxu0
  %v880 = vadd.f32 %v481, %v879
  %881 = vmatprep.mubr.bf16.mxu0 0
  %882 = vmatmul.mubr.bf16.gmra.mxu0 %v259
  %v883 = vpop.f32.mrf.mxu0
  %v884 = vadd.f32 %v485, %v883
  %v885 = vpop.f32.mrf.mxu0
  %v886 = vadd.f32 %v487, %v885
  %v887 = vpop.f32.mrf.mxu0
  %v888 = vadd.f32 %v489, %v887
  %v889 = vpop.f32.mrf.mxu0
  %v890 = vadd.f32 %v491, %v889
  %891 = vmatprep.mubr.bf16.mxu0 0
  %892 = vmatmul.mubr.bf16.gmra.mxu0 %v260
  %v893 = vpop.f32.mrf.mxu0
  %v894 = vadd.f32 %v495, %v893
  %v895 = vpop.f32.mrf.mxu0
  %v896 = vadd.f32 %v497, %v895
  %v897 = vpop.f32.mrf.mxu0
  %v898 = vadd.f32 %v499, %v897
  %v899 = vpop.f32.mrf.mxu0
  %v900 = vadd.f32 %v501, %v899
  %901 = vmatprep.mubr.bf16.mxu0 0
  %902 = vmatmul.mubr.bf16.gmra.mxu0 %v261
  %v903 = vpop.f32.mrf.mxu0
  %v904 = vadd.f32 %v505, %v903
  %v905 = vpop.f32.mrf.mxu0
  %v906 = vadd.f32 %v507, %v905
  %v907 = vpop.f32.mrf.mxu0
  %v908 = vadd.f32 %v509, %v907
  %v909 = vpop.f32.mrf.mxu0
  %v910 = vadd.f32 %v511, %v909
  %911 = vmatprep.mubr.bf16.mxu0 0
  %912 = vmatmul.mubr.bf16.gmra.mxu0 %v262
  %v913 = vpop.f32.mrf.mxu0
  %v914 = vadd.f32 %v515, %v913
  %v915 = vpop.f32.mrf.mxu0
  %v916 = vadd.f32 %v517, %v915
  %v917 = vpop.f32.mrf.mxu0
  %v918 = vadd.f32 %v519, %v917
  %v919 = vpop.f32.mrf.mxu0
  %v920 = vadd.f32 %v521, %v919
  %921 = vmatprep.mubr.bf16.mxu0 0
  %922 = vmatmul.mubr.bf16.gmra.mxu0 %v263
  %v923 = vpop.f32.mrf.mxu0
  %v924 = vadd.f32 %v525, %v923
  %v925 = vpop.f32.mrf.mxu0
  %v926 = vadd.f32 %v527, %v925
  %v927 = vpop.f32.mrf.mxu0
  %v928 = vadd.f32 %v529, %v927
  %v929 = vpop.f32.mrf.mxu0
  %v930 = vadd.f32 %v531, %v929
  %931 = vmatprep.mubr.bf16.mxu0 0
  %932 = vmatmul.mubr.bf16.gmra.mxu0 %v264
  %v933 = vpop.f32.mrf.mxu0
  %v934 = vadd.f32 %v535, %v933
  %v935 = vpop.f32.mrf.mxu0
  %v936 = vadd.f32 %v537, %v935
  %v937 = vpop.f32.mrf.mxu0
  %v938 = vadd.f32 %v539, %v937
  %v939 = vpop.f32.mrf.mxu0
  %v940 = vadd.f32 %v541, %v939
  %941 = vmatprep.mubr.bf16.mxu0 0
  %942 = vmatmul.mubr.bf16.gmra.mxu0 %v265
  %v943 = vpop.f32.mrf.mxu0
  %v944 = vadd.f32 %v545, %v943
  %v945 = vpop.f32.mrf.mxu0
  %v946 = vadd.f32 %v547, %v945
  %v947 = vpop.f32.mrf.mxu0
  %v948 = vadd.f32 %v549, %v947
  %v949 = vpop.f32.mrf.mxu0
  %v950 = vadd.f32 %v551, %v949
  %951 = vmatprep.mubr.bf16.mxu0 0
  %952 = vmatmul.mubr.bf16.gmra.mxu0 %v266
  %v953 = vpop.f32.mrf.mxu0
  %v954 = vadd.f32 %v555, %v953
  %v955 = vpop.f32.mrf.mxu0
  %v956 = vadd.f32 %v557, %v955
  %v957 = vpop.f32.mrf.mxu0
  %v958 = vadd.f32 %v559, %v957
  %v959 = vpop.f32.mrf.mxu0
  %v960 = vadd.f32 %v561, %v959
  %961 = vmatprep.mubr.bf16.mxu0 0
  %962 = vmatmul.mubr.bf16.gmra.mxu0 %v267
  %v963 = vpop.f32.mrf.mxu0
  %v964 = vadd.f32 %v565, %v963
  %v965 = vpop.f32.mrf.mxu0
  %v966 = vadd.f32 %v567, %v965
  %v967 = vpop.f32.mrf.mxu0
  %v968 = vadd.f32 %v569, %v967
  %v969 = vpop.f32.mrf.mxu0
  %v970 = vadd.f32 %v571, %v969
  %971 = vmatprep.mubr.bf16.mxu0 0
  %972 = vmatmul.mubr.bf16.gmra.mxu0 %v268
  %v973 = vpop.f32.mrf.mxu0
  %v974 = vadd.f32 %v575, %v973
  %v975 = vpop.f32.mrf.mxu0
  %v976 = vadd.f32 %v577, %v975
  %v977 = vpop.f32.mrf.mxu0
  %v978 = vadd.f32 %v579, %v977
  %v979 = vpop.f32.mrf.mxu0
  %v980 = vadd.f32 %v581, %v979
  %981 = vmatprep.mubr.bf16.mxu0 0
  %982 = vmatmul.mubr.bf16.gmra.mxu0 %v269
  %v983 = vpop.f32.mrf.mxu0
  %v984 = vadd.f32 %v585, %v983
  %v985 = vpop.f32.mrf.mxu0
  %v986 = vadd.f32 %v587, %v985
  %v987 = vpop.f32.mrf.mxu0
  %v988 = vadd.f32 %v589, %v987
  %v989 = vpop.f32.mrf.mxu0
  %v990 = vadd.f32 %v591, %v989
  %991 = vmatprep.mubr.bf16.mxu0 0
  %992 = vmatmul.mubr.bf16.gmra.mxu0 %v270
  %v993 = vpop.f32.mrf.mxu0
  %v994 = vadd.f32 %v595, %v993
  %v995 = vpop.f32.mrf.mxu0
  %v996 = vadd.f32 %v597, %v995
  %v997 = vpop.f32.mrf.mxu0
  %v998 = vadd.f32 %v599, %v997
  %v999 = vpop.f32.mrf.mxu0
  %v1000 = vadd.f32 %v601, %v999
  %1001 = vmatprep.mubr.bf16.mxu0 0
  %1002 = vmatmul.mubr.bf16.gmra.mxu0 %v271
  %v1003 = vpop.f32.mrf.mxu0
  %v1004 = vadd.f32 %v605, %v1003
  %v1005 = vpop.f32.mrf.mxu0
  %v1006 = vadd.f32 %v607, %v1005
  %v1007 = vpop.f32.mrf.mxu0
  %v1008 = vadd.f32 %v609, %v1007
  %v1009 = vpop.f32.mrf.mxu0
  %v1010 = vadd.f32 %v611, %v1009
  %1011 = vmatprep.mubr.bf16.mxu0 0
  %1012 = vmatmul.mubr.bf16.gmra.mxu0 %v272
  %v1013 = vpop.f32.mrf.mxu0
  %v1014 = vadd.f32 %v615, %v1013
  %v1015 = vpop.f32.mrf.mxu0
  %v1016 = vadd.f32 %v617, %v1015
  %v1017 = vpop.f32.mrf.mxu0
  %v1018 = vadd.f32 %v619, %v1017
  %v1019 = vpop.f32.mrf.mxu0
  %v1020 = vadd.f32 %v621, %v1019
  %1021 = vmatprep.mubr.bf16.mxu0 0
  %1022 = vmatmul.mubr.bf16.gmra.mxu0 %v273
  %v1023 = vpop.f32.mrf.mxu0
  %v1024 = vadd.f32 %v625, %v1023
  %v1025 = vpop.f32.mrf.mxu0
  %v1026 = vadd.f32 %v627, %v1025
  %v1027 = vpop.f32.mrf.mxu0
  %v1028 = vadd.f32 %v629, %v1027
  %v1029 = vpop.f32.mrf.mxu0
  %v1030 = vadd.f32 %v631, %v1029
  %1031 = vmatprep.mubr.bf16.mxu0 0
  %1032 = vmatmul.mubr.bf16.gmra.mxu0 %v274
  %v1033 = vpop.f32.mrf.mxu0
  %v1034 = vadd.f32 %v635, %v1033
  %v1035 = vpop.f32.mrf.mxu0
  %v1036 = vadd.f32 %v637, %v1035
  %v1037 = vpop.f32.mrf.mxu0
  %v1038 = vadd.f32 %v639, %v1037
  %v1039 = vpop.f32.mrf.mxu0
  %v1040 = vadd.f32 %v641, %v1039
  %1041 = vmatprep.mubr.bf16.mxu0 0
  %1042 = vmatmul.mubr.bf16.gmra.mxu0 %v275
  %v1043 = vpop.f32.mrf.mxu0
  %v1044 = vadd.f32 %v645, %v1043
  %v1045 = vpop.f32.mrf.mxu0
  %v1046 = vadd.f32 %v647, %v1045
  %v1047 = vpop.f32.mrf.mxu0
  %v1048 = vadd.f32 %v649, %v1047
  %v1049 = vpop.f32.mrf.mxu0
  %v1050 = vadd.f32 %v651, %v1049
  %1051 = vmatprep.mubr.bf16.mxu0 0
  %1052 = vmatmul.mubr.bf16.gmra.mxu0 %v276
  %v1053 = vpop.f32.mrf.mxu0
  %v1054 = vadd.f32 %v655, %v1053
  %v1055 = vpop.f32.mrf.mxu0
  %v1056 = vadd.f32 %v657, %v1055
  %v1057 = vpop.f32.mrf.mxu0
  %v1058 = vadd.f32 %v659, %v1057
  %v1059 = vpop.f32.mrf.mxu0
  %v1060 = vadd.f32 %v661, %v1059
  %1061 = vmatprep.mubr.bf16.mxu0 0
  %1062 = vmatmul.mubr.bf16.gmra.mxu0 %v277
  %v1063 = vpop.f32.mrf.mxu0
  %v1064 = vadd.f32 %v665, %v1063
  %v1065 = vpop.f32.mrf.mxu0
  %v1066 = vadd.f32 %v667, %v1065
  %v1067 = vpop.f32.mrf.mxu0
  %v1068 = vadd.f32 %v669, %v1067
  %v1069 = vpop.f32.mrf.mxu0
  %v1070 = vadd.f32 %v671, %v1069
  %1071 = vmatprep.mubr.bf16.mxu0 0
  %1072 = vmatmul.mubr.bf16.gmra.mxu0 %v278
  %v1073 = vpop.f32.mrf.mxu0
  %v1074 = vadd.f32 %v675, %v1073
  %v1075 = vpop.f32.mrf.mxu0
  %v1076 = vadd.f32 %v677, %v1075
  %v1077 = vpop.f32.mrf.mxu0
  %v1078 = vadd.f32 %v679, %v1077
  %v1079 = vpop.f32.mrf.mxu0
  %v1080 = vadd.f32 %v681, %v1079
  %1081 = vmatprep.mubr.bf16.mxu0 0
  %1082 = vmatmul.mubr.bf16.gmra.mxu0 %v279
  %v1083 = vpop.f32.mrf.mxu0
  %v1084 = vadd.f32 %v685, %v1083
  %v1085 = vpop.f32.mrf.mxu0
  %v1086 = vadd.f32 %v687, %v1085
  %v1087 = vpop.f32.mrf.mxu0
  %v1088 = vadd.f32 %v689, %v1087
  %v1089 = vpop.f32.mrf.mxu0
  %v1090 = vadd.f32 %v691, %v1089
  %1091 = vmatprep.mubr.bf16.mxu0 0
  %1092 = vmatmul.mubr.bf16.gmra.mxu0 %v280
  %v1093 = vpop.f32.mrf.mxu0
  %v1094 = vadd.f32 %v695, %v1093
  %v1095 = vpop.f32.mrf.mxu0
  %v1096 = vadd.f32 %v697, %v1095
  %v1097 = vpop.f32.mrf.mxu0
  %v1098 = vadd.f32 %v699, %v1097
  %v1099 = vpop.f32.mrf.mxu0
  %v1100 = vadd.f32 %v701, %v1099
  %1101 = vdwg.mxu0
  %s1102 = scalar_lea.vmem %s1, 256
  %v1103 = vld [vmem:[%s1102] sm:$0xff]
  %v1104 = vld [vmem:[%s1102 + $0x8] sm:$0xff]
  %v1105 = vld [vmem:[%s1102 + $0x10] sm:$0xff]
  %v1106 = vld [vmem:[%s1102 + $0x18] sm:$0xff]
  %v1107 = vld [vmem:[%s1102 + $0x20] sm:$0xff]
  %v1108 = vld [vmem:[%s1102 + $0x28] sm:$0xff]
  %v1109 = vld [vmem:[%s1102 + $0x30] sm:$0xff]
  %v1110 = vld [vmem:[%s1102 + $0x38] sm:$0xff]
  %v1111 = vld [vmem:[%s1102 + $0x40] sm:$0xff]
  %v1112 = vld [vmem:[%s1102 + $0x48] sm:$0xff]
  %v1113 = vld [vmem:[%s1102 + $0x50] sm:$0xff]
  %v1114 = vld [vmem:[%s1102 + $0x58] sm:$0xff]
  %v1115 = vld [vmem:[%s1102 + $0x60] sm:$0xff]
  %v1116 = vld [vmem:[%s1102 + $0x68] sm:$0xff]
  %v1117 = vld [vmem:[%s1102 + $0x70] sm:$0xff]
  %v1118 = vld [vmem:[%s1102 + $0x78] sm:$0xff]
  %v1121 = vunpack.c.l.b16 %v103
  %v1122 = vunpack.c.l.b16 %v104
  %v1123 = vpack.c.b16 %v1122, %v1121
  %v1141 = vunpack.c.l.b16 %v1103
  %v1142 = vunpack.c.h.b16 %v1103
  %v1143 = vunpack.c.l.b16 %v1104
  %v1144 = vunpack.c.h.b16 %v1104
  %v1145 = vunpack.c.l.b16 %v1105
  %v1146 = vunpack.c.h.b16 %v1105
  %v1147 = vunpack.c.l.b16 %v1106
  %v1148 = vunpack.c.h.b16 %v1106
  %v1149 = vunpack.c.l.b16 %v1107
  %v1150 = vunpack.c.h.b16 %v1107
  %v1151 = vunpack.c.l.b16 %v1108
  %v1152 = vunpack.c.h.b16 %v1108
  %v1153 = vunpack.c.l.b16 %v1109
  %v1154 = vunpack.c.h.b16 %v1109
  %v1155 = vunpack.c.l.b16 %v1110
  %v1156 = vunpack.c.h.b16 %v1110
  %v1157 = vunpack.c.l.b16 %v1111
  %v1158 = vunpack.c.h.b16 %v1111
  %v1159 = vunpack.c.l.b16 %v1112
  %v1160 = vunpack.c.h.b16 %v1112
  %v1161 = vunpack.c.l.b16 %v1113
  %v1162 = vunpack.c.h.b16 %v1113
  %v1163 = vunpack.c.l.b16 %v1114
  %v1164 = vunpack.c.h.b16 %v1114
  %v1165 = vunpack.c.l.b16 %v1115
  %v1166 = vunpack.c.h.b16 %v1115
  %v1167 = vunpack.c.l.b16 %v1116
  %v1168 = vunpack.c.h.b16 %v1116
  %v1169 = vunpack.c.l.b16 %v1117
  %v1170 = vunpack.c.h.b16 %v1117
  %v1171 = vunpack.c.l.b16 %v1118
  %v1172 = vunpack.c.h.b16 %v1118
  %v1173 = vpack.c.b16 %v1143, %v1141
  %v1174 = vpack.c.b16 %v1144, %v1142
  %v1175 = vpack.c.b16 %v1147, %v1145
  %v1176 = vpack.c.b16 %v1148, %v1146
  %v1177 = vpack.c.b16 %v1151, %v1149
  %v1178 = vpack.c.b16 %v1152, %v1150
  %v1179 = vpack.c.b16 %v1155, %v1153
  %v1180 = vpack.c.b16 %v1156, %v1154
  %v1181 = vpack.c.b16 %v1159, %v1157
  %v1182 = vpack.c.b16 %v1160, %v1158
  %v1183 = vpack.c.b16 %v1163, %v1161
  %v1184 = vpack.c.b16 %v1164, %v1162
  %v1185 = vpack.c.b16 %v1167, %v1165
  %v1186 = vpack.c.b16 %v1168, %v1166
  %v1187 = vpack.c.b16 %v1171, %v1169
  %v1188 = vpack.c.b16 %v1172, %v1170
  %1205 = vmatprep.subr.bf16.mxu0 %v1188
  %1206 = vmatpush1.bf16.msra.mxu0 %v1187
  %1207 = vmatprep.subr.bf16.mxu0 %v1186
  %1208 = vmatpush1.bf16.msra.mxu0 %v1185
  %1209 = vmatprep.subr.bf16.mxu0 %v1184
  %1210 = vmatpush1.bf16.msra.mxu0 %v1183
  %1211 = vmatprep.subr.bf16.mxu0 %v1182
  %1212 = vmatpush1.bf16.msra.mxu0 %v1181
  %1213 = vmatprep.subr.bf16.mxu0 %v1180
  %1214 = vmatpush1.bf16.msra.mxu0 %v1179
  %1215 = vmatprep.subr.bf16.mxu0 %v1178
  %1216 = vmatpush1.bf16.msra.mxu0 %v1177
  %1217 = vmatprep.subr.bf16.mxu0 %v1176
  %1218 = vmatpush1.bf16.msra.mxu0 %v1175
  %1219 = vmatprep.subr.bf16.mxu0 %v1174
  %1220 = vmatpush1.bf16.msra.mxu0 %v1173
  %1221 = vmatprep.subr.bf16.mxu0 0
  %1222 = vmatpush2.bf16.msra.mxu0 0
  %1223 = vmatprep.subr.bf16.mxu0 0
  %1224 = vmatpush2.bf16.msra.mxu0 0
  %1225 = vmatprep.subr.bf16.mxu0 0
  %1226 = vmatpush2.bf16.msra.mxu0 0
  %1227 = vmatprep.subr.bf16.mxu0 0
  %1228 = vmatpush2.bf16.msra.mxu0 0
  %1229 = vmatprep.subr.bf16.mxu0 0
  %1230 = vmatpush2.bf16.msra.mxu0 0
  %1231 = vmatprep.subr.bf16.mxu0 0
  %1232 = vmatpush2.bf16.msra.mxu0 0
  %1233 = vmatprep.subr.bf16.mxu0 0
  %1234 = vmatpush2.bf16.msra.mxu0 0
  %1235 = vmatprep.subr.bf16.mxu0 0
  %1236 = vmatpush2.bf16.msra.mxu0 0
  %1237 = vmatprep.mubr.bf16.mxu0 0
  %1238 = vmatmul.mubr.bf16.gmra.mxu0 %v255
  %v1239 = vpop.f32.mrf.mxu0
  %v1240 = vadd.f32 0.0, %v1239
  %v1241 = vpop.f32.mrf.mxu0
  %v1242 = vadd.f32 0.0, %v1241
  %v1243 = vpop.f32.mrf.mxu0
  %v1244 = vadd.f32 0.0, %v1243
  %v1245 = vpop.f32.mrf.mxu0
  %v1246 = vadd.f32 0.0, %v1245
  %1247 = vmatprep.mubr.bf16.mxu0 0
  %1248 = vmatmul.mubr.bf16.gmra.mxu0 %v256
  %v1249 = vpop.f32.mrf.mxu0
  %v1250 = vadd.f32 0.0, %v1249
  %v1251 = vpop.f32.mrf.mxu0
  %v1252 = vadd.f32 0.0, %v1251
  %v1253 = vpop.f32.mrf.mxu0
  %v1254 = vadd.f32 0.0, %v1253
  %v1255 = vpop.f32.mrf.mxu0
  %v1256 = vadd.f32 0.0, %v1255
  %1257 = vmatprep.mubr.bf16.mxu0 0
  %1258 = vmatmul.mubr.bf16.gmra.mxu0 %v257
  %v1259 = vpop.f32.mrf.mxu0
  %v1260 = vadd.f32 0.0, %v1259
  %v1261 = vpop.f32.mrf.mxu0
  %v1262 = vadd.f32 0.0, %v1261
  %v1263 = vpop.f32.mrf.mxu0
  %v1264 = vadd.f32 0.0, %v1263
  %v1265 = vpop.f32.mrf.mxu0
  %v1266 = vadd.f32 0.0, %v1265
  %1267 = vmatprep.mubr.bf16.mxu0 0
  %1268 = vmatmul.mubr.bf16.gmra.mxu0 %v258
  %v1269 = vpop.f32.mrf.mxu0
  %v1270 = vadd.f32 0.0, %v1269
  %v1271 = vpop.f32.mrf.mxu0
  %v1272 = vadd.f32 0.0, %v1271
  %v1273 = vpop.f32.mrf.mxu0
  %v1274 = vadd.f32 0.0, %v1273
  %v1275 = vpop.f32.mrf.mxu0
  %v1276 = vadd.f32 0.0, %v1275
  %1277 = vmatprep.mubr.bf16.mxu0 0
  %1278 = vmatmul.mubr.bf16.gmra.mxu0 %v259
  %v1279 = vpop.f32.mrf.mxu0
  %v1280 = vadd.f32 0.0, %v1279
  %v1281 = vpop.f32.mrf.mxu0
  %v1282 = vadd.f32 0.0, %v1281
  %v1283 = vpop.f32.mrf.mxu0
  %v1284 = vadd.f32 0.0, %v1283
  %v1285 = vpop.f32.mrf.mxu0
  %v1286 = vadd.f32 0.0, %v1285
  %1287 = vmatprep.mubr.bf16.mxu0 0
  %1288 = vmatmul.mubr.bf16.gmra.mxu0 %v260
  %v1289 = vpop.f32.mrf.mxu0
  %v1290 = vadd.f32 0.0, %v1289
  %v1291 = vpop.f32.mrf.mxu0
  %v1292 = vadd.f32 0.0, %v1291
  %v1293 = vpop.f32.mrf.mxu0
  %v1294 = vadd.f32 0.0, %v1293
  %v1295 = vpop.f32.mrf.mxu0
  %v1296 = vadd.f32 0.0, %v1295
  %1297 = vmatprep.mubr.bf16.mxu0 0
  %1298 = vmatmul.mubr.bf16.gmra.mxu0 %v261
  %v1299 = vpop.f32.mrf.mxu0
  %v1300 = vadd.f32 0.0, %v1299
  %v1301 = vpop.f32.mrf.mxu0
  %v1302 = vadd.f32 0.0, %v1301
  %v1303 = vpop.f32.mrf.mxu0
  %v1304 = vadd.f32 0.0, %v1303
  %v1305 = vpop.f32.mrf.mxu0
  %v1306 = vadd.f32 0.0, %v1305
  %1307 = vmatprep.mubr.bf16.mxu0 0
  %1308 = vmatmul.mubr.bf16.gmra.mxu0 %v262
  %v1309 = vpop.f32.mrf.mxu0
  %v1310 = vadd.f32 0.0, %v1309
  %v1311 = vpop.f32.mrf.mxu0
  %v1312 = vadd.f32 0.0, %v1311
  %v1313 = vpop.f32.mrf.mxu0
  %v1314 = vadd.f32 0.0, %v1313
  %v1315 = vpop.f32.mrf.mxu0
  %v1316 = vadd.f32 0.0, %v1315
  %1317 = vmatprep.mubr.bf16.mxu0 0
  %1318 = vmatmul.mubr.bf16.gmra.mxu0 %v263
  %v1319 = vpop.f32.mrf.mxu0
  %v1320 = vadd.f32 0.0, %v1319
  %v1321 = vpop.f32.mrf.mxu0
  %v1322 = vadd.f32 0.0, %v1321
  %v1323 = vpop.f32.mrf.mxu0
  %v1324 = vadd.f32 0.0, %v1323
  %v1325 = vpop.f32.mrf.mxu0
  %v1326 = vadd.f32 0.0, %v1325
  %1327 = vmatprep.mubr.bf16.mxu0 0
  %1328 = vmatmul.mubr.bf16.gmra.mxu0 %v264
  %v1329 = vpop.f32.mrf.mxu0
  %v1330 = vadd.f32 0.0, %v1329
  %v1331 = vpop.f32.mrf.mxu0
  %v1332 = vadd.f32 0.0, %v1331
  %v1333 = vpop.f32.mrf.mxu0
  %v1334 = vadd.f32 0.0, %v1333
  %v1335 = vpop.f32.mrf.mxu0
  %v1336 = vadd.f32 0.0, %v1335
  %1337 = vmatprep.mubr.bf16.mxu0 0
  %1338 = vmatmul.mubr.bf16.gmra.mxu0 %v265
  %v1339 = vpop.f32.mrf.mxu0
  %v1340 = vadd.f32 0.0, %v1339
  %v1341 = vpop.f32.mrf.mxu0
  %v1342 = vadd.f32 0.0, %v1341
  %v1343 = vpop.f32.mrf.mxu0
  %v1344 = vadd.f32 0.0, %v1343
  %v1345 = vpop.f32.mrf.mxu0
  %v1346 = vadd.f32 0.0, %v1345
  %1347 = vmatprep.mubr.bf16.mxu0 0
  %1348 = vmatmul.mubr.bf16.gmra.mxu0 %v266
  %v1349 = vpop.f32.mrf.mxu0
  %v1350 = vadd.f32 0.0, %v1349
  %v1351 = vpop.f32.mrf.mxu0
  %v1352 = vadd.f32 0.0, %v1351
  %v1353 = vpop.f32.mrf.mxu0
  %v1354 = vadd.f32 0.0, %v1353
  %v1355 = vpop.f32.mrf.mxu0
  %v1356 = vadd.f32 0.0, %v1355
  %1357 = vmatprep.mubr.bf16.mxu0 0
  %1358 = vmatmul.mubr.bf16.gmra.mxu0 %v267
  %v1359 = vpop.f32.mrf.mxu0
  %v1360 = vadd.f32 0.0, %v1359
  %v1361 = vpop.f32.mrf.mxu0
  %v1362 = vadd.f32 0.0, %v1361
  %v1363 = vpop.f32.mrf.mxu0
  %v1364 = vadd.f32 0.0, %v1363
  %v1365 = vpop.f32.mrf.mxu0
  %v1366 = vadd.f32 0.0, %v1365
  %1367 = vmatprep.mubr.bf16.mxu0 0
  %1368 = vmatmul.mubr.bf16.gmra.mxu0 %v268
  %v1369 = vpop.f32.mrf.mxu0
  %v1370 = vadd.f32 0.0, %v1369
  %v1371 = vpop.f32.mrf.mxu0
  %v1372 = vadd.f32 0.0, %v1371
  %v1373 = vpop.f32.mrf.mxu0
  %v1374 = vadd.f32 0.0, %v1373
  %v1375 = vpop.f32.mrf.mxu0
  %v1376 = vadd.f32 0.0, %v1375
  %1377 = vmatprep.mubr.bf16.mxu0 0
  %1378 = vmatmul.mubr.bf16.gmra.mxu0 %v269
  %v1379 = vpop.f32.mrf.mxu0
  %v1380 = vadd.f32 0.0, %v1379
  %v1381 = vpop.f32.mrf.mxu0
  %v1382 = vadd.f32 0.0, %v1381
  %v1383 = vpop.f32.mrf.mxu0
  %v1384 = vadd.f32 0.0, %v1383
  %v1385 = vpop.f32.mrf.mxu0
  %v1386 = vadd.f32 0.0, %v1385
  %1387 = vmatprep.mubr.bf16.mxu0 0
  %1388 = vmatmul.mubr.bf16.gmra.mxu0 %v270
  %v1389 = vpop.f32.mrf.mxu0
  %v1390 = vadd.f32 0.0, %v1389
  %v1391 = vpop.f32.mrf.mxu0
  %v1392 = vadd.f32 0.0, %v1391
  %v1393 = vpop.f32.mrf.mxu0
  %v1394 = vadd.f32 0.0, %v1393
  %v1395 = vpop.f32.mrf.mxu0
  %v1396 = vadd.f32 0.0, %v1395
  %1397 = vmatprep.mubr.bf16.mxu0 0
  %1398 = vmatmul.mubr.bf16.gmra.mxu0 %v271
  %v1399 = vpop.f32.mrf.mxu0
  %v1400 = vadd.f32 0.0, %v1399
  %v1401 = vpop.f32.mrf.mxu0
  %v1402 = vadd.f32 0.0, %v1401
  %v1403 = vpop.f32.mrf.mxu0
  %v1404 = vadd.f32 0.0, %v1403
  %v1405 = vpop.f32.mrf.mxu0
  %v1406 = vadd.f32 0.0, %v1405
  %1407 = vmatprep.mubr.bf16.mxu0 0
  %1408 = vmatmul.mubr.bf16.gmra.mxu0 %v272
  %v1409 = vpop.f32.mrf.mxu0
  %v1410 = vadd.f32 0.0, %v1409
  %v1411 = vpop.f32.mrf.mxu0
  %v1412 = vadd.f32 0.0, %v1411
  %v1413 = vpop.f32.mrf.mxu0
  %v1414 = vadd.f32 0.0, %v1413
  %v1415 = vpop.f32.mrf.mxu0
  %v1416 = vadd.f32 0.0, %v1415
  %1417 = vmatprep.mubr.bf16.mxu0 0
  %1418 = vmatmul.mubr.bf16.gmra.mxu0 %v273
  %v1419 = vpop.f32.mrf.mxu0
  %v1420 = vadd.f32 0.0, %v1419
  %v1421 = vpop.f32.mrf.mxu0
  %v1422 = vadd.f32 0.0, %v1421
  %v1423 = vpop.f32.mrf.mxu0
  %v1424 = vadd.f32 0.0, %v1423
  %v1425 = vpop.f32.mrf.mxu0
  %v1426 = vadd.f32 0.0, %v1425
  %1427 = vmatprep.mubr.bf16.mxu0 0
  %1428 = vmatmul.mubr.bf16.gmra.mxu0 %v274
  %v1429 = vpop.f32.mrf.mxu0
  %v1430 = vadd.f32 0.0, %v1429
  %v1431 = vpop.f32.mrf.mxu0
  %v1432 = vadd.f32 0.0, %v1431
  %v1433 = vpop.f32.mrf.mxu0
  %v1434 = vadd.f32 0.0, %v1433
  %v1435 = vpop.f32.mrf.mxu0
  %v1436 = vadd.f32 0.0, %v1435
  %1437 = vmatprep.mubr.bf16.mxu0 0
  %1438 = vmatmul.mubr.bf16.gmra.mxu0 %v275
  %v1439 = vpop.f32.mrf.mxu0
  %v1440 = vadd.f32 0.0, %v1439
  %v1441 = vpop.f32.mrf.mxu0
  %v1442 = vadd.f32 0.0, %v1441
  %v1443 = vpop.f32.mrf.mxu0
  %v1444 = vadd.f32 0.0, %v1443
  %v1445 = vpop.f32.mrf.mxu0
  %v1446 = vadd.f32 0.0, %v1445
  %1447 = vmatprep.mubr.bf16.mxu0 0
  %1448 = vmatmul.mubr.bf16.gmra.mxu0 %v276
  %v1449 = vpop.f32.mrf.mxu0
  %v1450 = vadd.f32 0.0, %v1449
  %v1451 = vpop.f32.mrf.mxu0
  %v1452 = vadd.f32 0.0, %v1451
  %v1453 = vpop.f32.mrf.mxu0
  %v1454 = vadd.f32 0.0, %v1453
  %v1455 = vpop.f32.mrf.mxu0
  %v1456 = vadd.f32 0.0, %v1455
  %1457 = vmatprep.mubr.bf16.mxu0 0
  %1458 = vmatmul.mubr.bf16.gmra.mxu0 %v277
  %v1459 = vpop.f32.mrf.mxu0
  %v1460 = vadd.f32 0.0, %v1459
  %v1461 = vpop.f32.mrf.mxu0
  %v1462 = vadd.f32 0.0, %v1461
  %v1463 = vpop.f32.mrf.mxu0
  %v1464 = vadd.f32 0.0, %v1463
  %v1465 = vpop.f32.mrf.mxu0
  %v1466 = vadd.f32 0.0, %v1465
  %1467 = vmatprep.mubr.bf16.mxu0 0
  %1468 = vmatmul.mubr.bf16.gmra.mxu0 %v278
  %v1469 = vpop.f32.mrf.mxu0
  %v1470 = vadd.f32 0.0, %v1469
  %v1471 = vpop.f32.mrf.mxu0
  %v1472 = vadd.f32 0.0, %v1471
  %v1473 = vpop.f32.mrf.mxu0
  %v1474 = vadd.f32 0.0, %v1473
  %v1475 = vpop.f32.mrf.mxu0
  %v1476 = vadd.f32 0.0, %v1475
  %1477 = vmatprep.mubr.bf16.mxu0 0
  %1478 = vmatmul.mubr.bf16.gmra.mxu0 %v279
  %v1479 = vpop.f32.mrf.mxu0
  %v1480 = vadd.f32 0.0, %v1479
  %v1481 = vpop.f32.mrf.mxu0
  %v1482 = vadd.f32 0.0, %v1481
  %v1483 = vpop.f32.mrf.mxu0
  %v1484 = vadd.f32 0.0, %v1483
  %v1485 = vpop.f32.mrf.mxu0
  %v1486 = vadd.f32 0.0, %v1485
  %1487 = vmatprep.mubr.bf16.mxu0 0
  %1488 = vmatmul.mubr.bf16.gmra.mxu0 %v280
  %v1489 = vpop.f32.mrf.mxu0
  %v1490 = vadd.f32 0.0, %v1489
  %v1491 = vpop.f32.mrf.mxu0
  %v1492 = vadd.f32 0.0, %v1491
  %v1493 = vpop.f32.mrf.mxu0
  %v1494 = vadd.f32 0.0, %v1493
  %v1495 = vpop.f32.mrf.mxu0
  %v1496 = vadd.f32 0.0, %v1495
  %1497 = vmatprep.mubr.bf16.mxu0 0
  %1498 = vmatmul.mubr.bf16.gmra.mxu0 %v281
  %v1499 = vpop.f32.mrf.mxu0
  %v1500 = vadd.f32 0.0, %v1499
  %v1501 = vpop.f32.mrf.mxu0
  %v1502 = vadd.f32 0.0, %v1501
  %v1503 = vpop.f32.mrf.mxu0
  %v1504 = vadd.f32 0.0, %v1503
  %v1505 = vpop.f32.mrf.mxu0
  %v1506 = vadd.f32 0.0, %v1505
  %1507 = vmatprep.mubr.bf16.mxu0 0
  %1508 = vmatmul.mubr.bf16.gmra.mxu0 %v1123
  %v1509 = vpop.f32.mrf.mxu0
  %v1510 = vadd.f32 0.0, %v1509
  %v1511 = vpop.f32.mrf.mxu0
  %v1512 = vadd.f32 0.0, %v1511
  %v1513 = vpop.f32.mrf.mxu0
  %v1514 = vadd.f32 0.0, %v1513
  %v1515 = vpop.f32.mrf.mxu0
  %v1516 = vadd.f32 0.0, %v1515
  %1517 = vdwg.mxu0
  %v1518 = vadd.f32 %v824, %v1240
  %v1519 = vadd.f32 %v826, %v1242
  %v1520 = vadd.f32 %v828, %v1244
  %v1521 = vadd.f32 %v830, %v1246
  %v1522 = vadd.f32 %v834, %v1250
  %v1523 = vadd.f32 %v836, %v1252
  %v1524 = vadd.f32 %v838, %v1254
  %v1525 = vadd.f32 %v840, %v1256
  %v1526 = vadd.f32 %v844, %v1260
  %v1527 = vadd.f32 %v846, %v1262
  %v1528 = vadd.f32 %v848, %v1264
  %v1529 = vadd.f32 %v850, %v1266
  %v1530 = vadd.f32 %v854, %v1270
  %v1531 = vadd.f32 %v856, %v1272
  %v1532 = vadd.f32 %v858, %v1274
  %v1533 = vadd.f32 %v860, %v1276
  %v1534 = vadd.f32 %v864, %v1280
  %v1535 = vadd.f32 %v866, %v1282
  %v1536 = vadd.f32 %v868, %v1284
  %v1537 = vadd.f32 %v870, %v1286
  %v1538 = vadd.f32 %v874, %v1290
  %v1539 = vadd.f32 %v876, %v1292
  %v1540 = vadd.f32 %v878, %v1294
  %v1541 = vadd.f32 %v880, %v1296
  %v1542 = vadd.f32 %v884, %v1300
  %v1543 = vadd.f32 %v886, %v1302
  %v1544 = vadd.f32 %v888, %v1304
  %v1545 = vadd.f32 %v890, %v1306
  %v1546 = vadd.f32 %v894, %v1310
  %v1547 = vadd.f32 %v896, %v1312
  %v1548 = vadd.f32 %v898, %v1314
  %v1549 = vadd.f32 %v900, %v1316
  %v1550 = vadd.f32 %v904, %v1320
  %v1551 = vadd.f32 %v906, %v1322
  %v1552 = vadd.f32 %v908, %v1324
  %v1553 = vadd.f32 %v910, %v1326
  %v1554 = vadd.f32 %v914, %v1330
  %v1555 = vadd.f32 %v916, %v1332
  %v1556 = vadd.f32 %v918, %v1334
  %v1557 = vadd.f32 %v920, %v1336
  %v1558 = vadd.f32 %v924, %v1340
  %v1559 = vadd.f32 %v926, %v1342
  %v1560 = vadd.f32 %v928, %v1344
  %v1561 = vadd.f32 %v930, %v1346
  %v1562 = vadd.f32 %v934, %v1350
  %v1563 = vadd.f32 %v936, %v1352
  %v1564 = vadd.f32 %v938, %v1354
  %v1565 = vadd.f32 %v940, %v1356
  %v1566 = vadd.f32 %v944, %v1360
  %v1567 = vadd.f32 %v946, %v1362
  %v1568 = vadd.f32 %v948, %v1364
  %v1569 = vadd.f32 %v950, %v1366
  %v1570 = vadd.f32 %v954, %v1370
  %v1571 = vadd.f32 %v956, %v1372
  %v1572 = vadd.f32 %v958, %v1374
  %v1573 = vadd.f32 %v960, %v1376
  %v1574 = vadd.f32 %v964, %v1380
  %v1575 = vadd.f32 %v966, %v1382
  %v1576 = vadd.f32 %v968, %v1384
  %v1577 = vadd.f32 %v970, %v1386
  %v1578 = vadd.f32 %v974, %v1390
  %v1579 = vadd.f32 %v976, %v1392
  %v1580 = vadd.f32 %v978, %v1394
  %v1581 = vadd.f32 %v980, %v1396
  %v1582 = vadd.f32 %v984, %v1400
  %v1583 = vadd.f32 %v986, %v1402
  %v1584 = vadd.f32 %v988, %v1404
  %v1585 = vadd.f32 %v990, %v1406
  %v1586 = vadd.f32 %v994, %v1410
  %v1587 = vadd.f32 %v996, %v1412
  %v1588 = vadd.f32 %v998, %v1414
  %v1589 = vadd.f32 %v1000, %v1416
  %v1590 = vadd.f32 %v1004, %v1420
  %v1591 = vadd.f32 %v1006, %v1422
  %v1592 = vadd.f32 %v1008, %v1424
  %v1593 = vadd.f32 %v1010, %v1426
  %v1594 = vadd.f32 %v1014, %v1430
  %v1595 = vadd.f32 %v1016, %v1432
  %v1596 = vadd.f32 %v1018, %v1434
  %v1597 = vadd.f32 %v1020, %v1436
  %v1598 = vadd.f32 %v1024, %v1440
  %v1599 = vadd.f32 %v1026, %v1442
  %v1600 = vadd.f32 %v1028, %v1444
  %v1601 = vadd.f32 %v1030, %v1446
  %v1602 = vadd.f32 %v1034, %v1450
  %v1603 = vadd.f32 %v1036, %v1452
  %v1604 = vadd.f32 %v1038, %v1454
  %v1605 = vadd.f32 %v1040, %v1456
  %v1606 = vadd.f32 %v1044, %v1460
  %v1607 = vadd.f32 %v1046, %v1462
  %v1608 = vadd.f32 %v1048, %v1464
  %v1609 = vadd.f32 %v1050, %v1466
  %v1610 = vadd.f32 %v1054, %v1470
  %v1611 = vadd.f32 %v1056, %v1472
  %v1612 = vadd.f32 %v1058, %v1474
  %v1613 = vadd.f32 %v1060, %v1476
  %v1614 = vadd.f32 %v1064, %v1480
  %v1615 = vadd.f32 %v1066, %v1482
  %v1616 = vadd.f32 %v1068, %v1484
  %v1617 = vadd.f32 %v1070, %v1486
  %v1618 = vadd.f32 %v1074, %v1490
  %v1619 = vadd.f32 %v1076, %v1492
  %v1620 = vadd.f32 %v1078, %v1494
  %v1621 = vadd.f32 %v1080, %v1496
  %v1622 = vadd.f32 %v1084, %v1500
  %v1623 = vadd.f32 %v1086, %v1502
  %v1624 = vadd.f32 %v1088, %v1504
  %v1625 = vadd.f32 %v1090, %v1506
  %v1626 = vadd.f32 %v1094, %v1510
  %v1627 = vadd.f32 %v1096, %v1512
  %v1628 = vadd.f32 %v1098, %v1514
  %v1629 = vadd.f32 %v1100, %v1516
  %s1630 = scalar_lea.vmem %s1, 384
  %v1631 = vld [vmem:[%s1630] sm:$0xff]
  %v1632 = vld [vmem:[%s1630 + $0x8] sm:$0xff]
  %v1633 = vld [vmem:[%s1630 + $0x10] sm:$0xff]
  %v1634 = vld [vmem:[%s1630 + $0x18] sm:$0xff]
  %v1635 = vld [vmem:[%s1630 + $0x20] sm:$0xff]
  %v1636 = vld [vmem:[%s1630 + $0x28] sm:$0xff]
  %v1637 = vld [vmem:[%s1630 + $0x30] sm:$0xff]
  %v1638 = vld [vmem:[%s1630 + $0x38] sm:$0xff]
  %v1639 = vld [vmem:[%s1630 + $0x40] sm:$0xff]
  %v1640 = vld [vmem:[%s1630 + $0x48] sm:$0xff]
  %v1641 = vld [vmem:[%s1630 + $0x50] sm:$0xff]
  %v1642 = vld [vmem:[%s1630 + $0x58] sm:$0xff]
  %v1643 = vld [vmem:[%s1630 + $0x60] sm:$0xff]
  %v1644 = vld [vmem:[%s1630 + $0x68] sm:$0xff]
  %v1645 = vld [vmem:[%s1630 + $0x70] sm:$0xff]
  %v1646 = vld [vmem:[%s1630 + $0x78] sm:$0xff]
  %v1649 = vunpack.c.l.b16 %v105
  %v1650 = vunpack.c.l.b16 %v106
  %v1651 = vpack.c.b16 %v1650, %v1649
  %v1669 = vunpack.c.l.b16 %v1631
  %v1670 = vunpack.c.h.b16 %v1631
  %v1671 = vunpack.c.l.b16 %v1632
  %v1672 = vunpack.c.h.b16 %v1632
  %v1673 = vunpack.c.l.b16 %v1633
  %v1674 = vunpack.c.h.b16 %v1633
  %v1675 = vunpack.c.l.b16 %v1634
  %v1676 = vunpack.c.h.b16 %v1634
  %v1677 = vunpack.c.l.b16 %v1635
  %v1678 = vunpack.c.h.b16 %v1635
  %v1679 = vunpack.c.l.b16 %v1636
  %v1680 = vunpack.c.h.b16 %v1636
  %v1681 = vunpack.c.l.b16 %v1637
  %v1682 = vunpack.c.h.b16 %v1637
  %v1683 = vunpack.c.l.b16 %v1638
  %v1684 = vunpack.c.h.b16 %v1638
  %v1685 = vunpack.c.l.b16 %v1639
  %v1686 = vunpack.c.h.b16 %v1639
  %v1687 = vunpack.c.l.b16 %v1640
  %v1688 = vunpack.c.h.b16 %v1640
  %v1689 = vunpack.c.l.b16 %v1641
  %v1690 = vunpack.c.h.b16 %v1641
  %v1691 = vunpack.c.l.b16 %v1642
  %v1692 = vunpack.c.h.b16 %v1642
  %v1693 = vunpack.c.l.b16 %v1643
  %v1694 = vunpack.c.h.b16 %v1643
  %v1695 = vunpack.c.l.b16 %v1644
  %v1696 = vunpack.c.h.b16 %v1644
  %v1697 = vunpack.c.l.b16 %v1645
  %v1698 = vunpack.c.h.b16 %v1645
  %v1699 = vunpack.c.l.b16 %v1646
  %v1700 = vunpack.c.h.b16 %v1646
  %v1701 = vpack.c.b16 %v1671, %v1669
  %v1702 = vpack.c.b16 %v1672, %v1670
  %v1703 = vpack.c.b16 %v1675, %v1673
  %v1704 = vpack.c.b16 %v1676, %v1674
  %v1705 = vpack.c.b16 %v1679, %v1677
  %v1706 = vpack.c.b16 %v1680, %v1678
  %v1707 = vpack.c.b16 %v1683, %v1681
  %v1708 = vpack.c.b16 %v1684, %v1682
  %v1709 = vpack.c.b16 %v1687, %v1685
  %v1710 = vpack.c.b16 %v1688, %v1686
  %v1711 = vpack.c.b16 %v1691, %v1689
  %v1712 = vpack.c.b16 %v1692, %v1690
  %v1713 = vpack.c.b16 %v1695, %v1693
  %v1714 = vpack.c.b16 %v1696, %v1694
  %v1715 = vpack.c.b16 %v1699, %v1697
  %v1716 = vpack.c.b16 %v1700, %v1698
  %1733 = vmatprep.subr.bf16.mxu0 %v1716
  %1734 = vmatpush1.bf16.msra.mxu0 %v1715
  %1735 = vmatprep.subr.bf16.mxu0 %v1714
  %1736 = vmatpush1.bf16.msra.mxu0 %v1713
  %1737 = vmatprep.subr.bf16.mxu0 %v1712
  %1738 = vmatpush1.bf16.msra.mxu0 %v1711
  %1739 = vmatprep.subr.bf16.mxu0 %v1710
  %1740 = vmatpush1.bf16.msra.mxu0 %v1709
  %1741 = vmatprep.subr.bf16.mxu0 %v1708
  %1742 = vmatpush1.bf16.msra.mxu0 %v1707
  %1743 = vmatprep.subr.bf16.mxu0 %v1706
  %1744 = vmatpush1.bf16.msra.mxu0 %v1705
  %1745 = vmatprep.subr.bf16.mxu0 %v1704
  %1746 = vmatpush1.bf16.msra.mxu0 %v1703
  %1747 = vmatprep.subr.bf16.mxu0 %v1702
  %1748 = vmatpush1.bf16.msra.mxu0 %v1701
  %1749 = vmatprep.subr.bf16.mxu0 0
  %1750 = vmatpush2.bf16.msra.mxu0 0
  %1751 = vmatprep.subr.bf16.mxu0 0
  %1752 = vmatpush2.bf16.msra.mxu0 0
  %1753 = vmatprep.subr.bf16.mxu0 0
  %1754 = vmatpush2.bf16.msra.mxu0 0
  %1755 = vmatprep.subr.bf16.mxu0 0
  %1756 = vmatpush2.bf16.msra.mxu0 0
  %1757 = vmatprep.subr.bf16.mxu0 0
  %1758 = vmatpush2.bf16.msra.mxu0 0
  %1759 = vmatprep.subr.bf16.mxu0 0
  %1760 = vmatpush2.bf16.msra.mxu0 0
  %1761 = vmatprep.subr.bf16.mxu0 0
  %1762 = vmatpush2.bf16.msra.mxu0 0
  %1763 = vmatprep.subr.bf16.mxu0 0
  %1764 = vmatpush2.bf16.msra.mxu0 0
  %1765 = vmatprep.mubr.bf16.mxu0 0
  %1766 = vmatmul.mubr.bf16.gmra.mxu0 %v256
  %v1767 = vpop.f32.mrf.mxu0
  %v1768 = vadd.f32 0.0, %v1767
  %v1769 = vpop.f32.mrf.mxu0
  %v1770 = vadd.f32 0.0, %v1769
  %v1771 = vpop.f32.mrf.mxu0
  %v1772 = vadd.f32 0.0, %v1771
  %v1773 = vpop.f32.mrf.mxu0
  %v1774 = vadd.f32 0.0, %v1773
  %1775 = vmatprep.mubr.bf16.mxu0 0
  %1776 = vmatmul.mubr.bf16.gmra.mxu0 %v257
  %v1777 = vpop.f32.mrf.mxu0
  %v1778 = vadd.f32 0.0, %v1777
  %v1779 = vpop.f32.mrf.mxu0
  %v1780 = vadd.f32 0.0, %v1779
  %v1781 = vpop.f32.mrf.mxu0
  %v1782 = vadd.f32 0.0, %v1781
  %v1783 = vpop.f32.mrf.mxu0
  %v1784 = vadd.f32 0.0, %v1783
  %1785 = vmatprep.mubr.bf16.mxu0 0
  %1786 = vmatmul.mubr.bf16.gmra.mxu0 %v258
  %v1787 = vpop.f32.mrf.mxu0
  %v1788 = vadd.f32 0.0, %v1787
  %v1789 = vpop.f32.mrf.mxu0
  %v1790 = vadd.f32 0.0, %v1789
  %v1791 = vpop.f32.mrf.mxu0
  %v1792 = vadd.f32 0.0, %v1791
  %v1793 = vpop.f32.mrf.mxu0
  %v1794 = vadd.f32 0.0, %v1793
  %1795 = vmatprep.mubr.bf16.mxu0 0
  %1796 = vmatmul.mubr.bf16.gmra.mxu0 %v259
  %v1797 = vpop.f32.mrf.mxu0
  %v1798 = vadd.f32 0.0, %v1797
  %v1799 = vpop.f32.mrf.mxu0
  %v1800 = vadd.f32 0.0, %v1799
  %v1801 = vpop.f32.mrf.mxu0
  %v1802 = vadd.f32 0.0, %v1801
  %v1803 = vpop.f32.mrf.mxu0
  %v1804 = vadd.f32 0.0, %v1803
  %1805 = vmatprep.mubr.bf16.mxu0 0
  %1806 = vmatmul.mubr.bf16.gmra.mxu0 %v260
  %v1807 = vpop.f32.mrf.mxu0
  %v1808 = vadd.f32 0.0, %v1807
  %v1809 = vpop.f32.mrf.mxu0
  %v1810 = vadd.f32 0.0, %v1809
  %v1811 = vpop.f32.mrf.mxu0
  %v1812 = vadd.f32 0.0, %v1811
  %v1813 = vpop.f32.mrf.mxu0
  %v1814 = vadd.f32 0.0, %v1813
  %1815 = vmatprep.mubr.bf16.mxu0 0
  %1816 = vmatmul.mubr.bf16.gmra.mxu0 %v261
  %v1817 = vpop.f32.mrf.mxu0
  %v1818 = vadd.f32 0.0, %v1817
  %v1819 = vpop.f32.mrf.mxu0
  %v1820 = vadd.f32 0.0, %v1819
  %v1821 = vpop.f32.mrf.mxu0
  %v1822 = vadd.f32 0.0, %v1821
  %v1823 = vpop.f32.mrf.mxu0
  %v1824 = vadd.f32 0.0, %v1823
  %1825 = vmatprep.mubr.bf16.mxu0 0
  %1826 = vmatmul.mubr.bf16.gmra.mxu0 %v262
  %v1827 = vpop.f32.mrf.mxu0
  %v1828 = vadd.f32 0.0, %v1827
  %v1829 = vpop.f32.mrf.mxu0
  %v1830 = vadd.f32 0.0, %v1829
  %v1831 = vpop.f32.mrf.mxu0
  %v1832 = vadd.f32 0.0, %v1831
  %v1833 = vpop.f32.mrf.mxu0
  %v1834 = vadd.f32 0.0, %v1833
  %1835 = vmatprep.mubr.bf16.mxu0 0
  %1836 = vmatmul.mubr.bf16.gmra.mxu0 %v263
  %v1837 = vpop.f32.mrf.mxu0
  %v1838 = vadd.f32 0.0, %v1837
  %v1839 = vpop.f32.mrf.mxu0
  %v1840 = vadd.f32 0.0, %v1839
  %v1841 = vpop.f32.mrf.mxu0
  %v1842 = vadd.f32 0.0, %v1841
  %v1843 = vpop.f32.mrf.mxu0
  %v1844 = vadd.f32 0.0, %v1843
  %1845 = vmatprep.mubr.bf16.mxu0 0
  %1846 = vmatmul.mubr.bf16.gmra.mxu0 %v264
  %v1847 = vpop.f32.mrf.mxu0
  %v1848 = vadd.f32 0.0, %v1847
  %v1849 = vpop.f32.mrf.mxu0
  %v1850 = vadd.f32 0.0, %v1849
  %v1851 = vpop.f32.mrf.mxu0
  %v1852 = vadd.f32 0.0, %v1851
  %v1853 = vpop.f32.mrf.mxu0
  %v1854 = vadd.f32 0.0, %v1853
  %1855 = vmatprep.mubr.bf16.mxu0 0
  %1856 = vmatmul.mubr.bf16.gmra.mxu0 %v265
  %v1857 = vpop.f32.mrf.mxu0
  %v1858 = vadd.f32 0.0, %v1857
  %v1859 = vpop.f32.mrf.mxu0
  %v1860 = vadd.f32 0.0, %v1859
  %v1861 = vpop.f32.mrf.mxu0
  %v1862 = vadd.f32 0.0, %v1861
  %v1863 = vpop.f32.mrf.mxu0
  %v1864 = vadd.f32 0.0, %v1863
  %1865 = vmatprep.mubr.bf16.mxu0 0
  %1866 = vmatmul.mubr.bf16.gmra.mxu0 %v266
  %v1867 = vpop.f32.mrf.mxu0
  %v1868 = vadd.f32 0.0, %v1867
  %v1869 = vpop.f32.mrf.mxu0
  %v1870 = vadd.f32 0.0, %v1869
  %v1871 = vpop.f32.mrf.mxu0
  %v1872 = vadd.f32 0.0, %v1871
  %v1873 = vpop.f32.mrf.mxu0
  %v1874 = vadd.f32 0.0, %v1873
  %1875 = vmatprep.mubr.bf16.mxu0 0
  %1876 = vmatmul.mubr.bf16.gmra.mxu0 %v267
  %v1877 = vpop.f32.mrf.mxu0
  %v1878 = vadd.f32 0.0, %v1877
  %v1879 = vpop.f32.mrf.mxu0
  %v1880 = vadd.f32 0.0, %v1879
  %v1881 = vpop.f32.mrf.mxu0
  %v1882 = vadd.f32 0.0, %v1881
  %v1883 = vpop.f32.mrf.mxu0
  %v1884 = vadd.f32 0.0, %v1883
  %1885 = vmatprep.mubr.bf16.mxu0 0
  %1886 = vmatmul.mubr.bf16.gmra.mxu0 %v268
  %v1887 = vpop.f32.mrf.mxu0
  %v1888 = vadd.f32 0.0, %v1887
  %v1889 = vpop.f32.mrf.mxu0
  %v1890 = vadd.f32 0.0, %v1889
  %v1891 = vpop.f32.mrf.mxu0
  %v1892 = vadd.f32 0.0, %v1891
  %v1893 = vpop.f32.mrf.mxu0
  %v1894 = vadd.f32 0.0, %v1893
  %1895 = vmatprep.mubr.bf16.mxu0 0
  %1896 = vmatmul.mubr.bf16.gmra.mxu0 %v269
  %v1897 = vpop.f32.mrf.mxu0
  %v1898 = vadd.f32 0.0, %v1897
  %v1899 = vpop.f32.mrf.mxu0
  %v1900 = vadd.f32 0.0, %v1899
  %v1901 = vpop.f32.mrf.mxu0
  %v1902 = vadd.f32 0.0, %v1901
  %v1903 = vpop.f32.mrf.mxu0
  %v1904 = vadd.f32 0.0, %v1903
  %1905 = vmatprep.mubr.bf16.mxu0 0
  %1906 = vmatmul.mubr.bf16.gmra.mxu0 %v270
  %v1907 = vpop.f32.mrf.mxu0
  %v1908 = vadd.f32 0.0, %v1907
  %v1909 = vpop.f32.mrf.mxu0
  %v1910 = vadd.f32 0.0, %v1909
  %v1911 = vpop.f32.mrf.mxu0
  %v1912 = vadd.f32 0.0, %v1911
  %v1913 = vpop.f32.mrf.mxu0
  %v1914 = vadd.f32 0.0, %v1913
  %1915 = vmatprep.mubr.bf16.mxu0 0
  %1916 = vmatmul.mubr.bf16.gmra.mxu0 %v271
  %v1917 = vpop.f32.mrf.mxu0
  %v1918 = vadd.f32 0.0, %v1917
  %v1919 = vpop.f32.mrf.mxu0
  %v1920 = vadd.f32 0.0, %v1919
  %v1921 = vpop.f32.mrf.mxu0
  %v1922 = vadd.f32 0.0, %v1921
  %v1923 = vpop.f32.mrf.mxu0
  %v1924 = vadd.f32 0.0, %v1923
  %1925 = vmatprep.mubr.bf16.mxu0 0
  %1926 = vmatmul.mubr.bf16.gmra.mxu0 %v272
  %v1927 = vpop.f32.mrf.mxu0
  %v1928 = vadd.f32 0.0, %v1927
  %v1929 = vpop.f32.mrf.mxu0
  %v1930 = vadd.f32 0.0, %v1929
  %v1931 = vpop.f32.mrf.mxu0
  %v1932 = vadd.f32 0.0, %v1931
  %v1933 = vpop.f32.mrf.mxu0
  %v1934 = vadd.f32 0.0, %v1933
  %1935 = vmatprep.mubr.bf16.mxu0 0
  %1936 = vmatmul.mubr.bf16.gmra.mxu0 %v273
  %v1937 = vpop.f32.mrf.mxu0
  %v1938 = vadd.f32 0.0, %v1937
  %v1939 = vpop.f32.mrf.mxu0
  %v1940 = vadd.f32 0.0, %v1939
  %v1941 = vpop.f32.mrf.mxu0
  %v1942 = vadd.f32 0.0, %v1941
  %v1943 = vpop.f32.mrf.mxu0
  %v1944 = vadd.f32 0.0, %v1943
  %1945 = vmatprep.mubr.bf16.mxu0 0
  %1946 = vmatmul.mubr.bf16.gmra.mxu0 %v274
  %v1947 = vpop.f32.mrf.mxu0
  %v1948 = vadd.f32 0.0, %v1947
  %v1949 = vpop.f32.mrf.mxu0
  %v1950 = vadd.f32 0.0, %v1949
  %v1951 = vpop.f32.mrf.mxu0
  %v1952 = vadd.f32 0.0, %v1951
  %v1953 = vpop.f32.mrf.mxu0
  %v1954 = vadd.f32 0.0, %v1953
  %1955 = vmatprep.mubr.bf16.mxu0 0
  %1956 = vmatmul.mubr.bf16.gmra.mxu0 %v275
  %v1957 = vpop.f32.mrf.mxu0
  %v1958 = vadd.f32 0.0, %v1957
  %v1959 = vpop.f32.mrf.mxu0
  %v1960 = vadd.f32 0.0, %v1959
  %v1961 = vpop.f32.mrf.mxu0
  %v1962 = vadd.f32 0.0, %v1961
  %v1963 = vpop.f32.mrf.mxu0
  %v1964 = vadd.f32 0.0, %v1963
  %1965 = vmatprep.mubr.bf16.mxu0 0
  %1966 = vmatmul.mubr.bf16.gmra.mxu0 %v276
  %v1967 = vpop.f32.mrf.mxu0
  %v1968 = vadd.f32 0.0, %v1967
  %v1969 = vpop.f32.mrf.mxu0
  %v1970 = vadd.f32 0.0, %v1969
  %v1971 = vpop.f32.mrf.mxu0
  %v1972 = vadd.f32 0.0, %v1971
  %v1973 = vpop.f32.mrf.mxu0
  %v1974 = vadd.f32 0.0, %v1973
  %1975 = vmatprep.mubr.bf16.mxu0 0
  %1976 = vmatmul.mubr.bf16.gmra.mxu0 %v277
  %v1977 = vpop.f32.mrf.mxu0
  %v1978 = vadd.f32 0.0, %v1977
  %v1979 = vpop.f32.mrf.mxu0
  %v1980 = vadd.f32 0.0, %v1979
  %v1981 = vpop.f32.mrf.mxu0
  %v1982 = vadd.f32 0.0, %v1981
  %v1983 = vpop.f32.mrf.mxu0
  %v1984 = vadd.f32 0.0, %v1983
  %1985 = vmatprep.mubr.bf16.mxu0 0
  %1986 = vmatmul.mubr.bf16.gmra.mxu0 %v278
  %v1987 = vpop.f32.mrf.mxu0
  %v1988 = vadd.f32 0.0, %v1987
  %v1989 = vpop.f32.mrf.mxu0
  %v1990 = vadd.f32 0.0, %v1989
  %v1991 = vpop.f32.mrf.mxu0
  %v1992 = vadd.f32 0.0, %v1991
  %v1993 = vpop.f32.mrf.mxu0
  %v1994 = vadd.f32 0.0, %v1993
  %1995 = vmatprep.mubr.bf16.mxu0 0
  %1996 = vmatmul.mubr.bf16.gmra.mxu0 %v279
  %v1997 = vpop.f32.mrf.mxu0
  %v1998 = vadd.f32 0.0, %v1997
  %v1999 = vpop.f32.mrf.mxu0
  %v2000 = vadd.f32 0.0, %v1999
  %v2001 = vpop.f32.mrf.mxu0
  %v2002 = vadd.f32 0.0, %v2001
  %v2003 = vpop.f32.mrf.mxu0
  %v2004 = vadd.f32 0.0, %v2003
  %2005 = vmatprep.mubr.bf16.mxu0 0
  %2006 = vmatmul.mubr.bf16.gmra.mxu0 %v280
  %v2007 = vpop.f32.mrf.mxu0
  %v2008 = vadd.f32 0.0, %v2007
  %v2009 = vpop.f32.mrf.mxu0
  %v2010 = vadd.f32 0.0, %v2009
  %v2011 = vpop.f32.mrf.mxu0
  %v2012 = vadd.f32 0.0, %v2011
  %v2013 = vpop.f32.mrf.mxu0
  %v2014 = vadd.f32 0.0, %v2013
  %2015 = vmatprep.mubr.bf16.mxu0 0
  %2016 = vmatmul.mubr.bf16.gmra.mxu0 %v281
  %v2017 = vpop.f32.mrf.mxu0
  %v2018 = vadd.f32 0.0, %v2017
  %v2019 = vpop.f32.mrf.mxu0
  %v2020 = vadd.f32 0.0, %v2019
  %v2021 = vpop.f32.mrf.mxu0
  %v2022 = vadd.f32 0.0, %v2021
  %v2023 = vpop.f32.mrf.mxu0
  %v2024 = vadd.f32 0.0, %v2023
  %2025 = vmatprep.mubr.bf16.mxu0 0
  %2026 = vmatmul.mubr.bf16.gmra.mxu0 %v1123
  %v2027 = vpop.f32.mrf.mxu0
  %v2028 = vadd.f32 0.0, %v2027
  %v2029 = vpop.f32.mrf.mxu0
  %v2030 = vadd.f32 0.0, %v2029
  %v2031 = vpop.f32.mrf.mxu0
  %v2032 = vadd.f32 0.0, %v2031
  %v2033 = vpop.f32.mrf.mxu0
  %v2034 = vadd.f32 0.0, %v2033
  %2035 = vmatprep.mubr.bf16.mxu0 0
  %2036 = vmatmul.mubr.bf16.gmra.mxu0 %v1651
  %v2037 = vpop.f32.mrf.mxu0
  %v2038 = vadd.f32 0.0, %v2037
  %v2039 = vpop.f32.mrf.mxu0
  %v2040 = vadd.f32 0.0, %v2039
  %v2041 = vpop.f32.mrf.mxu0
  %v2042 = vadd.f32 0.0, %v2041
  %v2043 = vpop.f32.mrf.mxu0
  %v2044 = vadd.f32 0.0, %v2043
  %2045 = vdwg.mxu0
  %v2046 = vadd.f32 %v1518, %v1768
  %v2047 = vadd.f32 %v1519, %v1770
  %v2048 = vadd.f32 %v1520, %v1772
  %v2049 = vadd.f32 %v1521, %v1774
  %v2050 = vadd.f32 %v1522, %v1778
  %v2051 = vadd.f32 %v1523, %v1780
  %v2052 = vadd.f32 %v1524, %v1782
  %v2053 = vadd.f32 %v1525, %v1784
  %v2054 = vadd.f32 %v1526, %v1788
  %v2055 = vadd.f32 %v1527, %v1790
  %v2056 = vadd.f32 %v1528, %v1792
  %v2057 = vadd.f32 %v1529, %v1794
  %v2058 = vadd.f32 %v1530, %v1798
  %v2059 = vadd.f32 %v1531, %v1800
  %v2060 = vadd.f32 %v1532, %v1802
  %v2061 = vadd.f32 %v1533, %v1804
  %v2062 = vadd.f32 %v1534, %v1808
  %v2063 = vadd.f32 %v1535, %v1810
  %v2064 = vadd.f32 %v1536, %v1812
  %v2065 = vadd.f32 %v1537, %v1814
  %v2066 = vadd.f32 %v1538, %v1818
  %v2067 = vadd.f32 %v1539, %v1820
  %v2068 = vadd.f32 %v1540, %v1822
  %v2069 = vadd.f32 %v1541, %v1824
  %v2070 = vadd.f32 %v1542, %v1828
  %v2071 = vadd.f32 %v1543, %v1830
  %v2072 = vadd.f32 %v1544, %v1832
  %v2073 = vadd.f32 %v1545, %v1834
  %v2074 = vadd.f32 %v1546, %v1838
  %v2075 = vadd.f32 %v1547, %v1840
  %v2076 = vadd.f32 %v1548, %v1842
  %v2077 = vadd.f32 %v1549, %v1844
  %v2078 = vadd.f32 %v1550, %v1848
  %v2079 = vadd.f32 %v1551, %v1850
  %v2080 = vadd.f32 %v1552, %v1852
  %v2081 = vadd.f32 %v1553, %v1854
  %v2082 = vadd.f32 %v1554, %v1858
  %v2083 = vadd.f32 %v1555, %v1860
  %v2084 = vadd.f32 %v1556, %v1862
  %v2085 = vadd.f32 %v1557, %v1864
  %v2086 = vadd.f32 %v1558, %v1868
  %v2087 = vadd.f32 %v1559, %v1870
  %v2088 = vadd.f32 %v1560, %v1872
  %v2089 = vadd.f32 %v1561, %v1874
  %v2090 = vadd.f32 %v1562, %v1878
  %v2091 = vadd.f32 %v1563, %v1880
  %v2092 = vadd.f32 %v1564, %v1882
  %v2093 = vadd.f32 %v1565, %v1884
  %v2094 = vadd.f32 %v1566, %v1888
  %v2095 = vadd.f32 %v1567, %v1890
  %v2096 = vadd.f32 %v1568, %v1892
  %v2097 = vadd.f32 %v1569, %v1894
  %v2098 = vadd.f32 %v1570, %v1898
  %v2099 = vadd.f32 %v1571, %v1900
  %v2100 = vadd.f32 %v1572, %v1902
  %v2101 = vadd.f32 %v1573, %v1904
  %v2102 = vadd.f32 %v1574, %v1908
  %v2103 = vadd.f32 %v1575, %v1910
  %v2104 = vadd.f32 %v1576, %v1912
  %v2105 = vadd.f32 %v1577, %v1914
  %v2106 = vadd.f32 %v1578, %v1918
  %v2107 = vadd.f32 %v1579, %v1920
  %v2108 = vadd.f32 %v1580, %v1922
  %v2109 = vadd.f32 %v1581, %v1924
  %v2110 = vadd.f32 %v1582, %v1928
  %v2111 = vadd.f32 %v1583, %v1930
  %v2112 = vadd.f32 %v1584, %v1932
  %v2113 = vadd.f32 %v1585, %v1934
  %v2114 = vadd.f32 %v1586, %v1938
  %v2115 = vadd.f32 %v1587, %v1940
  %v2116 = vadd.f32 %v1588, %v1942
  %v2117 = vadd.f32 %v1589, %v1944
  %v2118 = vadd.f32 %v1590, %v1948
  %v2119 = vadd.f32 %v1591, %v1950
  %v2120 = vadd.f32 %v1592, %v1952
  %v2121 = vadd.f32 %v1593, %v1954
  %v2122 = vadd.f32 %v1594, %v1958
  %v2123 = vadd.f32 %v1595, %v1960
  %v2124 = vadd.f32 %v1596, %v1962
  %v2125 = vadd.f32 %v1597, %v1964
  %v2126 = vadd.f32 %v1598, %v1968
  %v2127 = vadd.f32 %v1599, %v1970
  %v2128 = vadd.f32 %v1600, %v1972
  %v2129 = vadd.f32 %v1601, %v1974
  %v2130 = vadd.f32 %v1602, %v1978
  %v2131 = vadd.f32 %v1603, %v1980
  %v2132 = vadd.f32 %v1604, %v1982
  %v2133 = vadd.f32 %v1605, %v1984
  %v2134 = vadd.f32 %v1606, %v1988
  %v2135 = vadd.f32 %v1607, %v1990
  %v2136 = vadd.f32 %v1608, %v1992
  %v2137 = vadd.f32 %v1609, %v1994
  %v2138 = vadd.f32 %v1610, %v1998
  %v2139 = vadd.f32 %v1611, %v2000
  %v2140 = vadd.f32 %v1612, %v2002
  %v2141 = vadd.f32 %v1613, %v2004
  %v2142 = vadd.f32 %v1614, %v2008
  %v2143 = vadd.f32 %v1615, %v2010
  %v2144 = vadd.f32 %v1616, %v2012
  %v2145 = vadd.f32 %v1617, %v2014
  %v2146 = vadd.f32 %v1618, %v2018
  %v2147 = vadd.f32 %v1619, %v2020
  %v2148 = vadd.f32 %v1620, %v2022
  %v2149 = vadd.f32 %v1621, %v2024
  %v2150 = vadd.f32 %v1622, %v2028
  %v2151 = vadd.f32 %v1623, %v2030
  %v2152 = vadd.f32 %v1624, %v2032
  %v2153 = vadd.f32 %v1625, %v2034
  %v2154 = vadd.f32 %v1626, %v2038
  %v2155 = vadd.f32 %v1627, %v2040
  %v2156 = vadd.f32 %v1628, %v2042
  %v2157 = vadd.f32 %v1629, %v2044
  %s2158 = scalar_lea.vmem %s1, 512
  %v2159 = vld [vmem:[%s2158] sm:$0xff]
  %v2160 = vld [vmem:[%s2158 + $0x8] sm:$0xff]
  %v2161 = vld [vmem:[%s2158 + $0x10] sm:$0xff]
  %v2162 = vld [vmem:[%s2158 + $0x18] sm:$0xff]
  %v2163 = vld [vmem:[%s2158 + $0x20] sm:$0xff]
  %v2164 = vld [vmem:[%s2158 + $0x28] sm:$0xff]
  %v2165 = vld [vmem:[%s2158 + $0x30] sm:$0xff]
  %v2166 = vld [vmem:[%s2158 + $0x38] sm:$0xff]
  %v2167 = vld [vmem:[%s2158 + $0x40] sm:$0xff]
  %v2168 = vld [vmem:[%s2158 + $0x48] sm:$0xff]
  %v2169 = vld [vmem:[%s2158 + $0x50] sm:$0xff]
  %v2170 = vld [vmem:[%s2158 + $0x58] sm:$0xff]
  %v2171 = vld [vmem:[%s2158 + $0x60] sm:$0xff]
  %v2172 = vld [vmem:[%s2158 + $0x68] sm:$0xff]
  %v2173 = vld [vmem:[%s2158 + $0x70] sm:$0xff]
  %v2174 = vld [vmem:[%s2158 + $0x78] sm:$0xff]
  %v2177 = vunpack.c.l.b16 %v107
  %v2178 = vunpack.c.l.b16 %v108
  %v2179 = vpack.c.b16 %v2178, %v2177
  %v2197 = vunpack.c.l.b16 %v2159
  %v2198 = vunpack.c.h.b16 %v2159
  %v2199 = vunpack.c.l.b16 %v2160
  %v2200 = vunpack.c.h.b16 %v2160
  %v2201 = vunpack.c.l.b16 %v2161
  %v2202 = vunpack.c.h.b16 %v2161
  %v2203 = vunpack.c.l.b16 %v2162
  %v2204 = vunpack.c.h.b16 %v2162
  %v2205 = vunpack.c.l.b16 %v2163
  %v2206 = vunpack.c.h.b16 %v2163
  %v2207 = vunpack.c.l.b16 %v2164
  %v2208 = vunpack.c.h.b16 %v2164
  %v2209 = vunpack.c.l.b16 %v2165
  %v2210 = vunpack.c.h.b16 %v2165
  %v2211 = vunpack.c.l.b16 %v2166
  %v2212 = vunpack.c.h.b16 %v2166
  %v2213 = vunpack.c.l.b16 %v2167
  %v2214 = vunpack.c.h.b16 %v2167
  %v2215 = vunpack.c.l.b16 %v2168
  %v2216 = vunpack.c.h.b16 %v2168
  %v2217 = vunpack.c.l.b16 %v2169
  %v2218 = vunpack.c.h.b16 %v2169
  %v2219 = vunpack.c.l.b16 %v2170
  %v2220 = vunpack.c.h.b16 %v2170
  %v2221 = vunpack.c.l.b16 %v2171
  %v2222 = vunpack.c.h.b16 %v2171
  %v2223 = vunpack.c.l.b16 %v2172
  %v2224 = vunpack.c.h.b16 %v2172
  %v2225 = vunpack.c.l.b16 %v2173
  %v2226 = vunpack.c.h.b16 %v2173
  %v2227 = vunpack.c.l.b16 %v2174
  %v2228 = vunpack.c.h.b16 %v2174
  %v2229 = vpack.c.b16 %v2199, %v2197
  %v2230 = vpack.c.b16 %v2200, %v2198
  %v2231 = vpack.c.b16 %v2203, %v2201
  %v2232 = vpack.c.b16 %v2204, %v2202
  %v2233 = vpack.c.b16 %v2207, %v2205
  %v2234 = vpack.c.b16 %v2208, %v2206
  %v2235 = vpack.c.b16 %v2211, %v2209
  %v2236 = vpack.c.b16 %v2212, %v2210
  %v2237 = vpack.c.b16 %v2215, %v2213
  %v2238 = vpack.c.b16 %v2216, %v2214
  %v2239 = vpack.c.b16 %v2219, %v2217
  %v2240 = vpack.c.b16 %v2220, %v2218
  %v2241 = vpack.c.b16 %v2223, %v2221
  %v2242 = vpack.c.b16 %v2224, %v2222
  %v2243 = vpack.c.b16 %v2227, %v2225
  %v2244 = vpack.c.b16 %v2228, %v2226
  %2261 = vmatprep.subr.bf16.mxu0 %v2244
  %2262 = vmatpush1.bf16.msra.mxu0 %v2243
  %2263 = vmatprep.subr.bf16.mxu0 %v2242
  %2264 = vmatpush1.bf16.msra.mxu0 %v2241
  %2265 = vmatprep.subr.bf16.mxu0 %v2240
  %2266 = vmatpush1.bf16.msra.mxu0 %v2239
  %2267 = vmatprep.subr.bf16.mxu0 %v2238
  %2268 = vmatpush1.bf16.msra.mxu0 %v2237
  %2269 = vmatprep.subr.bf16.mxu0 %v2236
  %2270 = vmatpush1.bf16.msra.mxu0 %v2235
  %2271 = vmatprep.subr.bf16.mxu0 %v2234
  %2272 = vmatpush1.bf16.msra.mxu0 %v2233
  %2273 = vmatprep.subr.bf16.mxu0 %v2232
  %2274 = vmatpush1.bf16.msra.mxu0 %v2231
  %2275 = vmatprep.subr.bf16.mxu0 %v2230
  %2276 = vmatpush1.bf16.msra.mxu0 %v2229
  %2277 = vmatprep.subr.bf16.mxu0 0
  %2278 = vmatpush2.bf16.msra.mxu0 0
  %2279 = vmatprep.subr.bf16.mxu0 0
  %2280 = vmatpush2.bf16.msra.mxu0 0
  %2281 = vmatprep.subr.bf16.mxu0 0
  %2282 = vmatpush2.bf16.msra.mxu0 0
  %2283 = vmatprep.subr.bf16.mxu0 0
  %2284 = vmatpush2.bf16.msra.mxu0 0
  %2285 = vmatprep.subr.bf16.mxu0 0
  %2286 = vmatpush2.bf16.msra.mxu0 0
  %2287 = vmatprep.subr.bf16.mxu0 0
  %2288 = vmatpush2.bf16.msra.mxu0 0
  %2289 = vmatprep.subr.bf16.mxu0 0
  %2290 = vmatpush2.bf16.msra.mxu0 0
  %2291 = vmatprep.subr.bf16.mxu0 0
  %2292 = vmatpush2.bf16.msra.mxu0 0
  %2293 = vmatprep.mubr.bf16.mxu0 0
  %2294 = vmatmul.mubr.bf16.gmra.mxu0 %v257
  %v2295 = vpop.f32.mrf.mxu0
  %v2296 = vadd.f32 0.0, %v2295
  %v2297 = vpop.f32.mrf.mxu0
  %v2298 = vadd.f32 0.0, %v2297
  %v2299 = vpop.f32.mrf.mxu0
  %v2300 = vadd.f32 0.0, %v2299
  %v2301 = vpop.f32.mrf.mxu0
  %v2302 = vadd.f32 0.0, %v2301
  %2303 = vmatprep.mubr.bf16.mxu0 0
  %2304 = vmatmul.mubr.bf16.gmra.mxu0 %v258
  %v2305 = vpop.f32.mrf.mxu0
  %v2306 = vadd.f32 0.0, %v2305
  %v2307 = vpop.f32.mrf.mxu0
  %v2308 = vadd.f32 0.0, %v2307
  %v2309 = vpop.f32.mrf.mxu0
  %v2310 = vadd.f32 0.0, %v2309
  %v2311 = vpop.f32.mrf.mxu0
  %v2312 = vadd.f32 0.0, %v2311
  %2313 = vmatprep.mubr.bf16.mxu0 0
  %2314 = vmatmul.mubr.bf16.gmra.mxu0 %v259
  %v2315 = vpop.f32.mrf.mxu0
  %v2316 = vadd.f32 0.0, %v2315
  %v2317 = vpop.f32.mrf.mxu0
  %v2318 = vadd.f32 0.0, %v2317
  %v2319 = vpop.f32.mrf.mxu0
  %v2320 = vadd.f32 0.0, %v2319
  %v2321 = vpop.f32.mrf.mxu0
  %v2322 = vadd.f32 0.0, %v2321
  %2323 = vmatprep.mubr.bf16.mxu0 0
  %2324 = vmatmul.mubr.bf16.gmra.mxu0 %v260
  %v2325 = vpop.f32.mrf.mxu0
  %v2326 = vadd.f32 0.0, %v2325
  %v2327 = vpop.f32.mrf.mxu0
  %v2328 = vadd.f32 0.0, %v2327
  %v2329 = vpop.f32.mrf.mxu0
  %v2330 = vadd.f32 0.0, %v2329
  %v2331 = vpop.f32.mrf.mxu0
  %v2332 = vadd.f32 0.0, %v2331
  %2333 = vmatprep.mubr.bf16.mxu0 0
  %2334 = vmatmul.mubr.bf16.gmra.mxu0 %v261
  %v2335 = vpop.f32.mrf.mxu0
  %v2336 = vadd.f32 0.0, %v2335
  %v2337 = vpop.f32.mrf.mxu0
  %v2338 = vadd.f32 0.0, %v2337
  %v2339 = vpop.f32.mrf.mxu0
  %v2340 = vadd.f32 0.0, %v2339
  %v2341 = vpop.f32.mrf.mxu0
  %v2342 = vadd.f32 0.0, %v2341
  %2343 = vmatprep.mubr.bf16.mxu0 0
  %2344 = vmatmul.mubr.bf16.gmra.mxu0 %v262
  %v2345 = vpop.f32.mrf.mxu0
  %v2346 = vadd.f32 0.0, %v2345
  %v2347 = vpop.f32.mrf.mxu0
  %v2348 = vadd.f32 0.0, %v2347
  %v2349 = vpop.f32.mrf.mxu0
  %v2350 = vadd.f32 0.0, %v2349
  %v2351 = vpop.f32.mrf.mxu0
  %v2352 = vadd.f32 0.0, %v2351
  %2353 = vmatprep.mubr.bf16.mxu0 0
  %2354 = vmatmul.mubr.bf16.gmra.mxu0 %v263
  %v2355 = vpop.f32.mrf.mxu0
  %v2356 = vadd.f32 0.0, %v2355
  %v2357 = vpop.f32.mrf.mxu0
  %v2358 = vadd.f32 0.0, %v2357
  %v2359 = vpop.f32.mrf.mxu0
  %v2360 = vadd.f32 0.0, %v2359
  %v2361 = vpop.f32.mrf.mxu0
  %v2362 = vadd.f32 0.0, %v2361
  %2363 = vmatprep.mubr.bf16.mxu0 0
  %2364 = vmatmul.mubr.bf16.gmra.mxu0 %v264
  %v2365 = vpop.f32.mrf.mxu0
  %v2366 = vadd.f32 0.0, %v2365
  %v2367 = vpop.f32.mrf.mxu0
  %v2368 = vadd.f32 0.0, %v2367
  %v2369 = vpop.f32.mrf.mxu0
  %v2370 = vadd.f32 0.0, %v2369
  %v2371 = vpop.f32.mrf.mxu0
  %v2372 = vadd.f32 0.0, %v2371
  %2373 = vmatprep.mubr.bf16.mxu0 0
  %2374 = vmatmul.mubr.bf16.gmra.mxu0 %v265
  %v2375 = vpop.f32.mrf.mxu0
  %v2376 = vadd.f32 0.0, %v2375
  %v2377 = vpop.f32.mrf.mxu0
  %v2378 = vadd.f32 0.0, %v2377
  %v2379 = vpop.f32.mrf.mxu0
  %v2380 = vadd.f32 0.0, %v2379
  %v2381 = vpop.f32.mrf.mxu0
  %v2382 = vadd.f32 0.0, %v2381
  %2383 = vmatprep.mubr.bf16.mxu0 0
  %2384 = vmatmul.mubr.bf16.gmra.mxu0 %v266
  %v2385 = vpop.f32.mrf.mxu0
  %v2386 = vadd.f32 0.0, %v2385
  %v2387 = vpop.f32.mrf.mxu0
  %v2388 = vadd.f32 0.0, %v2387
  %v2389 = vpop.f32.mrf.mxu0
  %v2390 = vadd.f32 0.0, %v2389
  %v2391 = vpop.f32.mrf.mxu0
  %v2392 = vadd.f32 0.0, %v2391
  %2393 = vmatprep.mubr.bf16.mxu0 0
  %2394 = vmatmul.mubr.bf16.gmra.mxu0 %v267
  %v2395 = vpop.f32.mrf.mxu0
  %v2396 = vadd.f32 0.0, %v2395
  %v2397 = vpop.f32.mrf.mxu0
  %v2398 = vadd.f32 0.0, %v2397
  %v2399 = vpop.f32.mrf.mxu0
  %v2400 = vadd.f32 0.0, %v2399
  %v2401 = vpop.f32.mrf.mxu0
  %v2402 = vadd.f32 0.0, %v2401
  %2403 = vmatprep.mubr.bf16.mxu0 0
  %2404 = vmatmul.mubr.bf16.gmra.mxu0 %v268
  %v2405 = vpop.f32.mrf.mxu0
  %v2406 = vadd.f32 0.0, %v2405
  %v2407 = vpop.f32.mrf.mxu0
  %v2408 = vadd.f32 0.0, %v2407
  %v2409 = vpop.f32.mrf.mxu0
  %v2410 = vadd.f32 0.0, %v2409
  %v2411 = vpop.f32.mrf.mxu0
  %v2412 = vadd.f32 0.0, %v2411
  %2413 = vmatprep.mubr.bf16.mxu0 0
  %2414 = vmatmul.mubr.bf16.gmra.mxu0 %v269
  %v2415 = vpop.f32.mrf.mxu0
  %v2416 = vadd.f32 0.0, %v2415
  %v2417 = vpop.f32.mrf.mxu0
  %v2418 = vadd.f32 0.0, %v2417
  %v2419 = vpop.f32.mrf.mxu0
  %v2420 = vadd.f32 0.0, %v2419
  %v2421 = vpop.f32.mrf.mxu0
  %v2422 = vadd.f32 0.0, %v2421
  %2423 = vmatprep.mubr.bf16.mxu0 0
  %2424 = vmatmul.mubr.bf16.gmra.mxu0 %v270
  %v2425 = vpop.f32.mrf.mxu0
  %v2426 = vadd.f32 0.0, %v2425
  %v2427 = vpop.f32.mrf.mxu0
  %v2428 = vadd.f32 0.0, %v2427
  %v2429 = vpop.f32.mrf.mxu0
  %v2430 = vadd.f32 0.0, %v2429
  %v2431 = vpop.f32.mrf.mxu0
  %v2432 = vadd.f32 0.0, %v2431
  %2433 = vmatprep.mubr.bf16.mxu0 0
  %2434 = vmatmul.mubr.bf16.gmra.mxu0 %v271
  %v2435 = vpop.f32.mrf.mxu0
  %v2436 = vadd.f32 0.0, %v2435
  %v2437 = vpop.f32.mrf.mxu0
  %v2438 = vadd.f32 0.0, %v2437
  %v2439 = vpop.f32.mrf.mxu0
  %v2440 = vadd.f32 0.0, %v2439
  %v2441 = vpop.f32.mrf.mxu0
  %v2442 = vadd.f32 0.0, %v2441
  %2443 = vmatprep.mubr.bf16.mxu0 0
  %2444 = vmatmul.mubr.bf16.gmra.mxu0 %v272
  %v2445 = vpop.f32.mrf.mxu0
  %v2446 = vadd.f32 0.0, %v2445
  %v2447 = vpop.f32.mrf.mxu0
  %v2448 = vadd.f32 0.0, %v2447
  %v2449 = vpop.f32.mrf.mxu0
  %v2450 = vadd.f32 0.0, %v2449
  %v2451 = vpop.f32.mrf.mxu0
  %v2452 = vadd.f32 0.0, %v2451
  %2453 = vmatprep.mubr.bf16.mxu0 0
  %2454 = vmatmul.mubr.bf16.gmra.mxu0 %v273
  %v2455 = vpop.f32.mrf.mxu0
  %v2456 = vadd.f32 0.0, %v2455
  %v2457 = vpop.f32.mrf.mxu0
  %v2458 = vadd.f32 0.0, %v2457
  %v2459 = vpop.f32.mrf.mxu0
  %v2460 = vadd.f32 0.0, %v2459
  %v2461 = vpop.f32.mrf.mxu0
  %v2462 = vadd.f32 0.0, %v2461
  %2463 = vmatprep.mubr.bf16.mxu0 0
  %2464 = vmatmul.mubr.bf16.gmra.mxu0 %v274
  %v2465 = vpop.f32.mrf.mxu0
  %v2466 = vadd.f32 0.0, %v2465
  %v2467 = vpop.f32.mrf.mxu0
  %v2468 = vadd.f32 0.0, %v2467
  %v2469 = vpop.f32.mrf.mxu0
  %v2470 = vadd.f32 0.0, %v2469
  %v2471 = vpop.f32.mrf.mxu0
  %v2472 = vadd.f32 0.0, %v2471
  %2473 = vmatprep.mubr.bf16.mxu0 0
  %2474 = vmatmul.mubr.bf16.gmra.mxu0 %v275
  %v2475 = vpop.f32.mrf.mxu0
  %v2476 = vadd.f32 0.0, %v2475
  %v2477 = vpop.f32.mrf.mxu0
  %v2478 = vadd.f32 0.0, %v2477
  %v2479 = vpop.f32.mrf.mxu0
  %v2480 = vadd.f32 0.0, %v2479
  %v2481 = vpop.f32.mrf.mxu0
  %v2482 = vadd.f32 0.0, %v2481
  %2483 = vmatprep.mubr.bf16.mxu0 0
  %2484 = vmatmul.mubr.bf16.gmra.mxu0 %v276
  %v2485 = vpop.f32.mrf.mxu0
  %v2486 = vadd.f32 0.0, %v2485
  %v2487 = vpop.f32.mrf.mxu0
  %v2488 = vadd.f32 0.0, %v2487
  %v2489 = vpop.f32.mrf.mxu0
  %v2490 = vadd.f32 0.0, %v2489
  %v2491 = vpop.f32.mrf.mxu0
  %v2492 = vadd.f32 0.0, %v2491
  %2493 = vmatprep.mubr.bf16.mxu0 0
  %2494 = vmatmul.mubr.bf16.gmra.mxu0 %v277
  %v2495 = vpop.f32.mrf.mxu0
  %v2496 = vadd.f32 0.0, %v2495
  %v2497 = vpop.f32.mrf.mxu0
  %v2498 = vadd.f32 0.0, %v2497
  %v2499 = vpop.f32.mrf.mxu0
  %v2500 = vadd.f32 0.0, %v2499
  %v2501 = vpop.f32.mrf.mxu0
  %v2502 = vadd.f32 0.0, %v2501
  %2503 = vmatprep.mubr.bf16.mxu0 0
  %2504 = vmatmul.mubr.bf16.gmra.mxu0 %v278
  %v2505 = vpop.f32.mrf.mxu0
  %v2506 = vadd.f32 0.0, %v2505
  %v2507 = vpop.f32.mrf.mxu0
  %v2508 = vadd.f32 0.0, %v2507
  %v2509 = vpop.f32.mrf.mxu0
  %v2510 = vadd.f32 0.0, %v2509
  %v2511 = vpop.f32.mrf.mxu0
  %v2512 = vadd.f32 0.0, %v2511
  %2513 = vmatprep.mubr.bf16.mxu0 0
  %2514 = vmatmul.mubr.bf16.gmra.mxu0 %v279
  %v2515 = vpop.f32.mrf.mxu0
  %v2516 = vadd.f32 0.0, %v2515
  %v2517 = vpop.f32.mrf.mxu0
  %v2518 = vadd.f32 0.0, %v2517
  %v2519 = vpop.f32.mrf.mxu0
  %v2520 = vadd.f32 0.0, %v2519
  %v2521 = vpop.f32.mrf.mxu0
  %v2522 = vadd.f32 0.0, %v2521
  %2523 = vmatprep.mubr.bf16.mxu0 0
  %2524 = vmatmul.mubr.bf16.gmra.mxu0 %v280
  %v2525 = vpop.f32.mrf.mxu0
  %v2526 = vadd.f32 0.0, %v2525
  %v2527 = vpop.f32.mrf.mxu0
  %v2528 = vadd.f32 0.0, %v2527
  %v2529 = vpop.f32.mrf.mxu0
  %v2530 = vadd.f32 0.0, %v2529
  %v2531 = vpop.f32.mrf.mxu0
  %v2532 = vadd.f32 0.0, %v2531
  %2533 = vmatprep.mubr.bf16.mxu0 0
  %2534 = vmatmul.mubr.bf16.gmra.mxu0 %v281
  %v2535 = vpop.f32.mrf.mxu0
  %v2536 = vadd.f32 0.0, %v2535
  %v2537 = vpop.f32.mrf.mxu0
  %v2538 = vadd.f32 0.0, %v2537
  %v2539 = vpop.f32.mrf.mxu0
  %v2540 = vadd.f32 0.0, %v2539
  %v2541 = vpop.f32.mrf.mxu0
  %v2542 = vadd.f32 0.0, %v2541
  %2543 = vmatprep.mubr.bf16.mxu0 0
  %2544 = vmatmul.mubr.bf16.gmra.mxu0 %v1123
  %v2545 = vpop.f32.mrf.mxu0
  %v2546 = vadd.f32 0.0, %v2545
  %v2547 = vpop.f32.mrf.mxu0
  %v2548 = vadd.f32 0.0, %v2547
  %v2549 = vpop.f32.mrf.mxu0
  %v2550 = vadd.f32 0.0, %v2549
  %v2551 = vpop.f32.mrf.mxu0
  %v2552 = vadd.f32 0.0, %v2551
  %2553 = vmatprep.mubr.bf16.mxu0 0
  %2554 = vmatmul.mubr.bf16.gmra.mxu0 %v1651
  %v2555 = vpop.f32.mrf.mxu0
  %v2556 = vadd.f32 0.0, %v2555
  %v2557 = vpop.f32.mrf.mxu0
  %v2558 = vadd.f32 0.0, %v2557
  %v2559 = vpop.f32.mrf.mxu0
  %v2560 = vadd.f32 0.0, %v2559
  %v2561 = vpop.f32.mrf.mxu0
  %v2562 = vadd.f32 0.0, %v2561
  %2563 = vmatprep.mubr.bf16.mxu0 0
  %2564 = vmatmul.mubr.bf16.gmra.mxu0 %v2179
  %v2565 = vpop.f32.mrf.mxu0
  %v2566 = vadd.f32 0.0, %v2565
  %v2567 = vpop.f32.mrf.mxu0
  %v2568 = vadd.f32 0.0, %v2567
  %v2569 = vpop.f32.mrf.mxu0
  %v2570 = vadd.f32 0.0, %v2569
  %v2571 = vpop.f32.mrf.mxu0
  %v2572 = vadd.f32 0.0, %v2571
  %2573 = vdwg.mxu0
  %v2574 = vadd.f32 %v2046, %v2296
  %v2575 = vadd.f32 %v2047, %v2298
  %v2576 = vadd.f32 %v2048, %v2300
  %v2577 = vadd.f32 %v2049, %v2302
  %v2578 = vadd.f32 %v2050, %v2306
  %v2579 = vadd.f32 %v2051, %v2308
  %v2580 = vadd.f32 %v2052, %v2310
  %v2581 = vadd.f32 %v2053, %v2312
  %v2582 = vadd.f32 %v2054, %v2316
  %v2583 = vadd.f32 %v2055, %v2318
  %v2584 = vadd.f32 %v2056, %v2320
  %v2585 = vadd.f32 %v2057, %v2322
  %v2586 = vadd.f32 %v2058, %v2326
  %v2587 = vadd.f32 %v2059, %v2328
  %v2588 = vadd.f32 %v2060, %v2330
  %v2589 = vadd.f32 %v2061, %v2332
  %v2590 = vadd.f32 %v2062, %v2336
  %v2591 = vadd.f32 %v2063, %v2338
  %v2592 = vadd.f32 %v2064, %v2340
  %v2593 = vadd.f32 %v2065, %v2342
  %v2594 = vadd.f32 %v2066, %v2346
  %v2595 = vadd.f32 %v2067, %v2348
  %v2596 = vadd.f32 %v2068, %v2350
  %v2597 = vadd.f32 %v2069, %v2352
  %v2598 = vadd.f32 %v2070, %v2356
  %v2599 = vadd.f32 %v2071, %v2358
  %v2600 = vadd.f32 %v2072, %v2360
  %v2601 = vadd.f32 %v2073, %v2362
  %v2602 = vadd.f32 %v2074, %v2366
  %v2603 = vadd.f32 %v2075, %v2368
  %v2604 = vadd.f32 %v2076, %v2370
  %v2605 = vadd.f32 %v2077, %v2372
  %v2606 = vadd.f32 %v2078, %v2376
  %v2607 = vadd.f32 %v2079, %v2378
  %v2608 = vadd.f32 %v2080, %v2380
  %v2609 = vadd.f32 %v2081, %v2382
  %v2610 = vadd.f32 %v2082, %v2386
  %v2611 = vadd.f32 %v2083, %v2388
  %v2612 = vadd.f32 %v2084, %v2390
  %v2613 = vadd.f32 %v2085, %v2392
  %v2614 = vadd.f32 %v2086, %v2396
  %v2615 = vadd.f32 %v2087, %v2398
  %v2616 = vadd.f32 %v2088, %v2400
  %v2617 = vadd.f32 %v2089, %v2402
  %v2618 = vadd.f32 %v2090, %v2406
  %v2619 = vadd.f32 %v2091, %v2408
  %v2620 = vadd.f32 %v2092, %v2410
  %v2621 = vadd.f32 %v2093, %v2412
  %v2622 = vadd.f32 %v2094, %v2416
  %v2623 = vadd.f32 %v2095, %v2418
  %v2624 = vadd.f32 %v2096, %v2420
  %v2625 = vadd.f32 %v2097, %v2422
  %v2626 = vadd.f32 %v2098, %v2426
  %v2627 = vadd.f32 %v2099, %v2428
  %v2628 = vadd.f32 %v2100, %v2430
  %v2629 = vadd.f32 %v2101, %v2432
  %v2630 = vadd.f32 %v2102, %v2436
  %v2631 = vadd.f32 %v2103, %v2438
  %v2632 = vadd.f32 %v2104, %v2440
  %v2633 = vadd.f32 %v2105, %v2442
  %v2634 = vadd.f32 %v2106, %v2446
  %v2635 = vadd.f32 %v2107, %v2448
  %v2636 = vadd.f32 %v2108, %v2450
  %v2637 = vadd.f32 %v2109, %v2452
  %v2638 = vadd.f32 %v2110, %v2456
  %v2639 = vadd.f32 %v2111, %v2458
  %v2640 = vadd.f32 %v2112, %v2460
  %v2641 = vadd.f32 %v2113, %v2462
  %v2642 = vadd.f32 %v2114, %v2466
  %v2643 = vadd.f32 %v2115, %v2468
  %v2644 = vadd.f32 %v2116, %v2470
  %v2645 = vadd.f32 %v2117, %v2472
  %v2646 = vadd.f32 %v2118, %v2476
  %v2647 = vadd.f32 %v2119, %v2478
  %v2648 = vadd.f32 %v2120, %v2480
  %v2649 = vadd.f32 %v2121, %v2482
  %v2650 = vadd.f32 %v2122, %v2486
  %v2651 = vadd.f32 %v2123, %v2488
  %v2652 = vadd.f32 %v2124, %v2490
  %v2653 = vadd.f32 %v2125, %v2492
  %v2654 = vadd.f32 %v2126, %v2496
  %v2655 = vadd.f32 %v2127, %v2498
  %v2656 = vadd.f32 %v2128, %v2500
  %v2657 = vadd.f32 %v2129, %v2502
  %v2658 = vadd.f32 %v2130, %v2506
  %v2659 = vadd.f32 %v2131, %v2508
  %v2660 = vadd.f32 %v2132, %v2510
  %v2661 = vadd.f32 %v2133, %v2512
  %v2662 = vadd.f32 %v2134, %v2516
  %v2663 = vadd.f32 %v2135, %v2518
  %v2664 = vadd.f32 %v2136, %v2520
  %v2665 = vadd.f32 %v2137, %v2522
  %v2666 = vadd.f32 %v2138, %v2526
  %v2667 = vadd.f32 %v2139, %v2528
  %v2668 = vadd.f32 %v2140, %v2530
  %v2669 = vadd.f32 %v2141, %v2532
  %v2670 = vadd.f32 %v2142, %v2536
  %v2671 = vadd.f32 %v2143, %v2538
  %v2672 = vadd.f32 %v2144, %v2540
  %v2673 = vadd.f32 %v2145, %v2542
  %v2674 = vadd.f32 %v2146, %v2546
  %v2675 = vadd.f32 %v2147, %v2548
  %v2676 = vadd.f32 %v2148, %v2550
  %v2677 = vadd.f32 %v2149, %v2552
  %v2678 = vadd.f32 %v2150, %v2556
  %v2679 = vadd.f32 %v2151, %v2558
  %v2680 = vadd.f32 %v2152, %v2560
  %v2681 = vadd.f32 %v2153, %v2562
  %v2682 = vadd.f32 %v2154, %v2566
  %v2683 = vadd.f32 %v2155, %v2568
  %v2684 = vadd.f32 %v2156, %v2570
  %v2685 = vadd.f32 %v2157, %v2572
  %v2686 = vld [vmem:[%s2] sm:$0x3]
  %v2688 = vlaneseq
  %v2689 = vshrl.u32 %v2688, 7
  %v2690 = vsub.s32 0, %v2689
  %v2691 = vrot.slane %v2686, %v2690
  %v2692 = vlaneseq
  %v2693 = vshrl.u32 %v2692, 7
  %v2694 = vsub.s32 1, %v2693
  %v2695 = vrot.slane %v2686, %v2694
  %v2698 = vadd.f32 %v2574, %v2691
  %v2699 = vadd.f32 %v2575, %v2695
  %v2700 = vadd.f32 %v2576, %v2691
  %v2701 = vadd.f32 %v2577, %v2695
  %v2702 = vadd.f32 %v2578, %v2691
  %v2703 = vadd.f32 %v2579, %v2695
  %v2704 = vadd.f32 %v2580, %v2691
  %v2705 = vadd.f32 %v2581, %v2695
  %v2706 = vadd.f32 %v2582, %v2691
  %v2707 = vadd.f32 %v2583, %v2695
  %v2708 = vadd.f32 %v2584, %v2691
  %v2709 = vadd.f32 %v2585, %v2695
  %v2710 = vadd.f32 %v2586, %v2691
  %v2711 = vadd.f32 %v2587, %v2695
  %v2712 = vadd.f32 %v2588, %v2691
  %v2713 = vadd.f32 %v2589, %v2695
  %v2714 = vadd.f32 %v2590, %v2691
  %v2715 = vadd.f32 %v2591, %v2695
  %v2716 = vadd.f32 %v2592, %v2691
  %v2717 = vadd.f32 %v2593, %v2695
  %v2718 = vadd.f32 %v2594, %v2691
  %v2719 = vadd.f32 %v2595, %v2695
  %v2720 = vadd.f32 %v2596, %v2691
  %v2721 = vadd.f32 %v2597, %v2695
  %v2722 = vadd.f32 %v2598, %v2691
  %v2723 = vadd.f32 %v2599, %v2695
  %v2724 = vadd.f32 %v2600, %v2691
  %v2725 = vadd.f32 %v2601, %v2695
  %v2726 = vadd.f32 %v2602, %v2691
  %v2727 = vadd.f32 %v2603, %v2695
  %v2728 = vadd.f32 %v2604, %v2691
  %v2729 = vadd.f32 %v2605, %v2695
  %v2730 = vadd.f32 %v2606, %v2691
  %v2731 = vadd.f32 %v2607, %v2695
  %v2732 = vadd.f32 %v2608, %v2691
  %v2733 = vadd.f32 %v2609, %v2695
  %v2734 = vadd.f32 %v2610, %v2691
  %v2735 = vadd.f32 %v2611, %v2695
  %v2736 = vadd.f32 %v2612, %v2691
  %v2737 = vadd.f32 %v2613, %v2695
  %v2738 = vadd.f32 %v2614, %v2691
  %v2739 = vadd.f32 %v2615, %v2695
  %v2740 = vadd.f32 %v2616, %v2691
  %v2741 = vadd.f32 %v2617, %v2695
  %v2742 = vadd.f32 %v2618, %v2691
  %v2743 = vadd.f32 %v2619, %v2695
  %v2744 = vadd.f32 %v2620, %v2691
  %v2745 = vadd.f32 %v2621, %v2695
  %v2746 = vadd.f32 %v2622, %v2691
  %v2747 = vadd.f32 %v2623, %v2695
  %v2748 = vadd.f32 %v2624, %v2691
  %v2749 = vadd.f32 %v2625, %v2695
  %v2750 = vadd.f32 %v2626, %v2691
  %v2751 = vadd.f32 %v2627, %v2695
  %v2752 = vadd.f32 %v2628, %v2691
  %v2753 = vadd.f32 %v2629, %v2695
  %v2754 = vadd.f32 %v2630, %v2691
  %v2755 = vadd.f32 %v2631, %v2695
  %v2756 = vadd.f32 %v2632, %v2691
  %v2757 = vadd.f32 %v2633, %v2695
  %v2758 = vadd.f32 %v2634, %v2691
  %v2759 = vadd.f32 %v2635, %v2695
  %v2760 = vadd.f32 %v2636, %v2691
  %v2761 = vadd.f32 %v2637, %v2695
  %v2762 = vadd.f32 %v2638, %v2691
  %v2763 = vadd.f32 %v2639, %v2695
  %v2764 = vadd.f32 %v2640, %v2691
  %v2765 = vadd.f32 %v2641, %v2695
  %v2766 = vadd.f32 %v2642, %v2691
  %v2767 = vadd.f32 %v2643, %v2695
  %v2768 = vadd.f32 %v2644, %v2691
  %v2769 = vadd.f32 %v2645, %v2695
  %v2770 = vadd.f32 %v2646, %v2691
  %v2771 = vadd.f32 %v2647, %v2695
  %v2772 = vadd.f32 %v2648, %v2691
  %v2773 = vadd.f32 %v2649, %v2695
  %v2774 = vadd.f32 %v2650, %v2691
  %v2775 = vadd.f32 %v2651, %v2695
  %v2776 = vadd.f32 %v2652, %v2691
  %v2777 = vadd.f32 %v2653, %v2695
  %v2778 = vadd.f32 %v2654, %v2691
  %v2779 = vadd.f32 %v2655, %v2695
  %v2780 = vadd.f32 %v2656, %v2691
  %v2781 = vadd.f32 %v2657, %v2695
  %v2782 = vadd.f32 %v2658, %v2691
  %v2783 = vadd.f32 %v2659, %v2695
  %v2784 = vadd.f32 %v2660, %v2691
  %v2785 = vadd.f32 %v2661, %v2695
  %v2786 = vadd.f32 %v2662, %v2691
  %v2787 = vadd.f32 %v2663, %v2695
  %v2788 = vadd.f32 %v2664, %v2691
  %v2789 = vadd.f32 %v2665, %v2695
  %v2790 = vadd.f32 %v2666, %v2691
  %v2791 = vadd.f32 %v2667, %v2695
  %v2792 = vadd.f32 %v2668, %v2691
  %v2793 = vadd.f32 %v2669, %v2695
  %v2794 = vadd.f32 %v2670, %v2691
  %v2795 = vadd.f32 %v2671, %v2695
  %v2796 = vadd.f32 %v2672, %v2691
  %v2797 = vadd.f32 %v2673, %v2695
  %v2798 = vadd.f32 %v2674, %v2691
  %v2799 = vadd.f32 %v2675, %v2695
  %v2800 = vadd.f32 %v2676, %v2691
  %v2801 = vadd.f32 %v2677, %v2695
  %v2802 = vadd.f32 %v2678, %v2691
  %v2803 = vadd.f32 %v2679, %v2695
  %v2804 = vadd.f32 %v2680, %v2691
  %v2805 = vadd.f32 %v2681, %v2695
  %v2806 = vadd.f32 %v2682, %v2691
  %v2807 = vadd.f32 %v2683, %v2695
  %v2808 = vadd.f32 %v2684, %v2691
  %v2809 = vadd.f32 %v2685, %v2695
  %v2810 = vmax.f32 %v2698, 0.0
  %v2811 = vmax.f32 %v2699, 0.0
  %v2812 = vmax.f32 %v2700, 0.0
  %v2813 = vmax.f32 %v2701, 0.0
  %v2814 = vmax.f32 %v2702, 0.0
  %v2815 = vmax.f32 %v2703, 0.0
  %v2816 = vmax.f32 %v2704, 0.0
  %v2817 = vmax.f32 %v2705, 0.0
  %v2818 = vmax.f32 %v2706, 0.0
  %v2819 = vmax.f32 %v2707, 0.0
  %v2820 = vmax.f32 %v2708, 0.0
  %v2821 = vmax.f32 %v2709, 0.0
  %v2822 = vmax.f32 %v2710, 0.0
  %v2823 = vmax.f32 %v2711, 0.0
  %v2824 = vmax.f32 %v2712, 0.0
  %v2825 = vmax.f32 %v2713, 0.0
  %v2826 = vmax.f32 %v2714, 0.0
  %v2827 = vmax.f32 %v2715, 0.0
  %v2828 = vmax.f32 %v2716, 0.0
  %v2829 = vmax.f32 %v2717, 0.0
  %v2830 = vmax.f32 %v2718, 0.0
  %v2831 = vmax.f32 %v2719, 0.0
  %v2832 = vmax.f32 %v2720, 0.0
  %v2833 = vmax.f32 %v2721, 0.0
  %v2834 = vmax.f32 %v2722, 0.0
  %v2835 = vmax.f32 %v2723, 0.0
  %v2836 = vmax.f32 %v2724, 0.0
  %v2837 = vmax.f32 %v2725, 0.0
  %v2838 = vmax.f32 %v2726, 0.0
  %v2839 = vmax.f32 %v2727, 0.0
  %v2840 = vmax.f32 %v2728, 0.0
  %v2841 = vmax.f32 %v2729, 0.0
  %v2842 = vmax.f32 %v2730, 0.0
  %v2843 = vmax.f32 %v2731, 0.0
  %v2844 = vmax.f32 %v2732, 0.0
  %v2845 = vmax.f32 %v2733, 0.0
  %v2846 = vmax.f32 %v2734, 0.0
  %v2847 = vmax.f32 %v2735, 0.0
  %v2848 = vmax.f32 %v2736, 0.0
  %v2849 = vmax.f32 %v2737, 0.0
  %v2850 = vmax.f32 %v2738, 0.0
  %v2851 = vmax.f32 %v2739, 0.0
  %v2852 = vmax.f32 %v2740, 0.0
  %v2853 = vmax.f32 %v2741, 0.0
  %v2854 = vmax.f32 %v2742, 0.0
  %v2855 = vmax.f32 %v2743, 0.0
  %v2856 = vmax.f32 %v2744, 0.0
  %v2857 = vmax.f32 %v2745, 0.0
  %v2858 = vmax.f32 %v2746, 0.0
  %v2859 = vmax.f32 %v2747, 0.0
  %v2860 = vmax.f32 %v2748, 0.0
  %v2861 = vmax.f32 %v2749, 0.0
  %v2862 = vmax.f32 %v2750, 0.0
  %v2863 = vmax.f32 %v2751, 0.0
  %v2864 = vmax.f32 %v2752, 0.0
  %v2865 = vmax.f32 %v2753, 0.0
  %v2866 = vmax.f32 %v2754, 0.0
  %v2867 = vmax.f32 %v2755, 0.0
  %v2868 = vmax.f32 %v2756, 0.0
  %v2869 = vmax.f32 %v2757, 0.0
  %v2870 = vmax.f32 %v2758, 0.0
  %v2871 = vmax.f32 %v2759, 0.0
  %v2872 = vmax.f32 %v2760, 0.0
  %v2873 = vmax.f32 %v2761, 0.0
  %v2874 = vmax.f32 %v2762, 0.0
  %v2875 = vmax.f32 %v2763, 0.0
  %v2876 = vmax.f32 %v2764, 0.0
  %v2877 = vmax.f32 %v2765, 0.0
  %v2878 = vmax.f32 %v2766, 0.0
  %v2879 = vmax.f32 %v2767, 0.0
  %v2880 = vmax.f32 %v2768, 0.0
  %v2881 = vmax.f32 %v2769, 0.0
  %v2882 = vmax.f32 %v2770, 0.0
  %v2883 = vmax.f32 %v2771, 0.0
  %v2884 = vmax.f32 %v2772, 0.0
  %v2885 = vmax.f32 %v2773, 0.0
  %v2886 = vmax.f32 %v2774, 0.0
  %v2887 = vmax.f32 %v2775, 0.0
  %v2888 = vmax.f32 %v2776, 0.0
  %v2889 = vmax.f32 %v2777, 0.0
  %v2890 = vmax.f32 %v2778, 0.0
  %v2891 = vmax.f32 %v2779, 0.0
  %v2892 = vmax.f32 %v2780, 0.0
  %v2893 = vmax.f32 %v2781, 0.0
  %v2894 = vmax.f32 %v2782, 0.0
  %v2895 = vmax.f32 %v2783, 0.0
  %v2896 = vmax.f32 %v2784, 0.0
  %v2897 = vmax.f32 %v2785, 0.0
  %v2898 = vmax.f32 %v2786, 0.0
  %v2899 = vmax.f32 %v2787, 0.0
  %v2900 = vmax.f32 %v2788, 0.0
  %v2901 = vmax.f32 %v2789, 0.0
  %v2902 = vmax.f32 %v2790, 0.0
  %v2903 = vmax.f32 %v2791, 0.0
  %v2904 = vmax.f32 %v2792, 0.0
  %v2905 = vmax.f32 %v2793, 0.0
  %v2906 = vmax.f32 %v2794, 0.0
  %v2907 = vmax.f32 %v2795, 0.0
  %v2908 = vmax.f32 %v2796, 0.0
  %v2909 = vmax.f32 %v2797, 0.0
  %v2910 = vmax.f32 %v2798, 0.0
  %v2911 = vmax.f32 %v2799, 0.0
  %v2912 = vmax.f32 %v2800, 0.0
  %v2913 = vmax.f32 %v2801, 0.0
  %v2914 = vmax.f32 %v2802, 0.0
  %v2915 = vmax.f32 %v2803, 0.0
  %v2916 = vmax.f32 %v2804, 0.0
  %v2917 = vmax.f32 %v2805, 0.0
  %v2918 = vmax.f32 %v2806, 0.0
  %v2919 = vmax.f32 %v2807, 0.0
  %v2920 = vmax.f32 %v2808, 0.0
  %v2921 = vmax.f32 %v2809, 0.0
  %v2922 = vpack.c.bf16 %v2812, %v2810
  %v2923 = vpack.c.bf16 %v2813, %v2811
  %v2924 = vpack.c.bf16 %v2816, %v2814
  %v2925 = vpack.c.bf16 %v2817, %v2815
  %v2926 = vpack.c.bf16 %v2820, %v2818
  %v2927 = vpack.c.bf16 %v2821, %v2819
  %v2928 = vpack.c.bf16 %v2824, %v2822
  %v2929 = vpack.c.bf16 %v2825, %v2823
  %v2930 = vpack.c.bf16 %v2828, %v2826
  %v2931 = vpack.c.bf16 %v2829, %v2827
  %v2932 = vpack.c.bf16 %v2832, %v2830
  %v2933 = vpack.c.bf16 %v2833, %v2831
  %v2934 = vpack.c.bf16 %v2836, %v2834
  %v2935 = vpack.c.bf16 %v2837, %v2835
  %v2936 = vpack.c.bf16 %v2840, %v2838
  %v2937 = vpack.c.bf16 %v2841, %v2839
  %v2938 = vpack.c.bf16 %v2844, %v2842
  %v2939 = vpack.c.bf16 %v2845, %v2843
  %v2940 = vpack.c.bf16 %v2848, %v2846
  %v2941 = vpack.c.bf16 %v2849, %v2847
  %v2942 = vpack.c.bf16 %v2852, %v2850
  %v2943 = vpack.c.bf16 %v2853, %v2851
  %v2944 = vpack.c.bf16 %v2856, %v2854
  %v2945 = vpack.c.bf16 %v2857, %v2855
  %v2946 = vpack.c.bf16 %v2860, %v2858
  %v2947 = vpack.c.bf16 %v2861, %v2859
  %v2948 = vpack.c.bf16 %v2864, %v2862
  %v2949 = vpack.c.bf16 %v2865, %v2863
  %v2950 = vpack.c.bf16 %v2868, %v2866
  %v2951 = vpack.c.bf16 %v2869, %v2867
  %v2952 = vpack.c.bf16 %v2872, %v2870
  %v2953 = vpack.c.bf16 %v2873, %v2871
  %v2954 = vpack.c.bf16 %v2876, %v2874
  %v2955 = vpack.c.bf16 %v2877, %v2875
  %v2956 = vpack.c.bf16 %v2880, %v2878
  %v2957 = vpack.c.bf16 %v2881, %v2879
  %v2958 = vpack.c.bf16 %v2884, %v2882
  %v2959 = vpack.c.bf16 %v2885, %v2883
  %v2960 = vpack.c.bf16 %v2888, %v2886
  %v2961 = vpack.c.bf16 %v2889, %v2887
  %v2962 = vpack.c.bf16 %v2892, %v2890
  %v2963 = vpack.c.bf16 %v2893, %v2891
  %v2964 = vpack.c.bf16 %v2896, %v2894
  %v2965 = vpack.c.bf16 %v2897, %v2895
  %v2966 = vpack.c.bf16 %v2900, %v2898
  %v2967 = vpack.c.bf16 %v2901, %v2899
  %v2968 = vpack.c.bf16 %v2904, %v2902
  %v2969 = vpack.c.bf16 %v2905, %v2903
  %v2970 = vpack.c.bf16 %v2908, %v2906
  %v2971 = vpack.c.bf16 %v2909, %v2907
  %v2972 = vpack.c.bf16 %v2912, %v2910
  %v2973 = vpack.c.bf16 %v2913, %v2911
  %v2974 = vpack.c.bf16 %v2916, %v2914
  %v2975 = vpack.c.bf16 %v2917, %v2915
  %v2976 = vpack.c.bf16 %v2920, %v2918
  %v2977 = vpack.c.bf16 %v2921, %v2919
  %v2978 = vld [vmem:[%s3] sm:$0xff]
  %v2979 = vld [vmem:[%s3 + $0x8] sm:$0xff]
  %v2980 = vld [vmem:[%s3 + $0x10] sm:$0xff]
  %v2981 = vld [vmem:[%s3 + $0x18] sm:$0xff]
  %v2982 = vld [vmem:[%s3 + $0x20] sm:$0xff]
  %v2983 = vld [vmem:[%s3 + $0x28] sm:$0xff]
  %v2984 = vld [vmem:[%s3 + $0x30] sm:$0xff]
  %v2985 = vld [vmem:[%s3 + $0x38] sm:$0xff]
  %v2986 = vld [vmem:[%s3 + $0x40] sm:$0xff]
  %v2987 = vld [vmem:[%s3 + $0x48] sm:$0xff]
  %v2988 = vld [vmem:[%s3 + $0x50] sm:$0xff]
  %v2989 = vld [vmem:[%s3 + $0x58] sm:$0xff]
  %v2990 = vld [vmem:[%s3 + $0x60] sm:$0xff]
  %v2991 = vld [vmem:[%s3 + $0x68] sm:$0xff]
  %v2992 = vld [vmem:[%s3 + $0x70] sm:$0xff]
  %v2993 = vld [vmem:[%s3 + $0x78] sm:$0xff]
  %v2994 = vld [vmem:[%s3 + $0x80] sm:$0xff]
  %v2995 = vld [vmem:[%s3 + $0x88] sm:$0xff]
  %v2996 = vld [vmem:[%s3 + $0x90] sm:$0xff]
  %v2997 = vld [vmem:[%s3 + $0x98] sm:$0xff]
  %v2998 = vld [vmem:[%s3 + $0xa0] sm:$0xff]
  %v2999 = vld [vmem:[%s3 + $0xa8] sm:$0xff]
  %v3000 = vld [vmem:[%s3 + $0xb0] sm:$0xff]
  %v3001 = vld [vmem:[%s3 + $0xb8] sm:$0xff]
  %v3002 = vld [vmem:[%s3 + $0xc0] sm:$0xff]
  %v3003 = vld [vmem:[%s3 + $0xc8] sm:$0xff]
  %v3004 = vld [vmem:[%s3 + $0xd0] sm:$0xff]
  %v3005 = vld [vmem:[%s3 + $0xd8] sm:$0xff]
  %v3006 = vld [vmem:[%s3 + $0xe0] sm:$0xff]
  %v3007 = vld [vmem:[%s3 + $0xe8] sm:$0xff]
  %v3008 = vld [vmem:[%s3 + $0xf0] sm:$0xff]
  %v3009 = vld [vmem:[%s3 + $0xf8] sm:$0xff]
  %v3042 = vunpack.c.l.b16 %v2978
  %v3043 = vunpack.c.h.b16 %v2978
  %v3044 = vunpack.c.l.b16 %v2979
  %v3045 = vunpack.c.h.b16 %v2979
  %v3046 = vunpack.c.l.b16 %v2980
  %v3047 = vunpack.c.h.b16 %v2980
  %v3048 = vunpack.c.l.b16 %v2981
  %v3049 = vunpack.c.h.b16 %v2981
  %v3050 = vunpack.c.l.b16 %v2982
  %v3051 = vunpack.c.h.b16 %v2982
  %v3052 = vunpack.c.l.b16 %v2983
  %v3053 = vunpack.c.h.b16 %v2983
  %v3054 = vunpack.c.l.b16 %v2984
  %v3055 = vunpack.c.h.b16 %v2984
  %v3056 = vunpack.c.l.b16 %v2985
  %v3057 = vunpack.c.h.b16 %v2985
  %v3058 = vunpack.c.l.b16 %v2986
  %v3059 = vunpack.c.h.b16 %v2986
  %v3060 = vunpack.c.l.b16 %v2987
  %v3061 = vunpack.c.h.b16 %v2987
  %v3062 = vunpack.c.l.b16 %v2988
  %v3063 = vunpack.c.h.b16 %v2988
  %v3064 = vunpack.c.l.b16 %v2989
  %v3065 = vunpack.c.h.b16 %v2989
  %v3066 = vunpack.c.l.b16 %v2990
  %v3067 = vunpack.c.h.b16 %v2990
  %v3068 = vunpack.c.l.b16 %v2991
  %v3069 = vunpack.c.h.b16 %v2991
  %v3070 = vunpack.c.l.b16 %v2992
  %v3071 = vunpack.c.h.b16 %v2992
  %v3072 = vunpack.c.l.b16 %v2993
  %v3073 = vunpack.c.h.b16 %v2993
  %v3074 = vunpack.c.l.b16 %v2994
  %v3075 = vunpack.c.h.b16 %v2994
  %v3076 = vunpack.c.l.b16 %v2995
  %v3077 = vunpack.c.h.b16 %v2995
  %v3078 = vunpack.c.l.b16 %v2996
  %v3079 = vunpack.c.h.b16 %v2996
  %v3080 = vunpack.c.l.b16 %v2997
  %v3081 = vunpack.c.h.b16 %v2997
  %v3082 = vunpack.c.l.b16 %v2998
  %v3083 = vunpack.c.h.b16 %v2998
  %v3084 = vunpack.c.l.b16 %v2999
  %v3085 = vunpack.c.h.b16 %v2999
  %v3086 = vunpack.c.l.b16 %v3000
  %v3087 = vunpack.c.h.b16 %v3000
  %v3088 = vunpack.c.l.b16 %v3001
  %v3089 = vunpack.c.h.b16 %v3001
  %v3090 = vunpack.c.l.b16 %v3002
  %v3091 = vunpack.c.h.b16 %v3002
  %v3092 = vunpack.c.l.b16 %v3003
  %v3093 = vunpack.c.h.b16 %v3003
  %v3094 = vunpack.c.l.b16 %v3004
  %v3095 = vunpack.c.h.b16 %v3004
  %v3096 = vunpack.c.l.b16 %v3005
  %v3097 = vunpack.c.h.b16 %v3005
  %v3098 = vunpack.c.l.b16 %v3006
  %v3099 = vunpack.c.h.b16 %v3006
  %v3100 = vunpack.c.l.b16 %v3007
  %v3101 = vunpack.c.h.b16 %v3007
  %v3102 = vunpack.c.l.b16 %v3008
  %v3103 = vunpack.c.h.b16 %v3008
  %v3104 = vunpack.c.l.b16 %v3009
  %v3105 = vunpack.c.h.b16 %v3009
  %v3106 = vpack.c.b16 %v3044, %v3042
  %v3107 = vpack.c.b16 %v3045, %v3043
  %v3108 = vpack.c.b16 %v3048, %v3046
  %v3109 = vpack.c.b16 %v3049, %v3047
  %v3110 = vpack.c.b16 %v3052, %v3050
  %v3111 = vpack.c.b16 %v3053, %v3051
  %v3112 = vpack.c.b16 %v3056, %v3054
  %v3113 = vpack.c.b16 %v3057, %v3055
  %v3114 = vpack.c.b16 %v3060, %v3058
  %v3115 = vpack.c.b16 %v3061, %v3059
  %v3116 = vpack.c.b16 %v3064, %v3062
  %v3117 = vpack.c.b16 %v3065, %v3063
  %v3118 = vpack.c.b16 %v3068, %v3066
  %v3119 = vpack.c.b16 %v3069, %v3067
  %v3120 = vpack.c.b16 %v3072, %v3070
  %v3121 = vpack.c.b16 %v3073, %v3071
  %v3122 = vpack.c.b16 %v3076, %v3074
  %v3123 = vpack.c.b16 %v3077, %v3075
  %v3124 = vpack.c.b16 %v3080, %v3078
  %v3125 = vpack.c.b16 %v3081, %v3079
  %v3126 = vpack.c.b16 %v3084, %v3082
  %v3127 = vpack.c.b16 %v3085, %v3083
  %v3128 = vpack.c.b16 %v3088, %v3086
  %v3129 = vpack.c.b16 %v3089, %v3087
  %v3130 = vpack.c.b16 %v3092, %v3090
  %v3131 = vpack.c.b16 %v3093, %v3091
  %v3132 = vpack.c.b16 %v3096, %v3094
  %v3133 = vpack.c.b16 %v3097, %v3095
  %v3134 = vpack.c.b16 %v3100, %v3098
  %v3135 = vpack.c.b16 %v3101, %v3099
  %v3136 = vpack.c.b16 %v3104, %v3102
  %v3137 = vpack.c.b16 %v3105, %v3103
  %3170 = vmatprep.subr.bf16.mxu0 %v3121
  %3171 = vmatpush1.bf16.msra.mxu0 %v3120
  %3172 = vmatprep.subr.bf16.mxu0 %v3119
  %3173 = vmatpush1.bf16.msra.mxu0 %v3118
  %3174 = vmatprep.subr.bf16.mxu0 %v3117
  %3175 = vmatpush1.bf16.msra.mxu0 %v3116
  %3176 = vmatprep.subr.bf16.mxu0 %v3115
  %3177 = vmatpush1.bf16.msra.mxu0 %v3114
  %3178 = vmatprep.subr.bf16.mxu0 %v3113
  %3179 = vmatpush1.bf16.msra.mxu0 %v3112
  %3180 = vmatprep.subr.bf16.mxu0 %v3111
  %3181 = vmatpush1.bf16.msra.mxu0 %v3110
  %3182 = vmatprep.subr.bf16.mxu0 %v3109
  %3183 = vmatpush1.bf16.msra.mxu0 %v3108
  %3184 = vmatprep.subr.bf16.mxu0 %v3107
  %3185 = vmatpush1.bf16.msra.mxu0 %v3106
  %3186 = vmatprep.subr.bf16.mxu0 %v3137
  %3187 = vmatpush2.bf16.msra.mxu0 %v3136
  %3188 = vmatprep.subr.bf16.mxu0 %v3135
  %3189 = vmatpush2.bf16.msra.mxu0 %v3134
  %3190 = vmatprep.subr.bf16.mxu0 %v3133
  %3191 = vmatpush2.bf16.msra.mxu0 %v3132
  %3192 = vmatprep.subr.bf16.mxu0 %v3131
  %3193 = vmatpush2.bf16.msra.mxu0 %v3130
  %3194 = vmatprep.subr.bf16.mxu0 %v3129
  %3195 = vmatpush2.bf16.msra.mxu0 %v3128
  %3196 = vmatprep.subr.bf16.mxu0 %v3127
  %3197 = vmatpush2.bf16.msra.mxu0 %v3126
  %3198 = vmatprep.subr.bf16.mxu0 %v3125
  %3199 = vmatpush2.bf16.msra.mxu0 %v3124
  %3200 = vmatprep.subr.bf16.mxu0 %v3123
  %3201 = vmatpush2.bf16.msra.mxu0 %v3122
  %3202 = vmatprep.mubr.bf16.mxu0 %v2923
  %3203 = vmatmul.mubr.bf16.gmra.mxu0 %v2922
  %v3204 = vpop.f32.mrf.mxu0
  %v3205 = vadd.f32 0.0, %v3204
  %v3206 = vpop.f32.mrf.mxu0
  %v3207 = vadd.f32 0.0, %v3206
  %v3208 = vpop.f32.mrf.mxu0
  %v3209 = vadd.f32 0.0, %v3208
  %v3210 = vpop.f32.mrf.mxu0
  %v3211 = vadd.f32 0.0, %v3210
  %3212 = vmatprep.mubr.bf16.mxu0 %v2925
  %3213 = vmatmul.mubr.bf16.gmra.mxu0 %v2924
  %v3214 = vpop.f32.mrf.mxu0
  %v3215 = vadd.f32 0.0, %v3214
  %v3216 = vpop.f32.mrf.mxu0
  %v3217 = vadd.f32 0.0, %v3216
  %v3218 = vpop.f32.mrf.mxu0
  %v3219 = vadd.f32 0.0, %v3218
  %v3220 = vpop.f32.mrf.mxu0
  %v3221 = vadd.f32 0.0, %v3220
  %3222 = vmatprep.mubr.bf16.mxu0 %v2927
  %3223 = vmatmul.mubr.bf16.gmra.mxu0 %v2926
  %v3224 = vpop.f32.mrf.mxu0
  %v3225 = vadd.f32 0.0, %v3224
  %v3226 = vpop.f32.mrf.mxu0
  %v3227 = vadd.f32 0.0, %v3226
  %v3228 = vpop.f32.mrf.mxu0
  %v3229 = vadd.f32 0.0, %v3228
  %v3230 = vpop.f32.mrf.mxu0
  %v3231 = vadd.f32 0.0, %v3230
  %3232 = vmatprep.mubr.bf16.mxu0 %v2929
  %3233 = vmatmul.mubr.bf16.gmra.mxu0 %v2928
  %v3234 = vpop.f32.mrf.mxu0
  %v3235 = vadd.f32 0.0, %v3234
  %v3236 = vpop.f32.mrf.mxu0
  %v3237 = vadd.f32 0.0, %v3236
  %v3238 = vpop.f32.mrf.mxu0
  %v3239 = vadd.f32 0.0, %v3238
  %v3240 = vpop.f32.mrf.mxu0
  %v3241 = vadd.f32 0.0, %v3240
  %3242 = vmatprep.mubr.bf16.mxu0 %v2931
  %3243 = vmatmul.mubr.bf16.gmra.mxu0 %v2930
  %v3244 = vpop.f32.mrf.mxu0
  %v3245 = vadd.f32 0.0, %v3244
  %v3246 = vpop.f32.mrf.mxu0
  %v3247 = vadd.f32 0.0, %v3246
  %v3248 = vpop.f32.mrf.mxu0
  %v3249 = vadd.f32 0.0, %v3248
  %v3250 = vpop.f32.mrf.mxu0
  %v3251 = vadd.f32 0.0, %v3250
  %3252 = vmatprep.mubr.bf16.mxu0 %v2933
  %3253 = vmatmul.mubr.bf16.gmra.mxu0 %v2932
  %v3254 = vpop.f32.mrf.mxu0
  %v3255 = vadd.f32 0.0, %v3254
  %v3256 = vpop.f32.mrf.mxu0
  %v3257 = vadd.f32 0.0, %v3256
  %v3258 = vpop.f32.mrf.mxu0
  %v3259 = vadd.f32 0.0, %v3258
  %v3260 = vpop.f32.mrf.mxu0
  %v3261 = vadd.f32 0.0, %v3260
  %3262 = vmatprep.mubr.bf16.mxu0 %v2935
  %3263 = vmatmul.mubr.bf16.gmra.mxu0 %v2934
  %v3264 = vpop.f32.mrf.mxu0
  %v3265 = vadd.f32 0.0, %v3264
  %v3266 = vpop.f32.mrf.mxu0
  %v3267 = vadd.f32 0.0, %v3266
  %v3268 = vpop.f32.mrf.mxu0
  %v3269 = vadd.f32 0.0, %v3268
  %v3270 = vpop.f32.mrf.mxu0
  %v3271 = vadd.f32 0.0, %v3270
  %3272 = vmatprep.mubr.bf16.mxu0 %v2937
  %3273 = vmatmul.mubr.bf16.gmra.mxu0 %v2936
  %v3274 = vpop.f32.mrf.mxu0
  %v3275 = vadd.f32 0.0, %v3274
  %v3276 = vpop.f32.mrf.mxu0
  %v3277 = vadd.f32 0.0, %v3276
  %v3278 = vpop.f32.mrf.mxu0
  %v3279 = vadd.f32 0.0, %v3278
  %v3280 = vpop.f32.mrf.mxu0
  %v3281 = vadd.f32 0.0, %v3280
  %3282 = vmatprep.mubr.bf16.mxu0 %v2939
  %3283 = vmatmul.mubr.bf16.gmra.mxu0 %v2938
  %v3284 = vpop.f32.mrf.mxu0
  %v3285 = vadd.f32 0.0, %v3284
  %v3286 = vpop.f32.mrf.mxu0
  %v3287 = vadd.f32 0.0, %v3286
  %v3288 = vpop.f32.mrf.mxu0
  %v3289 = vadd.f32 0.0, %v3288
  %v3290 = vpop.f32.mrf.mxu0
  %v3291 = vadd.f32 0.0, %v3290
  %3292 = vmatprep.mubr.bf16.mxu0 %v2941
  %3293 = vmatmul.mubr.bf16.gmra.mxu0 %v2940
  %v3294 = vpop.f32.mrf.mxu0
  %v3295 = vadd.f32 0.0, %v3294
  %v3296 = vpop.f32.mrf.mxu0
  %v3297 = vadd.f32 0.0, %v3296
  %v3298 = vpop.f32.mrf.mxu0
  %v3299 = vadd.f32 0.0, %v3298
  %v3300 = vpop.f32.mrf.mxu0
  %v3301 = vadd.f32 0.0, %v3300
  %3302 = vmatprep.mubr.bf16.mxu0 %v2943
  %3303 = vmatmul.mubr.bf16.gmra.mxu0 %v2942
  %v3304 = vpop.f32.mrf.mxu0
  %v3305 = vadd.f32 0.0, %v3304
  %v3306 = vpop.f32.mrf.mxu0
  %v3307 = vadd.f32 0.0, %v3306
  %v3308 = vpop.f32.mrf.mxu0
  %v3309 = vadd.f32 0.0, %v3308
  %v3310 = vpop.f32.mrf.mxu0
  %v3311 = vadd.f32 0.0, %v3310
  %3312 = vmatprep.mubr.bf16.mxu0 %v2945
  %3313 = vmatmul.mubr.bf16.gmra.mxu0 %v2944
  %v3314 = vpop.f32.mrf.mxu0
  %v3315 = vadd.f32 0.0, %v3314
  %v3316 = vpop.f32.mrf.mxu0
  %v3317 = vadd.f32 0.0, %v3316
  %v3318 = vpop.f32.mrf.mxu0
  %v3319 = vadd.f32 0.0, %v3318
  %v3320 = vpop.f32.mrf.mxu0
  %v3321 = vadd.f32 0.0, %v3320
  %3322 = vmatprep.mubr.bf16.mxu0 %v2947
  %3323 = vmatmul.mubr.bf16.gmra.mxu0 %v2946
  %v3324 = vpop.f32.mrf.mxu0
  %v3325 = vadd.f32 0.0, %v3324
  %v3326 = vpop.f32.mrf.mxu0
  %v3327 = vadd.f32 0.0, %v3326
  %v3328 = vpop.f32.mrf.mxu0
  %v3329 = vadd.f32 0.0, %v3328
  %v3330 = vpop.f32.mrf.mxu0
  %v3331 = vadd.f32 0.0, %v3330
  %3332 = vmatprep.mubr.bf16.mxu0 %v2949
  %3333 = vmatmul.mubr.bf16.gmra.mxu0 %v2948
  %v3334 = vpop.f32.mrf.mxu0
  %v3335 = vadd.f32 0.0, %v3334
  %v3336 = vpop.f32.mrf.mxu0
  %v3337 = vadd.f32 0.0, %v3336
  %v3338 = vpop.f32.mrf.mxu0
  %v3339 = vadd.f32 0.0, %v3338
  %v3340 = vpop.f32.mrf.mxu0
  %v3341 = vadd.f32 0.0, %v3340
  %3342 = vmatprep.mubr.bf16.mxu0 %v2951
  %3343 = vmatmul.mubr.bf16.gmra.mxu0 %v2950
  %v3344 = vpop.f32.mrf.mxu0
  %v3345 = vadd.f32 0.0, %v3344
  %v3346 = vpop.f32.mrf.mxu0
  %v3347 = vadd.f32 0.0, %v3346
  %v3348 = vpop.f32.mrf.mxu0
  %v3349 = vadd.f32 0.0, %v3348
  %v3350 = vpop.f32.mrf.mxu0
  %v3351 = vadd.f32 0.0, %v3350
  %3352 = vmatprep.mubr.bf16.mxu0 %v2953
  %3353 = vmatmul.mubr.bf16.gmra.mxu0 %v2952
  %v3354 = vpop.f32.mrf.mxu0
  %v3355 = vadd.f32 0.0, %v3354
  %v3356 = vpop.f32.mrf.mxu0
  %v3357 = vadd.f32 0.0, %v3356
  %v3358 = vpop.f32.mrf.mxu0
  %v3359 = vadd.f32 0.0, %v3358
  %v3360 = vpop.f32.mrf.mxu0
  %v3361 = vadd.f32 0.0, %v3360
  %3362 = vmatprep.mubr.bf16.mxu0 %v2955
  %3363 = vmatmul.mubr.bf16.gmra.mxu0 %v2954
  %v3364 = vpop.f32.mrf.mxu0
  %v3365 = vadd.f32 0.0, %v3364
  %v3366 = vpop.f32.mrf.mxu0
  %v3367 = vadd.f32 0.0, %v3366
  %v3368 = vpop.f32.mrf.mxu0
  %v3369 = vadd.f32 0.0, %v3368
  %v3370 = vpop.f32.mrf.mxu0
  %v3371 = vadd.f32 0.0, %v3370
  %3372 = vmatprep.mubr.bf16.mxu0 %v2957
  %3373 = vmatmul.mubr.bf16.gmra.mxu0 %v2956
  %v3374 = vpop.f32.mrf.mxu0
  %v3375 = vadd.f32 0.0, %v3374
  %v3376 = vpop.f32.mrf.mxu0
  %v3377 = vadd.f32 0.0, %v3376
  %v3378 = vpop.f32.mrf.mxu0
  %v3379 = vadd.f32 0.0, %v3378
  %v3380 = vpop.f32.mrf.mxu0
  %v3381 = vadd.f32 0.0, %v3380
  %3382 = vmatprep.mubr.bf16.mxu0 %v2959
  %3383 = vmatmul.mubr.bf16.gmra.mxu0 %v2958
  %v3384 = vpop.f32.mrf.mxu0
  %v3385 = vadd.f32 0.0, %v3384
  %v3386 = vpop.f32.mrf.mxu0
  %v3387 = vadd.f32 0.0, %v3386
  %v3388 = vpop.f32.mrf.mxu0
  %v3389 = vadd.f32 0.0, %v3388
  %v3390 = vpop.f32.mrf.mxu0
  %v3391 = vadd.f32 0.0, %v3390
  %3392 = vmatprep.mubr.bf16.mxu0 %v2961
  %3393 = vmatmul.mubr.bf16.gmra.mxu0 %v2960
  %v3394 = vpop.f32.mrf.mxu0
  %v3395 = vadd.f32 0.0, %v3394
  %v3396 = vpop.f32.mrf.mxu0
  %v3397 = vadd.f32 0.0, %v3396
  %v3398 = vpop.f32.mrf.mxu0
  %v3399 = vadd.f32 0.0, %v3398
  %v3400 = vpop.f32.mrf.mxu0
  %v3401 = vadd.f32 0.0, %v3400
  %3402 = vmatprep.mubr.bf16.mxu0 %v2963
  %3403 = vmatmul.mubr.bf16.gmra.mxu0 %v2962
  %v3404 = vpop.f32.mrf.mxu0
  %v3405 = vadd.f32 0.0, %v3404
  %v3406 = vpop.f32.mrf.mxu0
  %v3407 = vadd.f32 0.0, %v3406
  %v3408 = vpop.f32.mrf.mxu0
  %v3409 = vadd.f32 0.0, %v3408
  %v3410 = vpop.f32.mrf.mxu0
  %v3411 = vadd.f32 0.0, %v3410
  %3412 = vmatprep.mubr.bf16.mxu0 %v2965
  %3413 = vmatmul.mubr.bf16.gmra.mxu0 %v2964
  %v3414 = vpop.f32.mrf.mxu0
  %v3415 = vadd.f32 0.0, %v3414
  %v3416 = vpop.f32.mrf.mxu0
  %v3417 = vadd.f32 0.0, %v3416
  %v3418 = vpop.f32.mrf.mxu0
  %v3419 = vadd.f32 0.0, %v3418
  %v3420 = vpop.f32.mrf.mxu0
  %v3421 = vadd.f32 0.0, %v3420
  %3422 = vmatprep.mubr.bf16.mxu0 %v2967
  %3423 = vmatmul.mubr.bf16.gmra.mxu0 %v2966
  %v3424 = vpop.f32.mrf.mxu0
  %v3425 = vadd.f32 0.0, %v3424
  %v3426 = vpop.f32.mrf.mxu0
  %v3427 = vadd.f32 0.0, %v3426
  %v3428 = vpop.f32.mrf.mxu0
  %v3429 = vadd.f32 0.0, %v3428
  %v3430 = vpop.f32.mrf.mxu0
  %v3431 = vadd.f32 0.0, %v3430
  %3432 = vmatprep.mubr.bf16.mxu0 %v2969
  %3433 = vmatmul.mubr.bf16.gmra.mxu0 %v2968
  %v3434 = vpop.f32.mrf.mxu0
  %v3435 = vadd.f32 0.0, %v3434
  %v3436 = vpop.f32.mrf.mxu0
  %v3437 = vadd.f32 0.0, %v3436
  %v3438 = vpop.f32.mrf.mxu0
  %v3439 = vadd.f32 0.0, %v3438
  %v3440 = vpop.f32.mrf.mxu0
  %v3441 = vadd.f32 0.0, %v3440
  %3442 = vmatprep.mubr.bf16.mxu0 %v2971
  %3443 = vmatmul.mubr.bf16.gmra.mxu0 %v2970
  %v3444 = vpop.f32.mrf.mxu0
  %v3445 = vadd.f32 0.0, %v3444
  %v3446 = vpop.f32.mrf.mxu0
  %v3447 = vadd.f32 0.0, %v3446
  %v3448 = vpop.f32.mrf.mxu0
  %v3449 = vadd.f32 0.0, %v3448
  %v3450 = vpop.f32.mrf.mxu0
  %v3451 = vadd.f32 0.0, %v3450
  %3452 = vmatprep.mubr.bf16.mxu0 %v2973
  %3453 = vmatmul.mubr.bf16.gmra.mxu0 %v2972
  %v3454 = vpop.f32.mrf.mxu0
  %v3455 = vadd.f32 0.0, %v3454
  %v3456 = vpop.f32.mrf.mxu0
  %v3457 = vadd.f32 0.0, %v3456
  %v3458 = vpop.f32.mrf.mxu0
  %v3459 = vadd.f32 0.0, %v3458
  %v3460 = vpop.f32.mrf.mxu0
  %v3461 = vadd.f32 0.0, %v3460
  %3462 = vmatprep.mubr.bf16.mxu0 %v2975
  %3463 = vmatmul.mubr.bf16.gmra.mxu0 %v2974
  %v3464 = vpop.f32.mrf.mxu0
  %v3465 = vadd.f32 0.0, %v3464
  %v3466 = vpop.f32.mrf.mxu0
  %v3467 = vadd.f32 0.0, %v3466
  %v3468 = vpop.f32.mrf.mxu0
  %v3469 = vadd.f32 0.0, %v3468
  %v3470 = vpop.f32.mrf.mxu0
  %v3471 = vadd.f32 0.0, %v3470
  %3472 = vmatprep.mubr.bf16.mxu0 %v2977
  %3473 = vmatmul.mubr.bf16.gmra.mxu0 %v2976
  %v3474 = vpop.f32.mrf.mxu0
  %v3475 = vadd.f32 0.0, %v3474
  %v3476 = vpop.f32.mrf.mxu0
  %v3477 = vadd.f32 0.0, %v3476
  %v3478 = vpop.f32.mrf.mxu0
  %v3479 = vadd.f32 0.0, %v3478
  %v3480 = vpop.f32.mrf.mxu0
  %v3481 = vadd.f32 0.0, %v3480
  %3482 = vdwg.mxu0
  %v3483 = vmax.f32 %v3205, %v3207
  %v3484 = vmax.f32 %v3209, %v3211
  %v3485 = vmax.f32 %v3215, %v3217
  %v3486 = vmax.f32 %v3219, %v3221
  %v3487 = vmax.f32 %v3225, %v3227
  %v3488 = vmax.f32 %v3229, %v3231
  %v3489 = vmax.f32 %v3235, %v3237
  %v3490 = vmax.f32 %v3239, %v3241
  %v3491 = vmax.f32 %v3245, %v3247
  %v3492 = vmax.f32 %v3249, %v3251
  %v3493 = vmax.f32 %v3255, %v3257
  %v3494 = vmax.f32 %v3259, %v3261
  %v3495 = vmax.f32 %v3265, %v3267
  %v3496 = vmax.f32 %v3269, %v3271
  %v3497 = vmax.f32 %v3275, %v3277
  %v3498 = vmax.f32 %v3279, %v3281
  %v3499 = vmax.f32 %v3285, %v3287
  %v3500 = vmax.f32 %v3289, %v3291
  %v3501 = vmax.f32 %v3295, %v3297
  %v3502 = vmax.f32 %v3299, %v3301
  %v3503 = vmax.f32 %v3305, %v3307
  %v3504 = vmax.f32 %v3309, %v3311
  %v3505 = vmax.f32 %v3315, %v3317
  %v3506 = vmax.f32 %v3319, %v3321
  %v3507 = vmax.f32 %v3325, %v3327
  %v3508 = vmax.f32 %v3329, %v3331
  %v3509 = vmax.f32 %v3335, %v3337
  %v3510 = vmax.f32 %v3339, %v3341
  %v3511 = vmax.f32 %v3345, %v3347
  %v3512 = vmax.f32 %v3349, %v3351
  %v3513 = vmax.f32 %v3355, %v3357
  %v3514 = vmax.f32 %v3359, %v3361
  %v3515 = vmax.f32 %v3365, %v3367
  %v3516 = vmax.f32 %v3369, %v3371
  %v3517 = vmax.f32 %v3375, %v3377
  %v3518 = vmax.f32 %v3379, %v3381
  %v3519 = vmax.f32 %v3385, %v3387
  %v3520 = vmax.f32 %v3389, %v3391
  %v3521 = vmax.f32 %v3395, %v3397
  %v3522 = vmax.f32 %v3399, %v3401
  %v3523 = vmax.f32 %v3405, %v3407
  %v3524 = vmax.f32 %v3409, %v3411
  %v3525 = vmax.f32 %v3415, %v3417
  %v3526 = vmax.f32 %v3419, %v3421
  %v3527 = vmax.f32 %v3425, %v3427
  %v3528 = vmax.f32 %v3429, %v3431
  %v3529 = vmax.f32 %v3435, %v3437
  %v3530 = vmax.f32 %v3439, %v3441
  %v3531 = vmax.f32 %v3445, %v3447
  %v3532 = vmax.f32 %v3449, %v3451
  %v3533 = vmax.f32 %v3455, %v3457
  %v3534 = vmax.f32 %v3459, %v3461
  %v3535 = vmax.f32 %v3465, %v3467
  %v3536 = vmax.f32 %v3469, %v3471
  %v3537 = vmax.f32 %v3475, %v3477
  %v3538 = vmax.f32 %v3479, %v3481
  %v3539 = vmax.f32 %v3483, %v3485
  %v3540 = vmax.f32 %v3484, %v3486
  %v3541 = vmax.f32 %v3487, %v3489
  %v3542 = vmax.f32 %v3488, %v3490
  %v3543 = vmax.f32 %v3491, %v3493
  %v3544 = vmax.f32 %v3492, %v3494
  %v3545 = vmax.f32 %v3495, %v3497
  %v3546 = vmax.f32 %v3496, %v3498
  %v3547 = vmax.f32 %v3499, %v3501
  %v3548 = vmax.f32 %v3500, %v3502
  %v3549 = vmax.f32 %v3503, %v3505
  %v3550 = vmax.f32 %v3504, %v3506
  %v3551 = vmax.f32 %v3507, %v3509
  %v3552 = vmax.f32 %v3508, %v3510
  %v3553 = vmax.f32 %v3511, %v3513
  %v3554 = vmax.f32 %v3512, %v3514
  %v3555 = vmax.f32 %v3515, %v3517
  %v3556 = vmax.f32 %v3516, %v3518
  %v3557 = vmax.f32 %v3519, %v3521
  %v3558 = vmax.f32 %v3520, %v3522
  %v3559 = vmax.f32 %v3523, %v3525
  %v3560 = vmax.f32 %v3524, %v3526
  %v3561 = vmax.f32 %v3527, %v3529
  %v3562 = vmax.f32 %v3528, %v3530
  %v3563 = vmax.f32 %v3531, %v3533
  %v3564 = vmax.f32 %v3532, %v3534
  %v3565 = vmax.f32 %v3535, %v3537
  %v3566 = vmax.f32 %v3536, %v3538
  %v3567 = vpack.c.bf16 %v3540, %v3539
  %v3568 = vpack.c.bf16 %v3542, %v3541
  %v3569 = vpack.c.bf16 %v3544, %v3543
  %v3570 = vpack.c.bf16 %v3546, %v3545
  %v3571 = vpack.c.bf16 %v3548, %v3547
  %v3572 = vpack.c.bf16 %v3550, %v3549
  %v3573 = vpack.c.bf16 %v3552, %v3551
  %v3574 = vpack.c.bf16 %v3554, %v3553
  %v3575 = vpack.c.bf16 %v3556, %v3555
  %v3576 = vpack.c.bf16 %v3558, %v3557
  %v3577 = vpack.c.bf16 %v3560, %v3559
  %v3578 = vpack.c.bf16 %v3562, %v3561
  %v3579 = vpack.c.bf16 %v3564, %v3563
  %v3580 = vpack.c.bf16 %v3566, %v3565
  %v3581 = vld [vmem:[%s4] sm:$0xff]
  %v3582 = vld [vmem:[%s4 + $0x8] sm:$0xff]
  %v3583 = vld [vmem:[%s4 + $0x10] sm:$0xff]
  %v3584 = vld [vmem:[%s4 + $0x18] sm:$0xff]
  %v3585 = vld [vmem:[%s4 + $0x20] sm:$0xff]
  %v3586 = vld [vmem:[%s4 + $0x28] sm:$0xff]
  %v3587 = vld [vmem:[%s4 + $0x30] sm:$0xff]
  %v3588 = vld [vmem:[%s4 + $0x38] sm:$0xff]
  %v3589 = vld [vmem:[%s4 + $0x40] sm:$0xff]
  %v3590 = vld [vmem:[%s4 + $0x48] sm:$0xff]
  %v3591 = vld [vmem:[%s4 + $0x50] sm:$0xff]
  %v3592 = vld [vmem:[%s4 + $0x58] sm:$0xff]
  %v3593 = vld [vmem:[%s4 + $0x60] sm:$0xff]
  %v3594 = vld [vmem:[%s4 + $0x68] sm:$0xff]
  %v3595 = vld [vmem:[%s4 + $0x70] sm:$0xff]
  %v3596 = vld [vmem:[%s4 + $0x78] sm:$0xff]
  %s3597 = scalar_lea.vmem %s4, 128
  %v3598 = vld [vmem:[%s3597] sm:$0xff]
  %v3599 = vld [vmem:[%s3597 + $0x8] sm:$0xff]
  %v3600 = vld [vmem:[%s3597 + $0x10] sm:$0xff]
  %v3601 = vld [vmem:[%s3597 + $0x18] sm:$0xff]
  %v3602 = vld [vmem:[%s3597 + $0x20] sm:$0xff]
  %v3603 = vld [vmem:[%s3597 + $0x28] sm:$0xff]
  %v3604 = vld [vmem:[%s3597 + $0x30] sm:$0xff]
  %v3605 = vld [vmem:[%s3597 + $0x38] sm:$0xff]
  %v3606 = vld [vmem:[%s3597 + $0x40] sm:$0xff]
  %v3607 = vld [vmem:[%s3597 + $0x48] sm:$0xff]
  %v3608 = vld [vmem:[%s3597 + $0x50] sm:$0xff]
  %v3609 = vld [vmem:[%s3597 + $0x58] sm:$0xff]
  %v3610 = vld [vmem:[%s3597 + $0x60] sm:$0xff]
  %v3611 = vld [vmem:[%s3597 + $0x68] sm:$0xff]
  %v3612 = vld [vmem:[%s3597 + $0x70] sm:$0xff]
  %v3613 = vld [vmem:[%s3597 + $0x78] sm:$0xff]
  %v3630 = vunpack.c.l.b16 %v3598
  %v3631 = vunpack.c.h.b16 %v3598
  %v3632 = vunpack.c.l.b16 %v3599
  %v3633 = vunpack.c.h.b16 %v3599
  %v3634 = vunpack.c.l.b16 %v3600
  %v3635 = vunpack.c.h.b16 %v3600
  %v3636 = vunpack.c.l.b16 %v3601
  %v3637 = vunpack.c.h.b16 %v3601
  %v3638 = vunpack.c.l.b16 %v3602
  %v3639 = vunpack.c.h.b16 %v3602
  %v3640 = vunpack.c.l.b16 %v3603
  %v3641 = vunpack.c.h.b16 %v3603
  %v3642 = vunpack.c.l.b16 %v3604
  %v3643 = vunpack.c.h.b16 %v3604
  %v3644 = vunpack.c.l.b16 %v3605
  %v3645 = vunpack.c.h.b16 %v3605
  %v3646 = vunpack.c.l.b16 %v3606
  %v3647 = vunpack.c.h.b16 %v3606
  %v3648 = vunpack.c.l.b16 %v3607
  %v3649 = vunpack.c.h.b16 %v3607
  %v3650 = vunpack.c.l.b16 %v3608
  %v3651 = vunpack.c.h.b16 %v3608
  %v3652 = vunpack.c.l.b16 %v3609
  %v3653 = vunpack.c.h.b16 %v3609
  %v3654 = vunpack.c.l.b16 %v3610
  %v3655 = vunpack.c.h.b16 %v3610
  %v3656 = vunpack.c.l.b16 %v3611
  %v3657 = vunpack.c.h.b16 %v3611
  %v3658 = vunpack.c.l.b16 %v3612
  %v3659 = vunpack.c.h.b16 %v3612
  %v3660 = vunpack.c.l.b16 %v3613
  %v3661 = vunpack.c.h.b16 %v3613
  %v3662 = vpack.c.b16 %v3632, %v3630
  %v3663 = vpack.c.b16 %v3633, %v3631
  %v3664 = vpack.c.b16 %v3636, %v3634
  %v3665 = vpack.c.b16 %v3637, %v3635
  %v3666 = vpack.c.b16 %v3640, %v3638
  %v3667 = vpack.c.b16 %v3641, %v3639
  %v3668 = vpack.c.b16 %v3644, %v3642
  %v3669 = vpack.c.b16 %v3645, %v3643
  %v3670 = vpack.c.b16 %v3648, %v3646
  %v3671 = vpack.c.b16 %v3649, %v3647
  %v3672 = vpack.c.b16 %v3652, %v3650
  %v3673 = vpack.c.b16 %v3653, %v3651
  %v3674 = vpack.c.b16 %v3656, %v3654
  %v3675 = vpack.c.b16 %v3657, %v3655
  %v3676 = vpack.c.b16 %v3660, %v3658
  %v3677 = vpack.c.b16 %v3661, %v3659
  %3694 = vmatprep.subr.bf16.mxu0 %v3677
  %3695 = vmatpush1.bf16.msra.mxu0 %v3676
  %3696 = vmatprep.subr.bf16.mxu0 %v3675
  %3697 = vmatpush1.bf16.msra.mxu0 %v3674
  %3698 = vmatprep.subr.bf16.mxu0 %v3673
  %3699 = vmatpush1.bf16.msra.mxu0 %v3672
  %3700 = vmatprep.subr.bf16.mxu0 %v3671
  %3701 = vmatpush1.bf16.msra.mxu0 %v3670
  %3702 = vmatprep.subr.bf16.mxu0 %v3669
  %3703 = vmatpush1.bf16.msra.mxu0 %v3668
  %3704 = vmatprep.subr.bf16.mxu0 %v3667
  %3705 = vmatpush1.bf16.msra.mxu0 %v3666
  %3706 = vmatprep.subr.bf16.mxu0 %v3665
  %3707 = vmatpush1.bf16.msra.mxu0 %v3664
  %3708 = vmatprep.subr.bf16.mxu0 %v3663
  %3709 = vmatpush1.bf16.msra.mxu0 %v3662
  %3710 = vmatprep.subr.bf16.mxu0 0
  %3711 = vmatpush2.bf16.msra.mxu0 0
  %3712 = vmatprep.subr.bf16.mxu0 0
  %3713 = vmatpush2.bf16.msra.mxu0 0
  %3714 = vmatprep.subr.bf16.mxu0 0
  %3715 = vmatpush2.bf16.msra.mxu0 0
  %3716 = vmatprep.subr.bf16.mxu0 0
  %3717 = vmatpush2.bf16.msra.mxu0 0
  %3718 = vmatprep.subr.bf16.mxu0 0
  %3719 = vmatpush2.bf16.msra.mxu0 0
  %3720 = vmatprep.subr.bf16.mxu0 0
  %3721 = vmatpush2.bf16.msra.mxu0 0
  %3722 = vmatprep.subr.bf16.mxu0 0
  %3723 = vmatpush2.bf16.msra.mxu0 0
  %3724 = vmatprep.subr.bf16.mxu0 0
  %3725 = vmatpush2.bf16.msra.mxu0 0
  %3726 = vmatprep.mubr.bf16.mxu0 0
  %3727 = vmatmul.mubr.bf16.gmra.mxu0 %v3568
  %v3728 = vpop.f32.mrf.mxu0
  %v3729 = vadd.f32 0.0, %v3728
  %v3730 = vpop.f32.mrf.mxu0
  %v3731 = vadd.f32 0.0, %v3730
  %v3732 = vpop.f32.mrf.mxu0
  %v3733 = vadd.f32 0.0, %v3732
  %v3734 = vpop.f32.mrf.mxu0
  %v3735 = vadd.f32 0.0, %v3734
  %3736 = vmatprep.mubr.bf16.mxu0 0
  %3737 = vmatmul.mubr.bf16.gmra.mxu0 %v3569
  %v3738 = vpop.f32.mrf.mxu0
  %v3739 = vadd.f32 0.0, %v3738
  %v3740 = vpop.f32.mrf.mxu0
  %v3741 = vadd.f32 0.0, %v3740
  %v3742 = vpop.f32.mrf.mxu0
  %v3743 = vadd.f32 0.0, %v3742
  %v3744 = vpop.f32.mrf.mxu0
  %v3745 = vadd.f32 0.0, %v3744
  %3746 = vmatprep.mubr.bf16.mxu0 0
  %3747 = vmatmul.mubr.bf16.gmra.mxu0 %v3570
  %v3748 = vpop.f32.mrf.mxu0
  %v3749 = vadd.f32 0.0, %v3748
  %v3750 = vpop.f32.mrf.mxu0
  %v3751 = vadd.f32 0.0, %v3750
  %v3752 = vpop.f32.mrf.mxu0
  %v3753 = vadd.f32 0.0, %v3752
  %v3754 = vpop.f32.mrf.mxu0
  %v3755 = vadd.f32 0.0, %v3754
  %3756 = vmatprep.mubr.bf16.mxu0 0
  %3757 = vmatmul.mubr.bf16.gmra.mxu0 %v3571
  %v3758 = vpop.f32.mrf.mxu0
  %v3759 = vadd.f32 0.0, %v3758
  %v3760 = vpop.f32.mrf.mxu0
  %v3761 = vadd.f32 0.0, %v3760
  %v3762 = vpop.f32.mrf.mxu0
  %v3763 = vadd.f32 0.0, %v3762
  %v3764 = vpop.f32.mrf.mxu0
  %v3765 = vadd.f32 0.0, %v3764
  %3766 = vmatprep.mubr.bf16.mxu0 0
  %3767 = vmatmul.mubr.bf16.gmra.mxu0 %v3572
  %v3768 = vpop.f32.mrf.mxu0
  %v3769 = vadd.f32 0.0, %v3768
  %v3770 = vpop.f32.mrf.mxu0
  %v3771 = vadd.f32 0.0, %v3770
  %v3772 = vpop.f32.mrf.mxu0
  %v3773 = vadd.f32 0.0, %v3772
  %v3774 = vpop.f32.mrf.mxu0
  %v3775 = vadd.f32 0.0, %v3774
  %3776 = vmatprep.mubr.bf16.mxu0 0
  %3777 = vmatmul.mubr.bf16.gmra.mxu0 %v3573
  %v3778 = vpop.f32.mrf.mxu0
  %v3779 = vadd.f32 0.0, %v3778
  %v3780 = vpop.f32.mrf.mxu0
  %v3781 = vadd.f32 0.0, %v3780
  %v3782 = vpop.f32.mrf.mxu0
  %v3783 = vadd.f32 0.0, %v3782
  %v3784 = vpop.f32.mrf.mxu0
  %v3785 = vadd.f32 0.0, %v3784
  %3786 = vmatprep.mubr.bf16.mxu0 0
  %3787 = vmatmul.mubr.bf16.gmra.mxu0 %v3574
  %v3788 = vpop.f32.mrf.mxu0
  %v3789 = vadd.f32 0.0, %v3788
  %v3790 = vpop.f32.mrf.mxu0
  %v3791 = vadd.f32 0.0, %v3790
  %v3792 = vpop.f32.mrf.mxu0
  %v3793 = vadd.f32 0.0, %v3792
  %v3794 = vpop.f32.mrf.mxu0
  %v3795 = vadd.f32 0.0, %v3794
  %3796 = vmatprep.mubr.bf16.mxu0 0
  %3797 = vmatmul.mubr.bf16.gmra.mxu0 %v3575
  %v3798 = vpop.f32.mrf.mxu0
  %v3799 = vadd.f32 0.0, %v3798
  %v3800 = vpop.f32.mrf.mxu0
  %v3801 = vadd.f32 0.0, %v3800
  %v3802 = vpop.f32.mrf.mxu0
  %v3803 = vadd.f32 0.0, %v3802
  %v3804 = vpop.f32.mrf.mxu0
  %v3805 = vadd.f32 0.0, %v3804
  %3806 = vmatprep.mubr.bf16.mxu0 0
  %3807 = vmatmul.mubr.bf16.gmra.mxu0 %v3576
  %v3808 = vpop.f32.mrf.mxu0
  %v3809 = vadd.f32 0.0, %v3808
  %v3810 = vpop.f32.mrf.mxu0
  %v3811 = vadd.f32 0.0, %v3810
  %v3812 = vpop.f32.mrf.mxu0
  %v3813 = vadd.f32 0.0, %v3812
  %v3814 = vpop.f32.mrf.mxu0
  %v3815 = vadd.f32 0.0, %v3814
  %3816 = vmatprep.mubr.bf16.mxu0 0
  %3817 = vmatmul.mubr.bf16.gmra.mxu0 %v3577
  %v3818 = vpop.f32.mrf.mxu0
  %v3819 = vadd.f32 0.0, %v3818
  %v3820 = vpop.f32.mrf.mxu0
  %v3821 = vadd.f32 0.0, %v3820
  %v3822 = vpop.f32.mrf.mxu0
  %v3823 = vadd.f32 0.0, %v3822
  %v3824 = vpop.f32.mrf.mxu0
  %v3825 = vadd.f32 0.0, %v3824
  %3826 = vdwg.mxu0
  %v3843 = vunpack.c.l.b16 %v3581
  %v3844 = vunpack.c.h.b16 %v3581
  %v3845 = vunpack.c.l.b16 %v3582
  %v3846 = vunpack.c.h.b16 %v3582
  %v3847 = vunpack.c.l.b16 %v3583
  %v3848 = vunpack.c.h.b16 %v3583
  %v3849 = vunpack.c.l.b16 %v3584
  %v3850 = vunpack.c.h.b16 %v3584
  %v3851 = vunpack.c.l.b16 %v3585
  %v3852 = vunpack.c.h.b16 %v3585
  %v3853 = vunpack.c.l.b16 %v3586
  %v3854 = vunpack.c.h.b16 %v3586
  %v3855 = vunpack.c.l.b16 %v3587
  %v3856 = vunpack.c.h.b16 %v3587
  %v3857 = vunpack.c.l.b16 %v3588
  %v3858 = vunpack.c.h.b16 %v3588
  %v3859 = vunpack.c.l.b16 %v3589
  %v3860 = vunpack.c.h.b16 %v3589
  %v3861 = vunpack.c.l.b16 %v3590
  %v3862 = vunpack.c.h.b16 %v3590
  %v3863 = vunpack.c.l.b16 %v3591
  %v3864 = vunpack.c.h.b16 %v3591
  %v3865 = vunpack.c.l.b16 %v3592
  %v3866 = vunpack.c.h.b16 %v3592
  %v3867 = vunpack.c.l.b16 %v3593
  %v3868 = vunpack.c.h.b16 %v3593
  %v3869 = vunpack.c.l.b16 %v3594
  %v3870 = vunpack.c.h.b16 %v3594
  %v3871 = vunpack.c.l.b16 %v3595
  %v3872 = vunpack.c.h.b16 %v3595
  %v3873 = vunpack.c.l.b16 %v3596
  %v3874 = vunpack.c.h.b16 %v3596
  %v3875 = vpack.c.b16 %v3845, %v3843
  %v3876 = vpack.c.b16 %v3846, %v3844
  %v3877 = vpack.c.b16 %v3849, %v3847
  %v3878 = vpack.c.b16 %v3850, %v3848
  %v3879 = vpack.c.b16 %v3853, %v3851
  %v3880 = vpack.c.b16 %v3854, %v3852
  %v3881 = vpack.c.b16 %v3857, %v3855
  %v3882 = vpack.c.b16 %v3858, %v3856
  %v3883 = vpack.c.b16 %v3861, %v3859
  %v3884 = vpack.c.b16 %v3862, %v3860
  %v3885 = vpack.c.b16 %v3865, %v3863
  %v3886 = vpack.c.b16 %v3866, %v3864
  %v3887 = vpack.c.b16 %v3869, %v3867
  %v3888 = vpack.c.b16 %v3870, %v3868
  %v3889 = vpack.c.b16 %v3873, %v3871
  %v3890 = vpack.c.b16 %v3874, %v3872
  %3907 = vmatprep.subr.bf16.mxu0 %v3890
  %3908 = vmatpush1.bf16.msra.mxu0 %v3889
  %3909 = vmatprep.subr.bf16.mxu0 %v3888
  %3910 = vmatpush1.bf16.msra.mxu0 %v3887
  %3911 = vmatprep.subr.bf16.mxu0 %v3886
  %3912 = vmatpush1.bf16.msra.mxu0 %v3885
  %3913 = vmatprep.subr.bf16.mxu0 %v3884
  %3914 = vmatpush1.bf16.msra.mxu0 %v3883
  %3915 = vmatprep.subr.bf16.mxu0 %v3882
  %3916 = vmatpush1.bf16.msra.mxu0 %v3881
  %3917 = vmatprep.subr.bf16.mxu0 %v3880
  %3918 = vmatpush1.bf16.msra.mxu0 %v3879
  %3919 = vmatprep.subr.bf16.mxu0 %v3878
  %3920 = vmatpush1.bf16.msra.mxu0 %v3877
  %3921 = vmatprep.subr.bf16.mxu0 %v3876
  %3922 = vmatpush1.bf16.msra.mxu0 %v3875
  %3923 = vmatprep.subr.bf16.mxu0 0
  %3924 = vmatpush2.bf16.msra.mxu0 0
  %3925 = vmatprep.subr.bf16.mxu0 0
  %3926 = vmatpush2.bf16.msra.mxu0 0
  %3927 = vmatprep.subr.bf16.mxu0 0
  %3928 = vmatpush2.bf16.msra.mxu0 0
  %3929 = vmatprep.subr.bf16.mxu0 0
  %3930 = vmatpush2.bf16.msra.mxu0 0
  %3931 = vmatprep.subr.bf16.mxu0 0
  %3932 = vmatpush2.bf16.msra.mxu0 0
  %3933 = vmatprep.subr.bf16.mxu0 0
  %3934 = vmatpush2.bf16.msra.mxu0 0
  %3935 = vmatprep.subr.bf16.mxu0 0
  %3936 = vmatpush2.bf16.msra.mxu0 0
  %3937 = vmatprep.subr.bf16.mxu0 0
  %3938 = vmatpush2.bf16.msra.mxu0 0
  %3939 = vmatprep.mubr.bf16.mxu0 0
  %3940 = vmatmul.mubr.bf16.gmra.mxu0 %v3567
  %v3941 = vpop.f32.mrf.mxu0
  %v3942 = vadd.f32 %v3729, %v3941
  %v3943 = vpop.f32.mrf.mxu0
  %v3944 = vadd.f32 %v3731, %v3943
  %v3945 = vpop.f32.mrf.mxu0
  %v3946 = vadd.f32 %v3733, %v3945
  %v3947 = vpop.f32.mrf.mxu0
  %v3948 = vadd.f32 %v3735, %v3947
  %3949 = vmatprep.mubr.bf16.mxu0 0
  %3950 = vmatmul.mubr.bf16.gmra.mxu0 %v3568
  %v3951 = vpop.f32.mrf.mxu0
  %v3952 = vadd.f32 %v3739, %v3951
  %v3953 = vpop.f32.mrf.mxu0
  %v3954 = vadd.f32 %v3741, %v3953
  %v3955 = vpop.f32.mrf.mxu0
  %v3956 = vadd.f32 %v3743, %v3955
  %v3957 = vpop.f32.mrf.mxu0
  %v3958 = vadd.f32 %v3745, %v3957
  %3959 = vmatprep.mubr.bf16.mxu0 0
  %3960 = vmatmul.mubr.bf16.gmra.mxu0 %v3569
  %v3961 = vpop.f32.mrf.mxu0
  %v3962 = vadd.f32 %v3749, %v3961
  %v3963 = vpop.f32.mrf.mxu0
  %v3964 = vadd.f32 %v3751, %v3963
  %v3965 = vpop.f32.mrf.mxu0
  %v3966 = vadd.f32 %v3753, %v3965
  %v3967 = vpop.f32.mrf.mxu0
  %v3968 = vadd.f32 %v3755, %v3967
  %3969 = vmatprep.mubr.bf16.mxu0 0
  %3970 = vmatmul.mubr.bf16.gmra.mxu0 %v3570
  %v3971 = vpop.f32.mrf.mxu0
  %v3972 = vadd.f32 %v3759, %v3971
  %v3973 = vpop.f32.mrf.mxu0
  %v3974 = vadd.f32 %v3761, %v3973
  %v3975 = vpop.f32.mrf.mxu0
  %v3976 = vadd.f32 %v3763, %v3975
  %v3977 = vpop.f32.mrf.mxu0
  %v3978 = vadd.f32 %v3765, %v3977
  %3979 = vmatprep.mubr.bf16.mxu0 0
  %3980 = vmatmul.mubr.bf16.gmra.mxu0 %v3571
  %v3981 = vpop.f32.mrf.mxu0
  %v3982 = vadd.f32 %v3769, %v3981
  %v3983 = vpop.f32.mrf.mxu0
  %v3984 = vadd.f32 %v3771, %v3983
  %v3985 = vpop.f32.mrf.mxu0
  %v3986 = vadd.f32 %v3773, %v3985
  %v3987 = vpop.f32.mrf.mxu0
  %v3988 = vadd.f32 %v3775, %v3987
  %3989 = vmatprep.mubr.bf16.mxu0 0
  %3990 = vmatmul.mubr.bf16.gmra.mxu0 %v3572
  %v3991 = vpop.f32.mrf.mxu0
  %v3992 = vadd.f32 %v3779, %v3991
  %v3993 = vpop.f32.mrf.mxu0
  %v3994 = vadd.f32 %v3781, %v3993
  %v3995 = vpop.f32.mrf.mxu0
  %v3996 = vadd.f32 %v3783, %v3995
  %v3997 = vpop.f32.mrf.mxu0
  %v3998 = vadd.f32 %v3785, %v3997
  %3999 = vmatprep.mubr.bf16.mxu0 0
  %4000 = vmatmul.mubr.bf16.gmra.mxu0 %v3573
  %v4001 = vpop.f32.mrf.mxu0
  %v4002 = vadd.f32 %v3789, %v4001
  %v4003 = vpop.f32.mrf.mxu0
  %v4004 = vadd.f32 %v3791, %v4003
  %v4005 = vpop.f32.mrf.mxu0
  %v4006 = vadd.f32 %v3793, %v4005
  %v4007 = vpop.f32.mrf.mxu0
  %v4008 = vadd.f32 %v3795, %v4007
  %4009 = vmatprep.mubr.bf16.mxu0 0
  %4010 = vmatmul.mubr.bf16.gmra.mxu0 %v3574
  %v4011 = vpop.f32.mrf.mxu0
  %v4012 = vadd.f32 %v3799, %v4011
  %v4013 = vpop.f32.mrf.mxu0
  %v4014 = vadd.f32 %v3801, %v4013
  %v4015 = vpop.f32.mrf.mxu0
  %v4016 = vadd.f32 %v3803, %v4015
  %v4017 = vpop.f32.mrf.mxu0
  %v4018 = vadd.f32 %v3805, %v4017
  %4019 = vmatprep.mubr.bf16.mxu0 0
  %4020 = vmatmul.mubr.bf16.gmra.mxu0 %v3575
  %v4021 = vpop.f32.mrf.mxu0
  %v4022 = vadd.f32 %v3809, %v4021
  %v4023 = vpop.f32.mrf.mxu0
  %v4024 = vadd.f32 %v3811, %v4023
  %v4025 = vpop.f32.mrf.mxu0
  %v4026 = vadd.f32 %v3813, %v4025
  %v4027 = vpop.f32.mrf.mxu0
  %v4028 = vadd.f32 %v3815, %v4027
  %4029 = vmatprep.mubr.bf16.mxu0 0
  %4030 = vmatmul.mubr.bf16.gmra.mxu0 %v3576
  %v4031 = vpop.f32.mrf.mxu0
  %v4032 = vadd.f32 %v3819, %v4031
  %v4033 = vpop.f32.mrf.mxu0
  %v4034 = vadd.f32 %v3821, %v4033
  %v4035 = vpop.f32.mrf.mxu0
  %v4036 = vadd.f32 %v3823, %v4035
  %v4037 = vpop.f32.mrf.mxu0
  %v4038 = vadd.f32 %v3825, %v4037
  %4039 = vdwg.mxu0
  %s4040 = scalar_lea.vmem %s4, 256
  %v4041 = vld [vmem:[%s4040] sm:$0xff]
  %v4042 = vld [vmem:[%s4040 + $0x8] sm:$0xff]
  %v4043 = vld [vmem:[%s4040 + $0x10] sm:$0xff]
  %v4044 = vld [vmem:[%s4040 + $0x18] sm:$0xff]
  %v4045 = vld [vmem:[%s4040 + $0x20] sm:$0xff]
  %v4046 = vld [vmem:[%s4040 + $0x28] sm:$0xff]
  %v4047 = vld [vmem:[%s4040 + $0x30] sm:$0xff]
  %v4048 = vld [vmem:[%s4040 + $0x38] sm:$0xff]
  %v4049 = vld [vmem:[%s4040 + $0x40] sm:$0xff]
  %v4050 = vld [vmem:[%s4040 + $0x48] sm:$0xff]
  %v4051 = vld [vmem:[%s4040 + $0x50] sm:$0xff]
  %v4052 = vld [vmem:[%s4040 + $0x58] sm:$0xff]
  %v4053 = vld [vmem:[%s4040 + $0x60] sm:$0xff]
  %v4054 = vld [vmem:[%s4040 + $0x68] sm:$0xff]
  %v4055 = vld [vmem:[%s4040 + $0x70] sm:$0xff]
  %v4056 = vld [vmem:[%s4040 + $0x78] sm:$0xff]
  %v4073 = vunpack.c.l.b16 %v4041
  %v4074 = vunpack.c.h.b16 %v4041
  %v4075 = vunpack.c.l.b16 %v4042
  %v4076 = vunpack.c.h.b16 %v4042
  %v4077 = vunpack.c.l.b16 %v4043
  %v4078 = vunpack.c.h.b16 %v4043
  %v4079 = vunpack.c.l.b16 %v4044
  %v4080 = vunpack.c.h.b16 %v4044
  %v4081 = vunpack.c.l.b16 %v4045
  %v4082 = vunpack.c.h.b16 %v4045
  %v4083 = vunpack.c.l.b16 %v4046
  %v4084 = vunpack.c.h.b16 %v4046
  %v4085 = vunpack.c.l.b16 %v4047
  %v4086 = vunpack.c.h.b16 %v4047
  %v4087 = vunpack.c.l.b16 %v4048
  %v4088 = vunpack.c.h.b16 %v4048
  %v4089 = vunpack.c.l.b16 %v4049
  %v4090 = vunpack.c.h.b16 %v4049
  %v4091 = vunpack.c.l.b16 %v4050
  %v4092 = vunpack.c.h.b16 %v4050
  %v4093 = vunpack.c.l.b16 %v4051
  %v4094 = vunpack.c.h.b16 %v4051
  %v4095 = vunpack.c.l.b16 %v4052
  %v4096 = vunpack.c.h.b16 %v4052
  %v4097 = vunpack.c.l.b16 %v4053
  %v4098 = vunpack.c.h.b16 %v4053
  %v4099 = vunpack.c.l.b16 %v4054
  %v4100 = vunpack.c.h.b16 %v4054
  %v4101 = vunpack.c.l.b16 %v4055
  %v4102 = vunpack.c.h.b16 %v4055
  %v4103 = vunpack.c.l.b16 %v4056
  %v4104 = vunpack.c.h.b16 %v4056
  %v4105 = vpack.c.b16 %v4075, %v4073
  %v4106 = vpack.c.b16 %v4076, %v4074
  %v4107 = vpack.c.b16 %v4079, %v4077
  %v4108 = vpack.c.b16 %v4080, %v4078
  %v4109 = vpack.c.b16 %v4083, %v4081
  %v4110 = vpack.c.b16 %v4084, %v4082
  %v4111 = vpack.c.b16 %v4087, %v4085
  %v4112 = vpack.c.b16 %v4088, %v4086
  %v4113 = vpack.c.b16 %v4091, %v4089
  %v4114 = vpack.c.b16 %v4092, %v4090
  %v4115 = vpack.c.b16 %v4095, %v4093
  %v4116 = vpack.c.b16 %v4096, %v4094
  %v4117 = vpack.c.b16 %v4099, %v4097
  %v4118 = vpack.c.b16 %v4100, %v4098
  %v4119 = vpack.c.b16 %v4103, %v4101
  %v4120 = vpack.c.b16 %v4104, %v4102
  %4137 = vmatprep.subr.bf16.mxu0 %v4120
  %4138 = vmatpush1.bf16.msra.mxu0 %v4119
  %4139 = vmatprep.subr.bf16.mxu0 %v4118
  %4140 = vmatpush1.bf16.msra.mxu0 %v4117
  %4141 = vmatprep.subr.bf16.mxu0 %v4116
  %4142 = vmatpush1.bf16.msra.mxu0 %v4115
  %4143 = vmatprep.subr.bf16.mxu0 %v4114
  %4144 = vmatpush1.bf16.msra.mxu0 %v4113
  %4145 = vmatprep.subr.bf16.mxu0 %v4112
  %4146 = vmatpush1.bf16.msra.mxu0 %v4111
  %4147 = vmatprep.subr.bf16.mxu0 %v4110
  %4148 = vmatpush1.bf16.msra.mxu0 %v4109
  %4149 = vmatprep.subr.bf16.mxu0 %v4108
  %4150 = vmatpush1.bf16.msra.mxu0 %v4107
  %4151 = vmatprep.subr.bf16.mxu0 %v4106
  %4152 = vmatpush1.bf16.msra.mxu0 %v4105
  %4153 = vmatprep.subr.bf16.mxu0 0
  %4154 = vmatpush2.bf16.msra.mxu0 0
  %4155 = vmatprep.subr.bf16.mxu0 0
  %4156 = vmatpush2.bf16.msra.mxu0 0
  %4157 = vmatprep.subr.bf16.mxu0 0
  %4158 = vmatpush2.bf16.msra.mxu0 0
  %4159 = vmatprep.subr.bf16.mxu0 0
  %4160 = vmatpush2.bf16.msra.mxu0 0
  %4161 = vmatprep.subr.bf16.mxu0 0
  %4162 = vmatpush2.bf16.msra.mxu0 0
  %4163 = vmatprep.subr.bf16.mxu0 0
  %4164 = vmatpush2.bf16.msra.mxu0 0
  %4165 = vmatprep.subr.bf16.mxu0 0
  %4166 = vmatpush2.bf16.msra.mxu0 0
  %4167 = vmatprep.subr.bf16.mxu0 0
  %4168 = vmatpush2.bf16.msra.mxu0 0
  %4169 = vmatprep.mubr.bf16.mxu0 0
  %4170 = vmatmul.mubr.bf16.gmra.mxu0 %v3569
  %v4171 = vpop.f32.mrf.mxu0
  %v4172 = vadd.f32 0.0, %v4171
  %v4173 = vpop.f32.mrf.mxu0
  %v4174 = vadd.f32 0.0, %v4173
  %v4175 = vpop.f32.mrf.mxu0
  %v4176 = vadd.f32 0.0, %v4175
  %v4177 = vpop.f32.mrf.mxu0
  %v4178 = vadd.f32 0.0, %v4177
  %4179 = vmatprep.mubr.bf16.mxu0 0
  %4180 = vmatmul.mubr.bf16.gmra.mxu0 %v3570
  %v4181 = vpop.f32.mrf.mxu0
  %v4182 = vadd.f32 0.0, %v4181
  %v4183 = vpop.f32.mrf.mxu0
  %v4184 = vadd.f32 0.0, %v4183
  %v4185 = vpop.f32.mrf.mxu0
  %v4186 = vadd.f32 0.0, %v4185
  %v4187 = vpop.f32.mrf.mxu0
  %v4188 = vadd.f32 0.0, %v4187
  %4189 = vmatprep.mubr.bf16.mxu0 0
  %4190 = vmatmul.mubr.bf16.gmra.mxu0 %v3571
  %v4191 = vpop.f32.mrf.mxu0
  %v4192 = vadd.f32 0.0, %v4191
  %v4193 = vpop.f32.mrf.mxu0
  %v4194 = vadd.f32 0.0, %v4193
  %v4195 = vpop.f32.mrf.mxu0
  %v4196 = vadd.f32 0.0, %v4195
  %v4197 = vpop.f32.mrf.mxu0
  %v4198 = vadd.f32 0.0, %v4197
  %4199 = vmatprep.mubr.bf16.mxu0 0
  %4200 = vmatmul.mubr.bf16.gmra.mxu0 %v3572
  %v4201 = vpop.f32.mrf.mxu0
  %v4202 = vadd.f32 0.0, %v4201
  %v4203 = vpop.f32.mrf.mxu0
  %v4204 = vadd.f32 0.0, %v4203
  %v4205 = vpop.f32.mrf.mxu0
  %v4206 = vadd.f32 0.0, %v4205
  %v4207 = vpop.f32.mrf.mxu0
  %v4208 = vadd.f32 0.0, %v4207
  %4209 = vmatprep.mubr.bf16.mxu0 0
  %4210 = vmatmul.mubr.bf16.gmra.mxu0 %v3573
  %v4211 = vpop.f32.mrf.mxu0
  %v4212 = vadd.f32 0.0, %v4211
  %v4213 = vpop.f32.mrf.mxu0
  %v4214 = vadd.f32 0.0, %v4213
  %v4215 = vpop.f32.mrf.mxu0
  %v4216 = vadd.f32 0.0, %v4215
  %v4217 = vpop.f32.mrf.mxu0
  %v4218 = vadd.f32 0.0, %v4217
  %4219 = vmatprep.mubr.bf16.mxu0 0
  %4220 = vmatmul.mubr.bf16.gmra.mxu0 %v3574
  %v4221 = vpop.f32.mrf.mxu0
  %v4222 = vadd.f32 0.0, %v4221
  %v4223 = vpop.f32.mrf.mxu0
  %v4224 = vadd.f32 0.0, %v4223
  %v4225 = vpop.f32.mrf.mxu0
  %v4226 = vadd.f32 0.0, %v4225
  %v4227 = vpop.f32.mrf.mxu0
  %v4228 = vadd.f32 0.0, %v4227
  %4229 = vmatprep.mubr.bf16.mxu0 0
  %4230 = vmatmul.mubr.bf16.gmra.mxu0 %v3575
  %v4231 = vpop.f32.mrf.mxu0
  %v4232 = vadd.f32 0.0, %v4231
  %v4233 = vpop.f32.mrf.mxu0
  %v4234 = vadd.f32 0.0, %v4233
  %v4235 = vpop.f32.mrf.mxu0
  %v4236 = vadd.f32 0.0, %v4235
  %v4237 = vpop.f32.mrf.mxu0
  %v4238 = vadd.f32 0.0, %v4237
  %4239 = vmatprep.mubr.bf16.mxu0 0
  %4240 = vmatmul.mubr.bf16.gmra.mxu0 %v3576
  %v4241 = vpop.f32.mrf.mxu0
  %v4242 = vadd.f32 0.0, %v4241
  %v4243 = vpop.f32.mrf.mxu0
  %v4244 = vadd.f32 0.0, %v4243
  %v4245 = vpop.f32.mrf.mxu0
  %v4246 = vadd.f32 0.0, %v4245
  %v4247 = vpop.f32.mrf.mxu0
  %v4248 = vadd.f32 0.0, %v4247
  %4249 = vmatprep.mubr.bf16.mxu0 0
  %4250 = vmatmul.mubr.bf16.gmra.mxu0 %v3577
  %v4251 = vpop.f32.mrf.mxu0
  %v4252 = vadd.f32 0.0, %v4251
  %v4253 = vpop.f32.mrf.mxu0
  %v4254 = vadd.f32 0.0, %v4253
  %v4255 = vpop.f32.mrf.mxu0
  %v4256 = vadd.f32 0.0, %v4255
  %v4257 = vpop.f32.mrf.mxu0
  %v4258 = vadd.f32 0.0, %v4257
  %4259 = vmatprep.mubr.bf16.mxu0 0
  %4260 = vmatmul.mubr.bf16.gmra.mxu0 %v3578
  %v4261 = vpop.f32.mrf.mxu0
  %v4262 = vadd.f32 0.0, %v4261
  %v4263 = vpop.f32.mrf.mxu0
  %v4264 = vadd.f32 0.0, %v4263
  %v4265 = vpop.f32.mrf.mxu0
  %v4266 = vadd.f32 0.0, %v4265
  %v4267 = vpop.f32.mrf.mxu0
  %v4268 = vadd.f32 0.0, %v4267
  %4269 = vdwg.mxu0
  %v4270 = vadd.f32 %v3942, %v4172
  %v4271 = vadd.f32 %v3944, %v4174
  %v4272 = vadd.f32 %v3946, %v4176
  %v4273 = vadd.f32 %v3948, %v4178
  %v4274 = vadd.f32 %v3952, %v4182
  %v4275 = vadd.f32 %v3954, %v4184
  %v4276 = vadd.f32 %v3956, %v4186
  %v4277 = vadd.f32 %v3958, %v4188
  %v4278 = vadd.f32 %v3962, %v4192
  %v4279 = vadd.f32 %v3964, %v4194
  %v4280 = vadd.f32 %v3966, %v4196
  %v4281 = vadd.f32 %v3968, %v4198
  %v4282 = vadd.f32 %v3972, %v4202
  %v4283 = vadd.f32 %v3974, %v4204
  %v4284 = vadd.f32 %v3976, %v4206
  %v4285 = vadd.f32 %v3978, %v4208
  %v4286 = vadd.f32 %v3982, %v4212
  %v4287 = vadd.f32 %v3984, %v4214
  %v4288 = vadd.f32 %v3986, %v4216
  %v4289 = vadd.f32 %v3988, %v4218
  %v4290 = vadd.f32 %v3992, %v4222
  %v4291 = vadd.f32 %v3994, %v4224
  %v4292 = vadd.f32 %v3996, %v4226
  %v4293 = vadd.f32 %v3998, %v4228
  %v4294 = vadd.f32 %v4002, %v4232
  %v4295 = vadd.f32 %v4004, %v4234
  %v4296 = vadd.f32 %v4006, %v4236
  %v4297 = vadd.f32 %v4008, %v4238
  %v4298 = vadd.f32 %v4012, %v4242
  %v4299 = vadd.f32 %v4014, %v4244
  %v4300 = vadd.f32 %v4016, %v4246
  %v4301 = vadd.f32 %v4018, %v4248
  %v4302 = vadd.f32 %v4022, %v4252
  %v4303 = vadd.f32 %v4024, %v4254
  %v4304 = vadd.f32 %v4026, %v4256
  %v4305 = vadd.f32 %v4028, %v4258
  %v4306 = vadd.f32 %v4032, %v4262
  %v4307 = vadd.f32 %v4034, %v4264
  %v4308 = vadd.f32 %v4036, %v4266
  %v4309 = vadd.f32 %v4038, %v4268
  %s4310 = scalar_lea.vmem %s4, 384
  %v4311 = vld [vmem:[%s4310] sm:$0xff]
  %v4312 = vld [vmem:[%s4310 + $0x8] sm:$0xff]
  %v4313 = vld [vmem:[%s4310 + $0x10] sm:$0xff]
  %v4314 = vld [vmem:[%s4310 + $0x18] sm:$0xff]
  %v4315 = vld [vmem:[%s4310 + $0x20] sm:$0xff]
  %v4316 = vld [vmem:[%s4310 + $0x28] sm:$0xff]
  %v4317 = vld [vmem:[%s4310 + $0x30] sm:$0xff]
  %v4318 = vld [vmem:[%s4310 + $0x38] sm:$0xff]
  %v4319 = vld [vmem:[%s4310 + $0x40] sm:$0xff]
  %v4320 = vld [vmem:[%s4310 + $0x48] sm:$0xff]
  %v4321 = vld [vmem:[%s4310 + $0x50] sm:$0xff]
  %v4322 = vld [vmem:[%s4310 + $0x58] sm:$0xff]
  %v4323 = vld [vmem:[%s4310 + $0x60] sm:$0xff]
  %v4324 = vld [vmem:[%s4310 + $0x68] sm:$0xff]
  %v4325 = vld [vmem:[%s4310 + $0x70] sm:$0xff]
  %v4326 = vld [vmem:[%s4310 + $0x78] sm:$0xff]
  %v4343 = vunpack.c.l.b16 %v4311
  %v4344 = vunpack.c.h.b16 %v4311
  %v4345 = vunpack.c.l.b16 %v4312
  %v4346 = vunpack.c.h.b16 %v4312
  %v4347 = vunpack.c.l.b16 %v4313
  %v4348 = vunpack.c.h.b16 %v4313
  %v4349 = vunpack.c.l.b16 %v4314
  %v4350 = vunpack.c.h.b16 %v4314
  %v4351 = vunpack.c.l.b16 %v4315
  %v4352 = vunpack.c.h.b16 %v4315
  %v4353 = vunpack.c.l.b16 %v4316
  %v4354 = vunpack.c.h.b16 %v4316
  %v4355 = vunpack.c.l.b16 %v4317
  %v4356 = vunpack.c.h.b16 %v4317
  %v4357 = vunpack.c.l.b16 %v4318
  %v4358 = vunpack.c.h.b16 %v4318
  %v4359 = vunpack.c.l.b16 %v4319
  %v4360 = vunpack.c.h.b16 %v4319
  %v4361 = vunpack.c.l.b16 %v4320
  %v4362 = vunpack.c.h.b16 %v4320
  %v4363 = vunpack.c.l.b16 %v4321
  %v4364 = vunpack.c.h.b16 %v4321
  %v4365 = vunpack.c.l.b16 %v4322
  %v4366 = vunpack.c.h.b16 %v4322
  %v4367 = vunpack.c.l.b16 %v4323
  %v4368 = vunpack.c.h.b16 %v4323
  %v4369 = vunpack.c.l.b16 %v4324
  %v4370 = vunpack.c.h.b16 %v4324
  %v4371 = vunpack.c.l.b16 %v4325
  %v4372 = vunpack.c.h.b16 %v4325
  %v4373 = vunpack.c.l.b16 %v4326
  %v4374 = vunpack.c.h.b16 %v4326
  %v4375 = vpack.c.b16 %v4345, %v4343
  %v4376 = vpack.c.b16 %v4346, %v4344
  %v4377 = vpack.c.b16 %v4349, %v4347
  %v4378 = vpack.c.b16 %v4350, %v4348
  %v4379 = vpack.c.b16 %v4353, %v4351
  %v4380 = vpack.c.b16 %v4354, %v4352
  %v4381 = vpack.c.b16 %v4357, %v4355
  %v4382 = vpack.c.b16 %v4358, %v4356
  %v4383 = vpack.c.b16 %v4361, %v4359
  %v4384 = vpack.c.b16 %v4362, %v4360
  %v4385 = vpack.c.b16 %v4365, %v4363
  %v4386 = vpack.c.b16 %v4366, %v4364
  %v4387 = vpack.c.b16 %v4369, %v4367
  %v4388 = vpack.c.b16 %v4370, %v4368
  %v4389 = vpack.c.b16 %v4373, %v4371
  %v4390 = vpack.c.b16 %v4374, %v4372
  %4407 = vmatprep.subr.bf16.mxu0 %v4390
  %4408 = vmatpush1.bf16.msra.mxu0 %v4389
  %4409 = vmatprep.subr.bf16.mxu0 %v4388
  %4410 = vmatpush1.bf16.msra.mxu0 %v4387
  %4411 = vmatprep.subr.bf16.mxu0 %v4386
  %4412 = vmatpush1.bf16.msra.mxu0 %v4385
  %4413 = vmatprep.subr.bf16.mxu0 %v4384
  %4414 = vmatpush1.bf16.msra.mxu0 %v4383
  %4415 = vmatprep.subr.bf16.mxu0 %v4382
  %4416 = vmatpush1.bf16.msra.mxu0 %v4381
  %4417 = vmatprep.subr.bf16.mxu0 %v4380
  %4418 = vmatpush1.bf16.msra.mxu0 %v4379
  %4419 = vmatprep.subr.bf16.mxu0 %v4378
  %4420 = vmatpush1.bf16.msra.mxu0 %v4377
  %4421 = vmatprep.subr.bf16.mxu0 %v4376
  %4422 = vmatpush1.bf16.msra.mxu0 %v4375
  %4423 = vmatprep.subr.bf16.mxu0 0
  %4424 = vmatpush2.bf16.msra.mxu0 0
  %4425 = vmatprep.subr.bf16.mxu0 0
  %4426 = vmatpush2.bf16.msra.mxu0 0
  %4427 = vmatprep.subr.bf16.mxu0 0
  %4428 = vmatpush2.bf16.msra.mxu0 0
  %4429 = vmatprep.subr.bf16.mxu0 0
  %4430 = vmatpush2.bf16.msra.mxu0 0
  %4431 = vmatprep.subr.bf16.mxu0 0
  %4432 = vmatpush2.bf16.msra.mxu0 0
  %4433 = vmatprep.subr.bf16.mxu0 0
  %4434 = vmatpush2.bf16.msra.mxu0 0
  %4435 = vmatprep.subr.bf16.mxu0 0
  %4436 = vmatpush2.bf16.msra.mxu0 0
  %4437 = vmatprep.subr.bf16.mxu0 0
  %4438 = vmatpush2.bf16.msra.mxu0 0
  %4439 = vmatprep.mubr.bf16.mxu0 0
  %4440 = vmatmul.mubr.bf16.gmra.mxu0 %v3570
  %v4441 = vpop.f32.mrf.mxu0
  %v4442 = vadd.f32 0.0, %v4441
  %v4443 = vpop.f32.mrf.mxu0
  %v4444 = vadd.f32 0.0, %v4443
  %v4445 = vpop.f32.mrf.mxu0
  %v4446 = vadd.f32 0.0, %v4445
  %v4447 = vpop.f32.mrf.mxu0
  %v4448 = vadd.f32 0.0, %v4447
  %4449 = vmatprep.mubr.bf16.mxu0 0
  %4450 = vmatmul.mubr.bf16.gmra.mxu0 %v3571
  %v4451 = vpop.f32.mrf.mxu0
  %v4452 = vadd.f32 0.0, %v4451
  %v4453 = vpop.f32.mrf.mxu0
  %v4454 = vadd.f32 0.0, %v4453
  %v4455 = vpop.f32.mrf.mxu0
  %v4456 = vadd.f32 0.0, %v4455
  %v4457 = vpop.f32.mrf.mxu0
  %v4458 = vadd.f32 0.0, %v4457
  %4459 = vmatprep.mubr.bf16.mxu0 0
  %4460 = vmatmul.mubr.bf16.gmra.mxu0 %v3572
  %v4461 = vpop.f32.mrf.mxu0
  %v4462 = vadd.f32 0.0, %v4461
  %v4463 = vpop.f32.mrf.mxu0
  %v4464 = vadd.f32 0.0, %v4463
  %v4465 = vpop.f32.mrf.mxu0
  %v4466 = vadd.f32 0.0, %v4465
  %v4467 = vpop.f32.mrf.mxu0
  %v4468 = vadd.f32 0.0, %v4467
  %4469 = vmatprep.mubr.bf16.mxu0 0
  %4470 = vmatmul.mubr.bf16.gmra.mxu0 %v3573
  %v4471 = vpop.f32.mrf.mxu0
  %v4472 = vadd.f32 0.0, %v4471
  %v4473 = vpop.f32.mrf.mxu0
  %v4474 = vadd.f32 0.0, %v4473
  %v4475 = vpop.f32.mrf.mxu0
  %v4476 = vadd.f32 0.0, %v4475
  %v4477 = vpop.f32.mrf.mxu0
  %v4478 = vadd.f32 0.0, %v4477
  %4479 = vmatprep.mubr.bf16.mxu0 0
  %4480 = vmatmul.mubr.bf16.gmra.mxu0 %v3574
  %v4481 = vpop.f32.mrf.mxu0
  %v4482 = vadd.f32 0.0, %v4481
  %v4483 = vpop.f32.mrf.mxu0
  %v4484 = vadd.f32 0.0, %v4483
  %v4485 = vpop.f32.mrf.mxu0
  %v4486 = vadd.f32 0.0, %v4485
  %v4487 = vpop.f32.mrf.mxu0
  %v4488 = vadd.f32 0.0, %v4487
  %4489 = vmatprep.mubr.bf16.mxu0 0
  %4490 = vmatmul.mubr.bf16.gmra.mxu0 %v3575
  %v4491 = vpop.f32.mrf.mxu0
  %v4492 = vadd.f32 0.0, %v4491
  %v4493 = vpop.f32.mrf.mxu0
  %v4494 = vadd.f32 0.0, %v4493
  %v4495 = vpop.f32.mrf.mxu0
  %v4496 = vadd.f32 0.0, %v4495
  %v4497 = vpop.f32.mrf.mxu0
  %v4498 = vadd.f32 0.0, %v4497
  %4499 = vmatprep.mubr.bf16.mxu0 0
  %4500 = vmatmul.mubr.bf16.gmra.mxu0 %v3576
  %v4501 = vpop.f32.mrf.mxu0
  %v4502 = vadd.f32 0.0, %v4501
  %v4503 = vpop.f32.mrf.mxu0
  %v4504 = vadd.f32 0.0, %v4503
  %v4505 = vpop.f32.mrf.mxu0
  %v4506 = vadd.f32 0.0, %v4505
  %v4507 = vpop.f32.mrf.mxu0
  %v4508 = vadd.f32 0.0, %v4507
  %4509 = vmatprep.mubr.bf16.mxu0 0
  %4510 = vmatmul.mubr.bf16.gmra.mxu0 %v3577
  %v4511 = vpop.f32.mrf.mxu0
  %v4512 = vadd.f32 0.0, %v4511
  %v4513 = vpop.f32.mrf.mxu0
  %v4514 = vadd.f32 0.0, %v4513
  %v4515 = vpop.f32.mrf.mxu0
  %v4516 = vadd.f32 0.0, %v4515
  %v4517 = vpop.f32.mrf.mxu0
  %v4518 = vadd.f32 0.0, %v4517
  %4519 = vmatprep.mubr.bf16.mxu0 0
  %4520 = vmatmul.mubr.bf16.gmra.mxu0 %v3578
  %v4521 = vpop.f32.mrf.mxu0
  %v4522 = vadd.f32 0.0, %v4521
  %v4523 = vpop.f32.mrf.mxu0
  %v4524 = vadd.f32 0.0, %v4523
  %v4525 = vpop.f32.mrf.mxu0
  %v4526 = vadd.f32 0.0, %v4525
  %v4527 = vpop.f32.mrf.mxu0
  %v4528 = vadd.f32 0.0, %v4527
  %4529 = vmatprep.mubr.bf16.mxu0 0
  %4530 = vmatmul.mubr.bf16.gmra.mxu0 %v3579
  %v4531 = vpop.f32.mrf.mxu0
  %v4532 = vadd.f32 0.0, %v4531
  %v4533 = vpop.f32.mrf.mxu0
  %v4534 = vadd.f32 0.0, %v4533
  %v4535 = vpop.f32.mrf.mxu0
  %v4536 = vadd.f32 0.0, %v4535
  %v4537 = vpop.f32.mrf.mxu0
  %v4538 = vadd.f32 0.0, %v4537
  %4539 = vdwg.mxu0
  %v4540 = vadd.f32 %v4270, %v4442
  %v4541 = vadd.f32 %v4271, %v4444
  %v4542 = vadd.f32 %v4272, %v4446
  %v4543 = vadd.f32 %v4273, %v4448
  %v4544 = vadd.f32 %v4274, %v4452
  %v4545 = vadd.f32 %v4275, %v4454
  %v4546 = vadd.f32 %v4276, %v4456
  %v4547 = vadd.f32 %v4277, %v4458
  %v4548 = vadd.f32 %v4278, %v4462
  %v4549 = vadd.f32 %v4279, %v4464
  %v4550 = vadd.f32 %v4280, %v4466
  %v4551 = vadd.f32 %v4281, %v4468
  %v4552 = vadd.f32 %v4282, %v4472
  %v4553 = vadd.f32 %v4283, %v4474
  %v4554 = vadd.f32 %v4284, %v4476
  %v4555 = vadd.f32 %v4285, %v4478
  %v4556 = vadd.f32 %v4286, %v4482
  %v4557 = vadd.f32 %v4287, %v4484
  %v4558 = vadd.f32 %v4288, %v4486
  %v4559 = vadd.f32 %v4289, %v4488
  %v4560 = vadd.f32 %v4290, %v4492
  %v4561 = vadd.f32 %v4291, %v4494
  %v4562 = vadd.f32 %v4292, %v4496
  %v4563 = vadd.f32 %v4293, %v4498
  %v4564 = vadd.f32 %v4294, %v4502
  %v4565 = vadd.f32 %v4295, %v4504
  %v4566 = vadd.f32 %v4296, %v4506
  %v4567 = vadd.f32 %v4297, %v4508
  %v4568 = vadd.f32 %v4298, %v4512
  %v4569 = vadd.f32 %v4299, %v4514
  %v4570 = vadd.f32 %v4300, %v4516
  %v4571 = vadd.f32 %v4301, %v4518
  %v4572 = vadd.f32 %v4302, %v4522
  %v4573 = vadd.f32 %v4303, %v4524
  %v4574 = vadd.f32 %v4304, %v4526
  %v4575 = vadd.f32 %v4305, %v4528
  %v4576 = vadd.f32 %v4306, %v4532
  %v4577 = vadd.f32 %v4307, %v4534
  %v4578 = vadd.f32 %v4308, %v4536
  %v4579 = vadd.f32 %v4309, %v4538
  %s4580 = scalar_lea.vmem %s4, 512
  %v4581 = vld [vmem:[%s4580] sm:$0xff]
  %v4582 = vld [vmem:[%s4580 + $0x8] sm:$0xff]
  %v4583 = vld [vmem:[%s4580 + $0x10] sm:$0xff]
  %v4584 = vld [vmem:[%s4580 + $0x18] sm:$0xff]
  %v4585 = vld [vmem:[%s4580 + $0x20] sm:$0xff]
  %v4586 = vld [vmem:[%s4580 + $0x28] sm:$0xff]
  %v4587 = vld [vmem:[%s4580 + $0x30] sm:$0xff]
  %v4588 = vld [vmem:[%s4580 + $0x38] sm:$0xff]
  %v4589 = vld [vmem:[%s4580 + $0x40] sm:$0xff]
  %v4590 = vld [vmem:[%s4580 + $0x48] sm:$0xff]
  %v4591 = vld [vmem:[%s4580 + $0x50] sm:$0xff]
  %v4592 = vld [vmem:[%s4580 + $0x58] sm:$0xff]
  %v4593 = vld [vmem:[%s4580 + $0x60] sm:$0xff]
  %v4594 = vld [vmem:[%s4580 + $0x68] sm:$0xff]
  %v4595 = vld [vmem:[%s4580 + $0x70] sm:$0xff]
  %v4596 = vld [vmem:[%s4580 + $0x78] sm:$0xff]
  %v4613 = vunpack.c.l.b16 %v4581
  %v4614 = vunpack.c.h.b16 %v4581
  %v4615 = vunpack.c.l.b16 %v4582
  %v4616 = vunpack.c.h.b16 %v4582
  %v4617 = vunpack.c.l.b16 %v4583
  %v4618 = vunpack.c.h.b16 %v4583
  %v4619 = vunpack.c.l.b16 %v4584
  %v4620 = vunpack.c.h.b16 %v4584
  %v4621 = vunpack.c.l.b16 %v4585
  %v4622 = vunpack.c.h.b16 %v4585
  %v4623 = vunpack.c.l.b16 %v4586
  %v4624 = vunpack.c.h.b16 %v4586
  %v4625 = vunpack.c.l.b16 %v4587
  %v4626 = vunpack.c.h.b16 %v4587
  %v4627 = vunpack.c.l.b16 %v4588
  %v4628 = vunpack.c.h.b16 %v4588
  %v4629 = vunpack.c.l.b16 %v4589
  %v4630 = vunpack.c.h.b16 %v4589
  %v4631 = vunpack.c.l.b16 %v4590
  %v4632 = vunpack.c.h.b16 %v4590
  %v4633 = vunpack.c.l.b16 %v4591
  %v4634 = vunpack.c.h.b16 %v4591
  %v4635 = vunpack.c.l.b16 %v4592
  %v4636 = vunpack.c.h.b16 %v4592
  %v4637 = vunpack.c.l.b16 %v4593
  %v4638 = vunpack.c.h.b16 %v4593
  %v4639 = vunpack.c.l.b16 %v4594
  %v4640 = vunpack.c.h.b16 %v4594
  %v4641 = vunpack.c.l.b16 %v4595
  %v4642 = vunpack.c.h.b16 %v4595
  %v4643 = vunpack.c.l.b16 %v4596
  %v4644 = vunpack.c.h.b16 %v4596
  %v4645 = vpack.c.b16 %v4615, %v4613
  %v4646 = vpack.c.b16 %v4616, %v4614
  %v4647 = vpack.c.b16 %v4619, %v4617
  %v4648 = vpack.c.b16 %v4620, %v4618
  %v4649 = vpack.c.b16 %v4623, %v4621
  %v4650 = vpack.c.b16 %v4624, %v4622
  %v4651 = vpack.c.b16 %v4627, %v4625
  %v4652 = vpack.c.b16 %v4628, %v4626
  %v4653 = vpack.c.b16 %v4631, %v4629
  %v4654 = vpack.c.b16 %v4632, %v4630
  %v4655 = vpack.c.b16 %v4635, %v4633
  %v4656 = vpack.c.b16 %v4636, %v4634
  %v4657 = vpack.c.b16 %v4639, %v4637
  %v4658 = vpack.c.b16 %v4640, %v4638
  %v4659 = vpack.c.b16 %v4643, %v4641
  %v4660 = vpack.c.b16 %v4644, %v4642
  %4677 = vmatprep.subr.bf16.mxu0 %v4660
  %4678 = vmatpush1.bf16.msra.mxu0 %v4659
  %4679 = vmatprep.subr.bf16.mxu0 %v4658
  %4680 = vmatpush1.bf16.msra.mxu0 %v4657
  %4681 = vmatprep.subr.bf16.mxu0 %v4656
  %4682 = vmatpush1.bf16.msra.mxu0 %v4655
  %4683 = vmatprep.subr.bf16.mxu0 %v4654
  %4684 = vmatpush1.bf16.msra.mxu0 %v4653
  %4685 = vmatprep.subr.bf16.mxu0 %v4652
  %4686 = vmatpush1.bf16.msra.mxu0 %v4651
  %4687 = vmatprep.subr.bf16.mxu0 %v4650
  %4688 = vmatpush1.bf16.msra.mxu0 %v4649
  %4689 = vmatprep.subr.bf16.mxu0 %v4648
  %4690 = vmatpush1.bf16.msra.mxu0 %v4647
  %4691 = vmatprep.subr.bf16.mxu0 %v4646
  %4692 = vmatpush1.bf16.msra.mxu0 %v4645
  %4693 = vmatprep.subr.bf16.mxu0 0
  %4694 = vmatpush2.bf16.msra.mxu0 0
  %4695 = vmatprep.subr.bf16.mxu0 0
  %4696 = vmatpush2.bf16.msra.mxu0 0
  %4697 = vmatprep.subr.bf16.mxu0 0
  %4698 = vmatpush2.bf16.msra.mxu0 0
  %4699 = vmatprep.subr.bf16.mxu0 0
  %4700 = vmatpush2.bf16.msra.mxu0 0
  %4701 = vmatprep.subr.bf16.mxu0 0
  %4702 = vmatpush2.bf16.msra.mxu0 0
  %4703 = vmatprep.subr.bf16.mxu0 0
  %4704 = vmatpush2.bf16.msra.mxu0 0
  %4705 = vmatprep.subr.bf16.mxu0 0
  %4706 = vmatpush2.bf16.msra.mxu0 0
  %4707 = vmatprep.subr.bf16.mxu0 0
  %4708 = vmatpush2.bf16.msra.mxu0 0
  %4709 = vmatprep.mubr.bf16.mxu0 0
  %4710 = vmatmul.mubr.bf16.gmra.mxu0 %v3571
  %v4711 = vpop.f32.mrf.mxu0
  %v4712 = vadd.f32 0.0, %v4711
  %v4713 = vpop.f32.mrf.mxu0
  %v4714 = vadd.f32 0.0, %v4713
  %v4715 = vpop.f32.mrf.mxu0
  %v4716 = vadd.f32 0.0, %v4715
  %v4717 = vpop.f32.mrf.mxu0
  %v4718 = vadd.f32 0.0, %v4717
  %4719 = vmatprep.mubr.bf16.mxu0 0
  %4720 = vmatmul.mubr.bf16.gmra.mxu0 %v3572
  %v4721 = vpop.f32.mrf.mxu0
  %v4722 = vadd.f32 0.0, %v4721
  %v4723 = vpop.f32.mrf.mxu0
  %v4724 = vadd.f32 0.0, %v4723
  %v4725 = vpop.f32.mrf.mxu0
  %v4726 = vadd.f32 0.0, %v4725
  %v4727 = vpop.f32.mrf.mxu0
  %v4728 = vadd.f32 0.0, %v4727
  %4729 = vmatprep.mubr.bf16.mxu0 0
  %4730 = vmatmul.mubr.bf16.gmra.mxu0 %v3573
  %v4731 = vpop.f32.mrf.mxu0
  %v4732 = vadd.f32 0.0, %v4731
  %v4733 = vpop.f32.mrf.mxu0
  %v4734 = vadd.f32 0.0, %v4733
  %v4735 = vpop.f32.mrf.mxu0
  %v4736 = vadd.f32 0.0, %v4735
  %v4737 = vpop.f32.mrf.mxu0
  %v4738 = vadd.f32 0.0, %v4737
  %4739 = vmatprep.mubr.bf16.mxu0 0
  %4740 = vmatmul.mubr.bf16.gmra.mxu0 %v3574
  %v4741 = vpop.f32.mrf.mxu0
  %v4742 = vadd.f32 0.0, %v4741
  %v4743 = vpop.f32.mrf.mxu0
  %v4744 = vadd.f32 0.0, %v4743
  %v4745 = vpop.f32.mrf.mxu0
  %v4746 = vadd.f32 0.0, %v4745
  %v4747 = vpop.f32.mrf.mxu0
  %v4748 = vadd.f32 0.0, %v4747
  %4749 = vmatprep.mubr.bf16.mxu0 0
  %4750 = vmatmul.mubr.bf16.gmra.mxu0 %v3575
  %v4751 = vpop.f32.mrf.mxu0
  %v4752 = vadd.f32 0.0, %v4751
  %v4753 = vpop.f32.mrf.mxu0
  %v4754 = vadd.f32 0.0, %v4753
  %v4755 = vpop.f32.mrf.mxu0
  %v4756 = vadd.f32 0.0, %v4755
  %v4757 = vpop.f32.mrf.mxu0
  %v4758 = vadd.f32 0.0, %v4757
  %4759 = vmatprep.mubr.bf16.mxu0 0
  %4760 = vmatmul.mubr.bf16.gmra.mxu0 %v3576
  %v4761 = vpop.f32.mrf.mxu0
  %v4762 = vadd.f32 0.0, %v4761
  %v4763 = vpop.f32.mrf.mxu0
  %v4764 = vadd.f32 0.0, %v4763
  %v4765 = vpop.f32.mrf.mxu0
  %v4766 = vadd.f32 0.0, %v4765
  %v4767 = vpop.f32.mrf.mxu0
  %v4768 = vadd.f32 0.0, %v4767
  %4769 = vmatprep.mubr.bf16.mxu0 0
  %4770 = vmatmul.mubr.bf16.gmra.mxu0 %v3577
  %v4771 = vpop.f32.mrf.mxu0
  %v4772 = vadd.f32 0.0, %v4771
  %v4773 = vpop.f32.mrf.mxu0
  %v4774 = vadd.f32 0.0, %v4773
  %v4775 = vpop.f32.mrf.mxu0
  %v4776 = vadd.f32 0.0, %v4775
  %v4777 = vpop.f32.mrf.mxu0
  %v4778 = vadd.f32 0.0, %v4777
  %4779 = vmatprep.mubr.bf16.mxu0 0
  %4780 = vmatmul.mubr.bf16.gmra.mxu0 %v3578
  %v4781 = vpop.f32.mrf.mxu0
  %v4782 = vadd.f32 0.0, %v4781
  %v4783 = vpop.f32.mrf.mxu0
  %v4784 = vadd.f32 0.0, %v4783
  %v4785 = vpop.f32.mrf.mxu0
  %v4786 = vadd.f32 0.0, %v4785
  %v4787 = vpop.f32.mrf.mxu0
  %v4788 = vadd.f32 0.0, %v4787
  %4789 = vmatprep.mubr.bf16.mxu0 0
  %4790 = vmatmul.mubr.bf16.gmra.mxu0 %v3579
  %v4791 = vpop.f32.mrf.mxu0
  %v4792 = vadd.f32 0.0, %v4791
  %v4793 = vpop.f32.mrf.mxu0
  %v4794 = vadd.f32 0.0, %v4793
  %v4795 = vpop.f32.mrf.mxu0
  %v4796 = vadd.f32 0.0, %v4795
  %v4797 = vpop.f32.mrf.mxu0
  %v4798 = vadd.f32 0.0, %v4797
  %4799 = vmatprep.mubr.bf16.mxu0 0
  %4800 = vmatmul.mubr.bf16.gmra.mxu0 %v3580
  %v4801 = vpop.f32.mrf.mxu0
  %v4802 = vadd.f32 0.0, %v4801
  %v4803 = vpop.f32.mrf.mxu0
  %v4804 = vadd.f32 0.0, %v4803
  %v4805 = vpop.f32.mrf.mxu0
  %v4806 = vadd.f32 0.0, %v4805
  %v4807 = vpop.f32.mrf.mxu0
  %v4808 = vadd.f32 0.0, %v4807
  %4809 = vdwg.mxu0
  %v4810 = vadd.f32 %v4540, %v4712
  %v4811 = vadd.f32 %v4541, %v4714
  %v4812 = vadd.f32 %v4542, %v4716
  %v4813 = vadd.f32 %v4543, %v4718
  %v4814 = vadd.f32 %v4544, %v4722
  %v4815 = vadd.f32 %v4545, %v4724
  %v4816 = vadd.f32 %v4546, %v4726
  %v4817 = vadd.f32 %v4547, %v4728
  %v4818 = vadd.f32 %v4548, %v4732
  %v4819 = vadd.f32 %v4549, %v4734
  %v4820 = vadd.f32 %v4550, %v4736
  %v4821 = vadd.f32 %v4551, %v4738
  %v4822 = vadd.f32 %v4552, %v4742
  %v4823 = vadd.f32 %v4553, %v4744
  %v4824 = vadd.f32 %v4554, %v4746
  %v4825 = vadd.f32 %v4555, %v4748
  %v4826 = vadd.f32 %v4556, %v4752
  %v4827 = vadd.f32 %v4557, %v4754
  %v4828 = vadd.f32 %v4558, %v4756
  %v4829 = vadd.f32 %v4559, %v4758
  %v4830 = vadd.f32 %v4560, %v4762
  %v4831 = vadd.f32 %v4561, %v4764
  %v4832 = vadd.f32 %v4562, %v4766
  %v4833 = vadd.f32 %v4563, %v4768
  %v4834 = vadd.f32 %v4564, %v4772
  %v4835 = vadd.f32 %v4565, %v4774
  %v4836 = vadd.f32 %v4566, %v4776
  %v4837 = vadd.f32 %v4567, %v4778
  %v4838 = vadd.f32 %v4568, %v4782
  %v4839 = vadd.f32 %v4569, %v4784
  %v4840 = vadd.f32 %v4570, %v4786
  %v4841 = vadd.f32 %v4571, %v4788
  %v4842 = vadd.f32 %v4572, %v4792
  %v4843 = vadd.f32 %v4573, %v4794
  %v4844 = vadd.f32 %v4574, %v4796
  %v4845 = vadd.f32 %v4575, %v4798
  %v4846 = vadd.f32 %v4576, %v4802
  %v4847 = vadd.f32 %v4577, %v4804
  %v4848 = vadd.f32 %v4578, %v4806
  %v4849 = vadd.f32 %v4579, %v4808
  %v4850 = vld [vmem:[%s5] sm:$0x3]
  %v4852 = vlaneseq
  %v4853 = vshrl.u32 %v4852, 7
  %v4854 = vsub.s32 0, %v4853
  %v4855 = vrot.slane %v4850, %v4854
  %v4856 = vlaneseq
  %v4857 = vshrl.u32 %v4856, 7
  %v4858 = vsub.s32 1, %v4857
  %v4859 = vrot.slane %v4850, %v4858
  %v4862 = vadd.f32 %v4810, %v4855
  %v4863 = vadd.f32 %v4811, %v4859
  %v4864 = vadd.f32 %v4812, %v4855
  %v4865 = vadd.f32 %v4813, %v4859
  %v4866 = vadd.f32 %v4814, %v4855
  %v4867 = vadd.f32 %v4815, %v4859
  %v4868 = vadd.f32 %v4816, %v4855
  %v4869 = vadd.f32 %v4817, %v4859
  %v4870 = vadd.f32 %v4818, %v4855
  %v4871 = vadd.f32 %v4819, %v4859
  %v4872 = vadd.f32 %v4820, %v4855
  %v4873 = vadd.f32 %v4821, %v4859
  %v4874 = vadd.f32 %v4822, %v4855
  %v4875 = vadd.f32 %v4823, %v4859
  %v4876 = vadd.f32 %v4824, %v4855
  %v4877 = vadd.f32 %v4825, %v4859
  %v4878 = vadd.f32 %v4826, %v4855
  %v4879 = vadd.f32 %v4827, %v4859
  %v4880 = vadd.f32 %v4828, %v4855
  %v4881 = vadd.f32 %v4829, %v4859
  %v4882 = vadd.f32 %v4830, %v4855
  %v4883 = vadd.f32 %v4831, %v4859
  %v4884 = vadd.f32 %v4832, %v4855
  %v4885 = vadd.f32 %v4833, %v4859
  %v4886 = vadd.f32 %v4834, %v4855
  %v4887 = vadd.f32 %v4835, %v4859
  %v4888 = vadd.f32 %v4836, %v4855
  %v4889 = vadd.f32 %v4837, %v4859
  %v4890 = vadd.f32 %v4838, %v4855
  %v4891 = vadd.f32 %v4839, %v4859
  %v4892 = vadd.f32 %v4840, %v4855
  %v4893 = vadd.f32 %v4841, %v4859
  %v4894 = vadd.f32 %v4842, %v4855
  %v4895 = vadd.f32 %v4843, %v4859
  %v4896 = vadd.f32 %v4844, %v4855
  %v4897 = vadd.f32 %v4845, %v4859
  %v4898 = vadd.f32 %v4846, %v4855
  %v4899 = vadd.f32 %v4847, %v4859
  %v4900 = vadd.f32 %v4848, %v4855
  %v4901 = vadd.f32 %v4849, %v4859
  %v4902 = vmax.f32 %v4862, 0.0
  %v4903 = vmax.f32 %v4863, 0.0
  %v4904 = vmax.f32 %v4864, 0.0
  %v4905 = vmax.f32 %v4865, 0.0
  %v4906 = vmax.f32 %v4866, 0.0
  %v4907 = vmax.f32 %v4867, 0.0
  %v4908 = vmax.f32 %v4868, 0.0
  %v4909 = vmax.f32 %v4869, 0.0
  %v4910 = vmax.f32 %v4870, 0.0
  %v4911 = vmax.f32 %v4871, 0.0
  %v4912 = vmax.f32 %v4872, 0.0
  %v4913 = vmax.f32 %v4873, 0.0
  %v4914 = vmax.f32 %v4874, 0.0
  %v4915 = vmax.f32 %v4875, 0.0
  %v4916 = vmax.f32 %v4876, 0.0
  %v4917 = vmax.f32 %v4877, 0.0
  %v4918 = vmax.f32 %v4878, 0.0
  %v4919 = vmax.f32 %v4879, 0.0
  %v4920 = vmax.f32 %v4880, 0.0
  %v4921 = vmax.f32 %v4881, 0.0
  %v4922 = vmax.f32 %v4882, 0.0
  %v4923 = vmax.f32 %v4883, 0.0
  %v4924 = vmax.f32 %v4884, 0.0
  %v4925 = vmax.f32 %v4885, 0.0
  %v4926 = vmax.f32 %v4886, 0.0
  %v4927 = vmax.f32 %v4887, 0.0
  %v4928 = vmax.f32 %v4888, 0.0
  %v4929 = vmax.f32 %v4889, 0.0
  %v4930 = vmax.f32 %v4890, 0.0
  %v4931 = vmax.f32 %v4891, 0.0
  %v4932 = vmax.f32 %v4892, 0.0
  %v4933 = vmax.f32 %v4893, 0.0
  %v4934 = vmax.f32 %v4894, 0.0
  %v4935 = vmax.f32 %v4895, 0.0
  %v4936 = vmax.f32 %v4896, 0.0
  %v4937 = vmax.f32 %v4897, 0.0
  %v4938 = vmax.f32 %v4898, 0.0
  %v4939 = vmax.f32 %v4899, 0.0
  %v4940 = vmax.f32 %v4900, 0.0
  %v4941 = vmax.f32 %v4901, 0.0
  %v4942 = vpack.c.bf16 %v4904, %v4902
  %v4943 = vpack.c.bf16 %v4905, %v4903
  %v4944 = vpack.c.bf16 %v4908, %v4906
  %v4945 = vpack.c.bf16 %v4909, %v4907
  %v4946 = vpack.c.bf16 %v4912, %v4910
  %v4947 = vpack.c.bf16 %v4913, %v4911
  %v4948 = vpack.c.bf16 %v4916, %v4914
  %v4949 = vpack.c.bf16 %v4917, %v4915
  %v4950 = vpack.c.bf16 %v4920, %v4918
  %v4951 = vpack.c.bf16 %v4921, %v4919
  %v4952 = vpack.c.bf16 %v4924, %v4922
  %v4953 = vpack.c.bf16 %v4925, %v4923
  %v4954 = vpack.c.bf16 %v4928, %v4926
  %v4955 = vpack.c.bf16 %v4929, %v4927
  %v4956 = vpack.c.bf16 %v4932, %v4930
  %v4957 = vpack.c.bf16 %v4933, %v4931
  %v4958 = vpack.c.bf16 %v4936, %v4934
  %v4959 = vpack.c.bf16 %v4937, %v4935
  %v4960 = vpack.c.bf16 %v4940, %v4938
  %v4961 = vpack.c.bf16 %v4941, %v4939
  %v4962 = vld [vmem:[%s6] sm:$0xff]
  %v4963 = vld [vmem:[%s6 + $0x8] sm:$0xff]
  %v4964 = vld [vmem:[%s6 + $0x10] sm:$0xff]
  %v4965 = vld [vmem:[%s6 + $0x18] sm:$0xff]
  %v4966 = vld [vmem:[%s6 + $0x20] sm:$0xff]
  %v4967 = vld [vmem:[%s6 + $0x28] sm:$0xff]
  %v4968 = vld [vmem:[%s6 + $0x30] sm:$0xff]
  %v4969 = vld [vmem:[%s6 + $0x38] sm:$0xff]
  %v4970 = vld [vmem:[%s6 + $0x40] sm:$0xff]
  %v4971 = vld [vmem:[%s6 + $0x48] sm:$0xff]
  %v4972 = vld [vmem:[%s6 + $0x50] sm:$0xff]
  %v4973 = vld [vmem:[%s6 + $0x58] sm:$0xff]
  %v4974 = vld [vmem:[%s6 + $0x60] sm:$0xff]
  %v4975 = vld [vmem:[%s6 + $0x68] sm:$0xff]
  %v4976 = vld [vmem:[%s6 + $0x70] sm:$0xff]
  %v4977 = vld [vmem:[%s6 + $0x78] sm:$0xff]
  %v4978 = vld [vmem:[%s6 + $0x80] sm:$0xff]
  %v4979 = vld [vmem:[%s6 + $0x88] sm:$0xff]
  %v4980 = vld [vmem:[%s6 + $0x90] sm:$0xff]
  %v4981 = vld [vmem:[%s6 + $0x98] sm:$0xff]
  %v4982 = vld [vmem:[%s6 + $0xa0] sm:$0xff]
  %v4983 = vld [vmem:[%s6 + $0xa8] sm:$0xff]
  %v4984 = vld [vmem:[%s6 + $0xb0] sm:$0xff]
  %v4985 = vld [vmem:[%s6 + $0xb8] sm:$0xff]
  %v4986 = vld [vmem:[%s6 + $0xc0] sm:$0xff]
  %v4987 = vld [vmem:[%s6 + $0xc8] sm:$0xff]
  %v4988 = vld [vmem:[%s6 + $0xd0] sm:$0xff]
  %v4989 = vld [vmem:[%s6 + $0xd8] sm:$0xff]
  %v4990 = vld [vmem:[%s6 + $0xe0] sm:$0xff]
  %v4991 = vld [vmem:[%s6 + $0xe8] sm:$0xff]
  %v4992 = vld [vmem:[%s6 + $0xf0] sm:$0xff]
  %v4993 = vld [vmem:[%s6 + $0xf8] sm:$0xff]
  %v5026 = vunpack.c.l.b16 %v4962
  %v5027 = vunpack.c.h.b16 %v4962
  %v5028 = vunpack.c.l.b16 %v4963
  %v5029 = vunpack.c.h.b16 %v4963
  %v5030 = vunpack.c.l.b16 %v4964
  %v5031 = vunpack.c.h.b16 %v4964
  %v5032 = vunpack.c.l.b16 %v4965
  %v5033 = vunpack.c.h.b16 %v4965
  %v5034 = vunpack.c.l.b16 %v4966
  %v5035 = vunpack.c.h.b16 %v4966
  %v5036 = vunpack.c.l.b16 %v4967
  %v5037 = vunpack.c.h.b16 %v4967
  %v5038 = vunpack.c.l.b16 %v4968
  %v5039 = vunpack.c.h.b16 %v4968
  %v5040 = vunpack.c.l.b16 %v4969
  %v5041 = vunpack.c.h.b16 %v4969
  %v5042 = vunpack.c.l.b16 %v4970
  %v5043 = vunpack.c.h.b16 %v4970
  %v5044 = vunpack.c.l.b16 %v4971
  %v5045 = vunpack.c.h.b16 %v4971
  %v5046 = vunpack.c.l.b16 %v4972
  %v5047 = vunpack.c.h.b16 %v4972
  %v5048 = vunpack.c.l.b16 %v4973
  %v5049 = vunpack.c.h.b16 %v4973
  %v5050 = vunpack.c.l.b16 %v4974
  %v5051 = vunpack.c.h.b16 %v4974
  %v5052 = vunpack.c.l.b16 %v4975
  %v5053 = vunpack.c.h.b16 %v4975
  %v5054 = vunpack.c.l.b16 %v4976
  %v5055 = vunpack.c.h.b16 %v4976
  %v5056 = vunpack.c.l.b16 %v4977
  %v5057 = vunpack.c.h.b16 %v4977
  %v5058 = vunpack.c.l.b16 %v4978
  %v5059 = vunpack.c.h.b16 %v4978
  %v5060 = vunpack.c.l.b16 %v4979
  %v5061 = vunpack.c.h.b16 %v4979
  %v5062 = vunpack.c.l.b16 %v4980
  %v5063 = vunpack.c.h.b16 %v4980
  %v5064 = vunpack.c.l.b16 %v4981
  %v5065 = vunpack.c.h.b16 %v4981
  %v5066 = vunpack.c.l.b16 %v4982
  %v5067 = vunpack.c.h.b16 %v4982
  %v5068 = vunpack.c.l.b16 %v4983
  %v5069 = vunpack.c.h.b16 %v4983
  %v5070 = vunpack.c.l.b16 %v4984
  %v5071 = vunpack.c.h.b16 %v4984
  %v5072 = vunpack.c.l.b16 %v4985
  %v5073 = vunpack.c.h.b16 %v4985
  %v5074 = vunpack.c.l.b16 %v4986
  %v5075 = vunpack.c.h.b16 %v4986
  %v5076 = vunpack.c.l.b16 %v4987
  %v5077 = vunpack.c.h.b16 %v4987
  %v5078 = vunpack.c.l.b16 %v4988
  %v5079 = vunpack.c.h.b16 %v4988
  %v5080 = vunpack.c.l.b16 %v4989
  %v5081 = vunpack.c.h.b16 %v4989
  %v5082 = vunpack.c.l.b16 %v4990
  %v5083 = vunpack.c.h.b16 %v4990
  %v5084 = vunpack.c.l.b16 %v4991
  %v5085 = vunpack.c.h.b16 %v4991
  %v5086 = vunpack.c.l.b16 %v4992
  %v5087 = vunpack.c.h.b16 %v4992
  %v5088 = vunpack.c.l.b16 %v4993
  %v5089 = vunpack.c.h.b16 %v4993
  %v5090 = vpack.c.b16 %v5028, %v5026
  %v5091 = vpack.c.b16 %v5029, %v5027
  %v5092 = vpack.c.b16 %v5032, %v5030
  %v5093 = vpack.c.b16 %v5033, %v5031
  %v5094 = vpack.c.b16 %v5036, %v5034
  %v5095 = vpack.c.b16 %v5037, %v5035
  %v5096 = vpack.c.b16 %v5040, %v5038
  %v5097 = vpack.c.b16 %v5041, %v5039
  %v5098 = vpack.c.b16 %v5044, %v5042
  %v5099 = vpack.c.b16 %v5045, %v5043
  %v5100 = vpack.c.b16 %v5048, %v5046
  %v5101 = vpack.c.b16 %v5049, %v5047
  %v5102 = vpack.c.b16 %v5052, %v5050
  %v5103 = vpack.c.b16 %v5053, %v5051
  %v5104 = vpack.c.b16 %v5056, %v5054
  %v5105 = vpack.c.b16 %v5057, %v5055
  %v5106 = vpack.c.b16 %v5060, %v5058
  %v5107 = vpack.c.b16 %v5061, %v5059
  %v5108 = vpack.c.b16 %v5064, %v5062
  %v5109 = vpack.c.b16 %v5065, %v5063
  %v5110 = vpack.c.b16 %v5068, %v5066
  %v5111 = vpack.c.b16 %v5069, %v5067
  %v5112 = vpack.c.b16 %v5072, %v5070
  %v5113 = vpack.c.b16 %v5073, %v5071
  %v5114 = vpack.c.b16 %v5076, %v5074
  %v5115 = vpack.c.b16 %v5077, %v5075
  %v5116 = vpack.c.b16 %v5080, %v5078
  %v5117 = vpack.c.b16 %v5081, %v5079
  %v5118 = vpack.c.b16 %v5084, %v5082
  %v5119 = vpack.c.b16 %v5085, %v5083
  %v5120 = vpack.c.b16 %v5088, %v5086
  %v5121 = vpack.c.b16 %v5089, %v5087
  %5154 = vmatprep.subr.bf16.mxu0 %v5105
  %5155 = vmatpush1.bf16.msra.mxu0 %v5104
  %5156 = vmatprep.subr.bf16.mxu0 %v5103
  %5157 = vmatpush1.bf16.msra.mxu0 %v5102
  %5158 = vmatprep.subr.bf16.mxu0 %v5101
  %5159 = vmatpush1.bf16.msra.mxu0 %v5100
  %5160 = vmatprep.subr.bf16.mxu0 %v5099
  %5161 = vmatpush1.bf16.msra.mxu0 %v5098
  %5162 = vmatprep.subr.bf16.mxu0 %v5097
  %5163 = vmatpush1.bf16.msra.mxu0 %v5096
  %5164 = vmatprep.subr.bf16.mxu0 %v5095
  %5165 = vmatpush1.bf16.msra.mxu0 %v5094
  %5166 = vmatprep.subr.bf16.mxu0 %v5093
  %5167 = vmatpush1.bf16.msra.mxu0 %v5092
  %5168 = vmatprep.subr.bf16.mxu0 %v5091
  %5169 = vmatpush1.bf16.msra.mxu0 %v5090
  %5170 = vmatprep.subr.bf16.mxu0 %v5121
  %5171 = vmatpush2.bf16.msra.mxu0 %v5120
  %5172 = vmatprep.subr.bf16.mxu0 %v5119
  %5173 = vmatpush2.bf16.msra.mxu0 %v5118
  %5174 = vmatprep.subr.bf16.mxu0 %v5117
  %5175 = vmatpush2.bf16.msra.mxu0 %v5116
  %5176 = vmatprep.subr.bf16.mxu0 %v5115
  %5177 = vmatpush2.bf16.msra.mxu0 %v5114
  %5178 = vmatprep.subr.bf16.mxu0 %v5113
  %5179 = vmatpush2.bf16.msra.mxu0 %v5112
  %5180 = vmatprep.subr.bf16.mxu0 %v5111
  %5181 = vmatpush2.bf16.msra.mxu0 %v5110
  %5182 = vmatprep.subr.bf16.mxu0 %v5109
  %5183 = vmatpush2.bf16.msra.mxu0 %v5108
  %5184 = vmatprep.subr.bf16.mxu0 %v5107
  %5185 = vmatpush2.bf16.msra.mxu0 %v5106
  %5186 = vmatprep.mubr.bf16.mxu0 %v4943
  %5187 = vmatmul.mubr.bf16.gmra.mxu0 %v4942
  %v5188 = vpop.f32.mrf.mxu0
  %v5189 = vadd.f32 0.0, %v5188
  %v5190 = vpop.f32.mrf.mxu0
  %v5191 = vadd.f32 0.0, %v5190
  %v5192 = vpop.f32.mrf.mxu0
  %v5193 = vadd.f32 0.0, %v5192
  %v5194 = vpop.f32.mrf.mxu0
  %v5195 = vadd.f32 0.0, %v5194
  %5196 = vmatprep.mubr.bf16.mxu0 %v4945
  %5197 = vmatmul.mubr.bf16.gmra.mxu0 %v4944
  %v5198 = vpop.f32.mrf.mxu0
  %v5199 = vadd.f32 0.0, %v5198
  %v5200 = vpop.f32.mrf.mxu0
  %v5201 = vadd.f32 0.0, %v5200
  %v5202 = vpop.f32.mrf.mxu0
  %v5203 = vadd.f32 0.0, %v5202
  %v5204 = vpop.f32.mrf.mxu0
  %v5205 = vadd.f32 0.0, %v5204
  %5206 = vmatprep.mubr.bf16.mxu0 %v4947
  %5207 = vmatmul.mubr.bf16.gmra.mxu0 %v4946
  %v5208 = vpop.f32.mrf.mxu0
  %v5209 = vadd.f32 0.0, %v5208
  %v5210 = vpop.f32.mrf.mxu0
  %v5211 = vadd.f32 0.0, %v5210
  %v5212 = vpop.f32.mrf.mxu0
  %v5213 = vadd.f32 0.0, %v5212
  %v5214 = vpop.f32.mrf.mxu0
  %v5215 = vadd.f32 0.0, %v5214
  %5216 = vmatprep.mubr.bf16.mxu0 %v4949
  %5217 = vmatmul.mubr.bf16.gmra.mxu0 %v4948
  %v5218 = vpop.f32.mrf.mxu0
  %v5219 = vadd.f32 0.0, %v5218
  %v5220 = vpop.f32.mrf.mxu0
  %v5221 = vadd.f32 0.0, %v5220
  %v5222 = vpop.f32.mrf.mxu0
  %v5223 = vadd.f32 0.0, %v5222
  %v5224 = vpop.f32.mrf.mxu0
  %v5225 = vadd.f32 0.0, %v5224
  %5226 = vmatprep.mubr.bf16.mxu0 %v4951
  %5227 = vmatmul.mubr.bf16.gmra.mxu0 %v4950
  %v5228 = vpop.f32.mrf.mxu0
  %v5229 = vadd.f32 0.0, %v5228
  %v5230 = vpop.f32.mrf.mxu0
  %v5231 = vadd.f32 0.0, %v5230
  %v5232 = vpop.f32.mrf.mxu0
  %v5233 = vadd.f32 0.0, %v5232
  %v5234 = vpop.f32.mrf.mxu0
  %v5235 = vadd.f32 0.0, %v5234
  %5236 = vmatprep.mubr.bf16.mxu0 %v4953
  %5237 = vmatmul.mubr.bf16.gmra.mxu0 %v4952
  %v5238 = vpop.f32.mrf.mxu0
  %v5239 = vadd.f32 0.0, %v5238
  %v5240 = vpop.f32.mrf.mxu0
  %v5241 = vadd.f32 0.0, %v5240
  %v5242 = vpop.f32.mrf.mxu0
  %v5243 = vadd.f32 0.0, %v5242
  %v5244 = vpop.f32.mrf.mxu0
  %v5245 = vadd.f32 0.0, %v5244
  %5246 = vmatprep.mubr.bf16.mxu0 %v4955
  %5247 = vmatmul.mubr.bf16.gmra.mxu0 %v4954
  %v5248 = vpop.f32.mrf.mxu0
  %v5249 = vadd.f32 0.0, %v5248
  %v5250 = vpop.f32.mrf.mxu0
  %v5251 = vadd.f32 0.0, %v5250
  %v5252 = vpop.f32.mrf.mxu0
  %v5253 = vadd.f32 0.0, %v5252
  %v5254 = vpop.f32.mrf.mxu0
  %v5255 = vadd.f32 0.0, %v5254
  %5256 = vmatprep.mubr.bf16.mxu0 %v4957
  %5257 = vmatmul.mubr.bf16.gmra.mxu0 %v4956
  %v5258 = vpop.f32.mrf.mxu0
  %v5259 = vadd.f32 0.0, %v5258
  %v5260 = vpop.f32.mrf.mxu0
  %v5261 = vadd.f32 0.0, %v5260
  %v5262 = vpop.f32.mrf.mxu0
  %v5263 = vadd.f32 0.0, %v5262
  %v5264 = vpop.f32.mrf.mxu0
  %v5265 = vadd.f32 0.0, %v5264
  %5266 = vmatprep.mubr.bf16.mxu0 %v4959
  %5267 = vmatmul.mubr.bf16.gmra.mxu0 %v4958
  %v5268 = vpop.f32.mrf.mxu0
  %v5269 = vadd.f32 0.0, %v5268
  %v5270 = vpop.f32.mrf.mxu0
  %v5271 = vadd.f32 0.0, %v5270
  %v5272 = vpop.f32.mrf.mxu0
  %v5273 = vadd.f32 0.0, %v5272
  %v5274 = vpop.f32.mrf.mxu0
  %v5275 = vadd.f32 0.0, %v5274
  %5276 = vmatprep.mubr.bf16.mxu0 %v4961
  %5277 = vmatmul.mubr.bf16.gmra.mxu0 %v4960
  %v5278 = vpop.f32.mrf.mxu0
  %v5279 = vadd.f32 0.0, %v5278
  %v5280 = vpop.f32.mrf.mxu0
  %v5281 = vadd.f32 0.0, %v5280
  %v5282 = vpop.f32.mrf.mxu0
  %v5283 = vadd.f32 0.0, %v5282
  %v5284 = vpop.f32.mrf.mxu0
  %v5285 = vadd.f32 0.0, %v5284
  %5286 = vdwg.mxu0
  %v5287 = vmax.f32 %v5189, %v5191
  %v5288 = vmax.f32 %v5193, %v5195
  %v5289 = vmax.f32 %v5199, %v5201
  %v5290 = vmax.f32 %v5203, %v5205
  %v5291 = vmax.f32 %v5209, %v5211
  %v5292 = vmax.f32 %v5213, %v5215
  %v5293 = vmax.f32 %v5219, %v5221
  %v5294 = vmax.f32 %v5223, %v5225
  %v5295 = vmax.f32 %v5229, %v5231
  %v5296 = vmax.f32 %v5233, %v5235
  %v5297 = vmax.f32 %v5239, %v5241
  %v5298 = vmax.f32 %v5243, %v5245
  %v5299 = vmax.f32 %v5249, %v5251
  %v5300 = vmax.f32 %v5253, %v5255
  %v5301 = vmax.f32 %v5259, %v5261
  %v5302 = vmax.f32 %v5263, %v5265
  %v5303 = vmax.f32 %v5269, %v5271
  %v5304 = vmax.f32 %v5273, %v5275
  %v5305 = vmax.f32 %v5279, %v5281
  %v5306 = vmax.f32 %v5283, %v5285
  %v5307 = vmax.f32 %v5287, %v5289
  %v5308 = vmax.f32 %v5288, %v5290
  %v5309 = vmax.f32 %v5291, %v5293
  %v5310 = vmax.f32 %v5292, %v5294
  %v5311 = vmax.f32 %v5295, %v5297
  %v5312 = vmax.f32 %v5296, %v5298
  %v5313 = vmax.f32 %v5299, %v5301
  %v5314 = vmax.f32 %v5300, %v5302
  %v5315 = vmax.f32 %v5303, %v5305
  %v5316 = vmax.f32 %v5304, %v5306
  %v5317 = vpack.c.bf16 %v5308, %v5307
  %v5318 = vpack.c.bf16 %v5310, %v5309
  %v5319 = vpack.c.bf16 %v5312, %v5311
  %v5320 = vpack.c.bf16 %v5314, %v5313
  %v5321 = vpack.c.bf16 %v5316, %v5315
  %v5322 = vld [vmem:[%s7] sm:$0xf]
  %v5323 = vld [vmem:[%s7 + $0x4] sm:$0xf]
  %v5324 = vld [vmem:[%s7 + $0x8] sm:$0xf]
  %v5325 = vld [vmem:[%s7 + $0xc] sm:$0xf]
  %v5326 = vld [vmem:[%s7 + $0x10] sm:$0xf]
  %v5327 = vld [vmem:[%s7 + $0x14] sm:$0xf]
  %v5328 = vld [vmem:[%s7 + $0x18] sm:$0xf]
  %v5329 = vld [vmem:[%s7 + $0x1c] sm:$0xf]
  %v5330 = vld [vmem:[%s7 + $0x20] sm:$0xf]
  %v5331 = vld [vmem:[%s7 + $0x24] sm:$0xf]
  %v5332 = vld [vmem:[%s7 + $0x28] sm:$0xf]
  %v5333 = vld [vmem:[%s7 + $0x2c] sm:$0xf]
  %v5334 = vld [vmem:[%s7 + $0x30] sm:$0xf]
  %v5335 = vld [vmem:[%s7 + $0x34] sm:$0xf]
  %v5336 = vld [vmem:[%s7 + $0x38] sm:$0xf]
  %v5337 = vld [vmem:[%s7 + $0x3c] sm:$0xf]
  %s5338 = scalar_lea.vmem %s7, 64
  %v5339 = vld [vmem:[%s5338] sm:$0xf]
  %v5340 = vld [vmem:[%s5338 + $0x4] sm:$0xf]
  %v5341 = vld [vmem:[%s5338 + $0x8] sm:$0xf]
  %v5342 = vld [vmem:[%s5338 + $0xc] sm:$0xf]
  %v5343 = vld [vmem:[%s5338 + $0x10] sm:$0xf]
  %v5344 = vld [vmem:[%s5338 + $0x14] sm:$0xf]
  %v5345 = vld [vmem:[%s5338 + $0x18] sm:$0xf]
  %v5346 = vld [vmem:[%s5338 + $0x1c] sm:$0xf]
  %v5347 = vld [vmem:[%s5338 + $0x20] sm:$0xf]
  %v5348 = vld [vmem:[%s5338 + $0x24] sm:$0xf]
  %v5349 = vld [vmem:[%s5338 + $0x28] sm:$0xf]
  %v5350 = vld [vmem:[%s5338 + $0x2c] sm:$0xf]
  %v5351 = vld [vmem:[%s5338 + $0x30] sm:$0xf]
  %v5352 = vld [vmem:[%s5338 + $0x34] sm:$0xf]
  %v5353 = vld [vmem:[%s5338 + $0x38] sm:$0xf]
  %v5354 = vld [vmem:[%s5338 + $0x3c] sm:$0xf]
  %v5371 = vunpack.c.l.b16 %v5339
  %v5372 = vunpack.c.l.b16 %v5340
  %v5373 = vunpack.c.l.b16 %v5341
  %v5374 = vunpack.c.l.b16 %v5342
  %v5375 = vunpack.c.l.b16 %v5343
  %v5376 = vunpack.c.l.b16 %v5344
  %v5377 = vunpack.c.l.b16 %v5345
  %v5378 = vunpack.c.l.b16 %v5346
  %v5379 = vunpack.c.l.b16 %v5347
  %v5380 = vunpack.c.l.b16 %v5348
  %v5381 = vunpack.c.l.b16 %v5349
  %v5382 = vunpack.c.l.b16 %v5350
  %v5383 = vunpack.c.l.b16 %v5351
  %v5384 = vunpack.c.l.b16 %v5352
  %v5385 = vunpack.c.l.b16 %v5353
  %v5386 = vunpack.c.l.b16 %v5354
  %v5387 = vpack.c.b16 %v5372, %v5371
  %v5388 = vpack.c.b16 %v5374, %v5373
  %v5389 = vpack.c.b16 %v5376, %v5375
  %v5390 = vpack.c.b16 %v5378, %v5377
  %v5391 = vpack.c.b16 %v5380, %v5379
  %v5392 = vpack.c.b16 %v5382, %v5381
  %v5393 = vpack.c.b16 %v5384, %v5383
  %v5394 = vpack.c.b16 %v5386, %v5385
  %5403 = vmatprep.subr.bf16.mxu0 0
  %5404 = vmatpush1.bf16.msra.mxu0 %v5394
  %5405 = vmatprep.subr.bf16.mxu0 0
  %5406 = vmatpush1.bf16.msra.mxu0 %v5393
  %5407 = vmatprep.subr.bf16.mxu0 0
  %5408 = vmatpush1.bf16.msra.mxu0 %v5392
  %5409 = vmatprep.subr.bf16.mxu0 0
  %5410 = vmatpush1.bf16.msra.mxu0 %v5391
  %5411 = vmatprep.subr.bf16.mxu0 0
  %5412 = vmatpush1.bf16.msra.mxu0 %v5390
  %5413 = vmatprep.subr.bf16.mxu0 0
  %5414 = vmatpush1.bf16.msra.mxu0 %v5389
  %5415 = vmatprep.subr.bf16.mxu0 0
  %5416 = vmatpush1.bf16.msra.mxu0 %v5388
  %5417 = vmatprep.subr.bf16.mxu0 0
  %5418 = vmatpush1.bf16.msra.mxu0 %v5387
  %5419 = vmatprep.subr.bf16.mxu0 0
  %5420 = vmatpush2.bf16.msra.mxu0 0
  %5421 = vmatprep.subr.bf16.mxu0 0
  %5422 = vmatpush2.bf16.msra.mxu0 0
  %5423 = vmatprep.subr.bf16.mxu0 0
  %5424 = vmatpush2.bf16.msra.mxu0 0
  %5425 = vmatprep.subr.bf16.mxu0 0
  %5426 = vmatpush2.bf16.msra.mxu0 0
  %5427 = vmatprep.subr.bf16.mxu0 0
  %5428 = vmatpush2.bf16.msra.mxu0 0
  %5429 = vmatprep.subr.bf16.mxu0 0
  %5430 = vmatpush2.bf16.msra.mxu0 0
  %5431 = vmatprep.subr.bf16.mxu0 0
  %5432 = vmatpush2.bf16.msra.mxu0 0
  %5433 = vmatprep.subr.bf16.mxu0 0
  %5434 = vmatpush2.bf16.msra.mxu0 0
  %5435 = vmatprep.mubr.bf16.mxu0 0
  %5436 = vmatmul.mubr.bf16.gmra.mxu0 %v5318
  %v5437 = vpop.f32.mrf.mxu0
  %v5438 = vadd.f32 0.0, %v5437
  %v5439 = vpop.f32.mrf.mxu0
  %v5440 = vpop.f32.mrf.mxu0
  %v5441 = vadd.f32 0.0, %v5440
  %v5442 = vpop.f32.mrf.mxu0
  %5443 = vdwg.mxu0
  %v5460 = vunpack.c.l.b16 %v5322
  %v5461 = vunpack.c.l.b16 %v5323
  %v5462 = vunpack.c.l.b16 %v5324
  %v5463 = vunpack.c.l.b16 %v5325
  %v5464 = vunpack.c.l.b16 %v5326
  %v5465 = vunpack.c.l.b16 %v5327
  %v5466 = vunpack.c.l.b16 %v5328
  %v5467 = vunpack.c.l.b16 %v5329
  %v5468 = vunpack.c.l.b16 %v5330
  %v5469 = vunpack.c.l.b16 %v5331
  %v5470 = vunpack.c.l.b16 %v5332
  %v5471 = vunpack.c.l.b16 %v5333
  %v5472 = vunpack.c.l.b16 %v5334
  %v5473 = vunpack.c.l.b16 %v5335
  %v5474 = vunpack.c.l.b16 %v5336
  %v5475 = vunpack.c.l.b16 %v5337
  %v5476 = vpack.c.b16 %v5461, %v5460
  %v5477 = vpack.c.b16 %v5463, %v5462
  %v5478 = vpack.c.b16 %v5465, %v5464
  %v5479 = vpack.c.b16 %v5467, %v5466
  %v5480 = vpack.c.b16 %v5469, %v5468
  %v5481 = vpack.c.b16 %v5471, %v5470
  %v5482 = vpack.c.b16 %v5473, %v5472
  %v5483 = vpack.c.b16 %v5475, %v5474
  %5492 = vmatprep.subr.bf16.mxu0 0
  %5493 = vmatpush1.bf16.msra.mxu0 %v5483
  %5494 = vmatprep.subr.bf16.mxu0 0
  %5495 = vmatpush1.bf16.msra.mxu0 %v5482
  %5496 = vmatprep.subr.bf16.mxu0 0
  %5497 = vmatpush1.bf16.msra.mxu0 %v5481
  %5498 = vmatprep.subr.bf16.mxu0 0
  %5499 = vmatpush1.bf16.msra.mxu0 %v5480
  %5500 = vmatprep.subr.bf16.mxu0 0
  %5501 = vmatpush1.bf16.msra.mxu0 %v5479
  %5502 = vmatprep.subr.bf16.mxu0 0
  %5503 = vmatpush1.bf16.msra.mxu0 %v5478
  %5504 = vmatprep.subr.bf16.mxu0 0
  %5505 = vmatpush1.bf16.msra.mxu0 %v5477
  %5506 = vmatprep.subr.bf16.mxu0 0
  %5507 = vmatpush1.bf16.msra.mxu0 %v5476
  %5508 = vmatprep.subr.bf16.mxu0 0
  %5509 = vmatpush2.bf16.msra.mxu0 0
  %5510 = vmatprep.subr.bf16.mxu0 0
  %5511 = vmatpush2.bf16.msra.mxu0 0
  %5512 = vmatprep.subr.bf16.mxu0 0
  %5513 = vmatpush2.bf16.msra.mxu0 0
  %5514 = vmatprep.subr.bf16.mxu0 0
  %5515 = vmatpush2.bf16.msra.mxu0 0
  %5516 = vmatprep.subr.bf16.mxu0 0
  %5517 = vmatpush2.bf16.msra.mxu0 0
  %5518 = vmatprep.subr.bf16.mxu0 0
  %5519 = vmatpush2.bf16.msra.mxu0 0
  %5520 = vmatprep.subr.bf16.mxu0 0
  %5521 = vmatpush2.bf16.msra.mxu0 0
  %5522 = vmatprep.subr.bf16.mxu0 0
  %5523 = vmatpush2.bf16.msra.mxu0 0
  %5524 = vmatprep.mubr.bf16.mxu0 0
  %5525 = vmatmul.mubr.bf16.gmra.mxu0 %v5317
  %v5526 = vpop.f32.mrf.mxu0
  %v5527 = vadd.f32 %v5438, %v5526
  %v5528 = vpop.f32.mrf.mxu0
  %v5529 = vpop.f32.mrf.mxu0
  %v5530 = vadd.f32 %v5441, %v5529
  %v5531 = vpop.f32.mrf.mxu0
  %5532 = vdwg.mxu0
  %s5533 = scalar_lea.vmem %s7, 128
  %v5534 = vld [vmem:[%s5533] sm:$0xf]
  %v5535 = vld [vmem:[%s5533 + $0x4] sm:$0xf]
  %v5536 = vld [vmem:[%s5533 + $0x8] sm:$0xf]
  %v5537 = vld [vmem:[%s5533 + $0xc] sm:$0xf]
  %v5538 = vld [vmem:[%s5533 + $0x10] sm:$0xf]
  %v5539 = vld [vmem:[%s5533 + $0x14] sm:$0xf]
  %v5540 = vld [vmem:[%s5533 + $0x18] sm:$0xf]
  %v5541 = vld [vmem:[%s5533 + $0x1c] sm:$0xf]
  %v5542 = vld [vmem:[%s5533 + $0x20] sm:$0xf]
  %v5543 = vld [vmem:[%s5533 + $0x24] sm:$0xf]
  %v5544 = vld [vmem:[%s5533 + $0x28] sm:$0xf]
  %v5545 = vld [vmem:[%s5533 + $0x2c] sm:$0xf]
  %v5546 = vld [vmem:[%s5533 + $0x30] sm:$0xf]
  %v5547 = vld [vmem:[%s5533 + $0x34] sm:$0xf]
  %v5548 = vld [vmem:[%s5533 + $0x38] sm:$0xf]
  %v5549 = vld [vmem:[%s5533 + $0x3c] sm:$0xf]
  %v5566 = vunpack.c.l.b16 %v5534
  %v5567 = vunpack.c.l.b16 %v5535
  %v5568 = vunpack.c.l.b16 %v5536
  %v5569 = vunpack.c.l.b16 %v5537
  %v5570 = vunpack.c.l.b16 %v5538
  %v5571 = vunpack.c.l.b16 %v5539
  %v5572 = vunpack.c.l.b16 %v5540
  %v5573 = vunpack.c.l.b16 %v5541
  %v5574 = vunpack.c.l.b16 %v5542
  %v5575 = vunpack.c.l.b16 %v5543
  %v5576 = vunpack.c.l.b16 %v5544
  %v5577 = vunpack.c.l.b16 %v5545
  %v5578 = vunpack.c.l.b16 %v5546
  %v5579 = vunpack.c.l.b16 %v5547
  %v5580 = vunpack.c.l.b16 %v5548
  %v5581 = vunpack.c.l.b16 %v5549
  %v5582 = vpack.c.b16 %v5567, %v5566
  %v5583 = vpack.c.b16 %v5569, %v5568
  %v5584 = vpack.c.b16 %v5571, %v5570
  %v5585 = vpack.c.b16 %v5573, %v5572
  %v5586 = vpack.c.b16 %v5575, %v5574
  %v5587 = vpack.c.b16 %v5577, %v5576
  %v5588 = vpack.c.b16 %v5579, %v5578
  %v5589 = vpack.c.b16 %v5581, %v5580
  %5598 = vmatprep.subr.bf16.mxu0 0
  %5599 = vmatpush1.bf16.msra.mxu0 %v5589
  %5600 = vmatprep.subr.bf16.mxu0 0
  %5601 = vmatpush1.bf16.msra.mxu0 %v5588
  %5602 = vmatprep.subr.bf16.mxu0 0
  %5603 = vmatpush1.bf16.msra.mxu0 %v5587
  %5604 = vmatprep.subr.bf16.mxu0 0
  %5605 = vmatpush1.bf16.msra.mxu0 %v5586
  %5606 = vmatprep.subr.bf16.mxu0 0
  %5607 = vmatpush1.bf16.msra.mxu0 %v5585
  %5608 = vmatprep.subr.bf16.mxu0 0
  %5609 = vmatpush1.bf16.msra.mxu0 %v5584
  %5610 = vmatprep.subr.bf16.mxu0 0
  %5611 = vmatpush1.bf16.msra.mxu0 %v5583
  %5612 = vmatprep.subr.bf16.mxu0 0
  %5613 = vmatpush1.bf16.msra.mxu0 %v5582
  %5614 = vmatprep.subr.bf16.mxu0 0
  %5615 = vmatpush2.bf16.msra.mxu0 0
  %5616 = vmatprep.subr.bf16.mxu0 0
  %5617 = vmatpush2.bf16.msra.mxu0 0
  %5618 = vmatprep.subr.bf16.mxu0 0
  %5619 = vmatpush2.bf16.msra.mxu0 0
  %5620 = vmatprep.subr.bf16.mxu0 0
  %5621 = vmatpush2.bf16.msra.mxu0 0
  %5622 = vmatprep.subr.bf16.mxu0 0
  %5623 = vmatpush2.bf16.msra.mxu0 0
  %5624 = vmatprep.subr.bf16.mxu0 0
  %5625 = vmatpush2.bf16.msra.mxu0 0
  %5626 = vmatprep.subr.bf16.mxu0 0
  %5627 = vmatpush2.bf16.msra.mxu0 0
  %5628 = vmatprep.subr.bf16.mxu0 0
  %5629 = vmatpush2.bf16.msra.mxu0 0
  %5630 = vmatprep.mubr.bf16.mxu0 0
  %5631 = vmatmul.mubr.bf16.gmra.mxu0 %v5319
  %v5632 = vpop.f32.mrf.mxu0
  %v5633 = vadd.f32 0.0, %v5632
  %v5634 = vpop.f32.mrf.mxu0
  %v5635 = vpop.f32.mrf.mxu0
  %v5636 = vadd.f32 0.0, %v5635
  %v5637 = vpop.f32.mrf.mxu0
  %5638 = vdwg.mxu0
  %v5639 = vadd.f32 %v5527, %v5633
  %v5640 = vadd.f32 %v5530, %v5636
  %s5641 = scalar_lea.vmem %s7, 192
  %v5642 = vld [vmem:[%s5641] sm:$0xf]
  %v5643 = vld [vmem:[%s5641 + $0x4] sm:$0xf]
  %v5644 = vld [vmem:[%s5641 + $0x8] sm:$0xf]
  %v5645 = vld [vmem:[%s5641 + $0xc] sm:$0xf]
  %v5646 = vld [vmem:[%s5641 + $0x10] sm:$0xf]
  %v5647 = vld [vmem:[%s5641 + $0x14] sm:$0xf]
  %v5648 = vld [vmem:[%s5641 + $0x18] sm:$0xf]
  %v5649 = vld [vmem:[%s5641 + $0x1c] sm:$0xf]
  %v5650 = vld [vmem:[%s5641 + $0x20] sm:$0xf]
  %v5651 = vld [vmem:[%s5641 + $0x24] sm:$0xf]
  %v5652 = vld [vmem:[%s5641 + $0x28] sm:$0xf]
  %v5653 = vld [vmem:[%s5641 + $0x2c] sm:$0xf]
  %v5654 = vld [vmem:[%s5641 + $0x30] sm:$0xf]
  %v5655 = vld [vmem:[%s5641 + $0x34] sm:$0xf]
  %v5656 = vld [vmem:[%s5641 + $0x38] sm:$0xf]
  %v5657 = vld [vmem:[%s5641 + $0x3c] sm:$0xf]
  %v5674 = vunpack.c.l.b16 %v5642
  %v5675 = vunpack.c.l.b16 %v5643
  %v5676 = vunpack.c.l.b16 %v5644
  %v5677 = vunpack.c.l.b16 %v5645
  %v5678 = vunpack.c.l.b16 %v5646
  %v5679 = vunpack.c.l.b16 %v5647
  %v5680 = vunpack.c.l.b16 %v5648
  %v5681 = vunpack.c.l.b16 %v5649
  %v5682 = vunpack.c.l.b16 %v5650
  %v5683 = vunpack.c.l.b16 %v5651
  %v5684 = vunpack.c.l.b16 %v5652
  %v5685 = vunpack.c.l.b16 %v5653
  %v5686 = vunpack.c.l.b16 %v5654
  %v5687 = vunpack.c.l.b16 %v5655
  %v5688 = vunpack.c.l.b16 %v5656
  %v5689 = vunpack.c.l.b16 %v5657
  %v5690 = vpack.c.b16 %v5675, %v5674
  %v5691 = vpack.c.b16 %v5677, %v5676
  %v5692 = vpack.c.b16 %v5679, %v5678
  %v5693 = vpack.c.b16 %v5681, %v5680
  %v5694 = vpack.c.b16 %v5683, %v5682
  %v5695 = vpack.c.b16 %v5685, %v5684
  %v5696 = vpack.c.b16 %v5687, %v5686
  %v5697 = vpack.c.b16 %v5689, %v5688
  %5706 = vmatprep.subr.bf16.mxu0 0
  %5707 = vmatpush1.bf16.msra.mxu0 %v5697
  %5708 = vmatprep.subr.bf16.mxu0 0
  %5709 = vmatpush1.bf16.msra.mxu0 %v5696
  %5710 = vmatprep.subr.bf16.mxu0 0
  %5711 = vmatpush1.bf16.msra.mxu0 %v5695
  %5712 = vmatprep.subr.bf16.mxu0 0
  %5713 = vmatpush1.bf16.msra.mxu0 %v5694
  %5714 = vmatprep.subr.bf16.mxu0 0
  %5715 = vmatpush1.bf16.msra.mxu0 %v5693
  %5716 = vmatprep.subr.bf16.mxu0 0
  %5717 = vmatpush1.bf16.msra.mxu0 %v5692
  %5718 = vmatprep.subr.bf16.mxu0 0
  %5719 = vmatpush1.bf16.msra.mxu0 %v5691
  %5720 = vmatprep.subr.bf16.mxu0 0
  %5721 = vmatpush1.bf16.msra.mxu0 %v5690
  %5722 = vmatprep.subr.bf16.mxu0 0
  %5723 = vmatpush2.bf16.msra.mxu0 0
  %5724 = vmatprep.subr.bf16.mxu0 0
  %5725 = vmatpush2.bf16.msra.mxu0 0
  %5726 = vmatprep.subr.bf16.mxu0 0
  %5727 = vmatpush2.bf16.msra.mxu0 0
  %5728 = vmatprep.subr.bf16.mxu0 0
  %5729 = vmatpush2.bf16.msra.mxu0 0
  %5730 = vmatprep.subr.bf16.mxu0 0
  %5731 = vmatpush2.bf16.msra.mxu0 0
  %5732 = vmatprep.subr.bf16.mxu0 0
  %5733 = vmatpush2.bf16.msra.mxu0 0
  %5734 = vmatprep.subr.bf16.mxu0 0
  %5735 = vmatpush2.bf16.msra.mxu0 0
  %5736 = vmatprep.subr.bf16.mxu0 0
  %5737 = vmatpush2.bf16.msra.mxu0 0
  %5738 = vmatprep.mubr.bf16.mxu0 0
  %5739 = vmatmul.mubr.bf16.gmra.mxu0 %v5320
  %v5740 = vpop.f32.mrf.mxu0
  %v5741 = vadd.f32 0.0, %v5740
  %v5742 = vpop.f32.mrf.mxu0
  %v5743 = vpop.f32.mrf.mxu0
  %v5744 = vadd.f32 0.0, %v5743
  %v5745 = vpop.f32.mrf.mxu0
  %5746 = vdwg.mxu0
  %v5747 = vadd.f32 %v5639, %v5741
  %v5748 = vadd.f32 %v5640, %v5744
  %s5749 = scalar_lea.vmem %s7, 256
  %v5750 = vld [vmem:[%s5749] sm:$0xf]
  %v5751 = vld [vmem:[%s5749 + $0x4] sm:$0xf]
  %v5752 = vld [vmem:[%s5749 + $0x8] sm:$0xf]
  %v5753 = vld [vmem:[%s5749 + $0xc] sm:$0xf]
  %v5754 = vld [vmem:[%s5749 + $0x10] sm:$0xf]
  %v5755 = vld [vmem:[%s5749 + $0x14] sm:$0xf]
  %v5756 = vld [vmem:[%s5749 + $0x18] sm:$0xf]
  %v5757 = vld [vmem:[%s5749 + $0x1c] sm:$0xf]
  %v5758 = vld [vmem:[%s5749 + $0x20] sm:$0xf]
  %v5759 = vld [vmem:[%s5749 + $0x24] sm:$0xf]
  %v5760 = vld [vmem:[%s5749 + $0x28] sm:$0xf]
  %v5761 = vld [vmem:[%s5749 + $0x2c] sm:$0xf]
  %v5762 = vld [vmem:[%s5749 + $0x30] sm:$0xf]
  %v5763 = vld [vmem:[%s5749 + $0x34] sm:$0xf]
  %v5764 = vld [vmem:[%s5749 + $0x38] sm:$0xf]
  %v5765 = vld [vmem:[%s5749 + $0x3c] sm:$0xf]
  %v5782 = vunpack.c.l.b16 %v5750
  %v5783 = vunpack.c.l.b16 %v5751
  %v5784 = vunpack.c.l.b16 %v5752
  %v5785 = vunpack.c.l.b16 %v5753
  %v5786 = vunpack.c.l.b16 %v5754
  %v5787 = vunpack.c.l.b16 %v5755
  %v5788 = vunpack.c.l.b16 %v5756
  %v5789 = vunpack.c.l.b16 %v5757
  %v5790 = vunpack.c.l.b16 %v5758
  %v5791 = vunpack.c.l.b16 %v5759
  %v5792 = vunpack.c.l.b16 %v5760
  %v5793 = vunpack.c.l.b16 %v5761
  %v5794 = vunpack.c.l.b16 %v5762
  %v5795 = vunpack.c.l.b16 %v5763
  %v5796 = vunpack.c.l.b16 %v5764
  %v5797 = vunpack.c.l.b16 %v5765
  %v5798 = vpack.c.b16 %v5783, %v5782
  %v5799 = vpack.c.b16 %v5785, %v5784
  %v5800 = vpack.c.b16 %v5787, %v5786
  %v5801 = vpack.c.b16 %v5789, %v5788
  %v5802 = vpack.c.b16 %v5791, %v5790
  %v5803 = vpack.c.b16 %v5793, %v5792
  %v5804 = vpack.c.b16 %v5795, %v5794
  %v5805 = vpack.c.b16 %v5797, %v5796
  %5814 = vmatprep.subr.bf16.mxu0 0
  %5815 = vmatpush1.bf16.msra.mxu0 %v5805
  %5816 = vmatprep.subr.bf16.mxu0 0
  %5817 = vmatpush1.bf16.msra.mxu0 %v5804
  %5818 = vmatprep.subr.bf16.mxu0 0
  %5819 = vmatpush1.bf16.msra.mxu0 %v5803
  %5820 = vmatprep.subr.bf16.mxu0 0
  %5821 = vmatpush1.bf16.msra.mxu0 %v5802
  %5822 = vmatprep.subr.bf16.mxu0 0
  %5823 = vmatpush1.bf16.msra.mxu0 %v5801
  %5824 = vmatprep.subr.bf16.mxu0 0
  %5825 = vmatpush1.bf16.msra.mxu0 %v5800
  %5826 = vmatprep.subr.bf16.mxu0 0
  %5827 = vmatpush1.bf16.msra.mxu0 %v5799
  %5828 = vmatprep.subr.bf16.mxu0 0
  %5829 = vmatpush1.bf16.msra.mxu0 %v5798
  %5830 = vmatprep.subr.bf16.mxu0 0
  %5831 = vmatpush2.bf16.msra.mxu0 0
  %5832 = vmatprep.subr.bf16.mxu0 0
  %5833 = vmatpush2.bf16.msra.mxu0 0
  %5834 = vmatprep.subr.bf16.mxu0 0
  %5835 = vmatpush2.bf16.msra.mxu0 0
  %5836 = vmatprep.subr.bf16.mxu0 0
  %5837 = vmatpush2.bf16.msra.mxu0 0
  %5838 = vmatprep.subr.bf16.mxu0 0
  %5839 = vmatpush2.bf16.msra.mxu0 0
  %5840 = vmatprep.subr.bf16.mxu0 0
  %5841 = vmatpush2.bf16.msra.mxu0 0
  %5842 = vmatprep.subr.bf16.mxu0 0
  %5843 = vmatpush2.bf16.msra.mxu0 0
  %5844 = vmatprep.subr.bf16.mxu0 0
  %5845 = vmatpush2.bf16.msra.mxu0 0
  %5846 = vmatprep.mubr.bf16.mxu0 0
  %5847 = vmatmul.mubr.bf16.gmra.mxu0 %v5321
  %v5848 = vpop.f32.mrf.mxu0
  %v5849 = vadd.f32 0.0, %v5848
  %v5850 = vpop.f32.mrf.mxu0
  %v5851 = vpop.f32.mrf.mxu0
  %v5852 = vadd.f32 0.0, %v5851
  %v5853 = vpop.f32.mrf.mxu0
  %5854 = vdwg.mxu0
  %v5855 = vadd.f32 %v5747, %v5849
  %v5856 = vadd.f32 %v5748, %v5852
  %v5857 = vld [vmem:[%s8] sm:$0x1]
  %v5859 = vlaneseq
  %v5860 = vshrl.u32 %v5859, 7
  %v5861 = vsub.s32 0, %v5860
  %v5862 = vrot.slane %v5857, %v5861
  %v5864 = vadd.f32 %v5855, %v5862
  %v5865 = vadd.f32 %v5856, %v5862
  %v5866 = vmax.f32 %v5864, 0.0
  %v5867 = vmax.f32 %v5865, 0.0
  %v5868 = vpack.c.bf16 %v5867, %v5866
  %v5869 = vld [vmem:[%s9] sm:$0xf]
  %v5870 = vld [vmem:[%s9 + $0x4] sm:$0xf]
  %v5871 = vld [vmem:[%s9 + $0x8] sm:$0xf]
  %v5872 = vld [vmem:[%s9 + $0xc] sm:$0xf]
  %v5873 = vld [vmem:[%s9 + $0x10] sm:$0xf]
  %v5874 = vld [vmem:[%s9 + $0x14] sm:$0xf]
  %v5875 = vld [vmem:[%s9 + $0x18] sm:$0xf]
  %v5876 = vld [vmem:[%s9 + $0x1c] sm:$0xf]
  %v5877 = vld [vmem:[%s9 + $0x20] sm:$0xf]
  %v5878 = vld [vmem:[%s9 + $0x24] sm:$0xf]
  %v5879 = vld [vmem:[%s9 + $0x28] sm:$0xf]
  %v5880 = vld [vmem:[%s9 + $0x2c] sm:$0xf]
  %v5881 = vld [vmem:[%s9 + $0x30] sm:$0xf]
  %v5882 = vld [vmem:[%s9 + $0x34] sm:$0xf]
  %v5883 = vld [vmem:[%s9 + $0x38] sm:$0xf]
  %v5884 = vld [vmem:[%s9 + $0x3c] sm:$0xf]
  %v5885 = vld [vmem:[%s10] sm:$0x1]
  %v5887 = vlaneseq
  %v5888 = vshrl.u32 %v5887, 7
  %v5889 = vsub.s32 0, %v5888
  %v5890 = vrot.slane %v5885, %v5889
  %v5908 = vunpack.c.l.b16 %v5869
  %v5909 = vunpack.c.l.b16 %v5870
  %v5910 = vunpack.c.l.b16 %v5871
  %v5911 = vunpack.c.l.b16 %v5872
  %v5912 = vunpack.c.l.b16 %v5873
  %v5913 = vunpack.c.l.b16 %v5874
  %v5914 = vunpack.c.l.b16 %v5875
  %v5915 = vunpack.c.l.b16 %v5876
  %v5916 = vunpack.c.l.b16 %v5877
  %v5917 = vunpack.c.l.b16 %v5878
  %v5918 = vunpack.c.l.b16 %v5879
  %v5919 = vunpack.c.l.b16 %v5880
  %v5920 = vunpack.c.l.b16 %v5881
  %v5921 = vunpack.c.l.b16 %v5882
  %v5922 = vunpack.c.l.b16 %v5883
  %v5923 = vunpack.c.l.b16 %v5884
  %v5924 = vpack.c.b16 %v5909, %v5908
  %v5925 = vpack.c.b16 %v5911, %v5910
  %v5926 = vpack.c.b16 %v5913, %v5912
  %v5927 = vpack.c.b16 %v5915, %v5914
  %v5928 = vpack.c.b16 %v5917, %v5916
  %v5929 = vpack.c.b16 %v5919, %v5918
  %v5930 = vpack.c.b16 %v5921, %v5920
  %v5931 = vpack.c.b16 %v5923, %v5922
  %5940 = vmatprep.subr.bf16.mxu0 0
  %5941 = vmatpush1.bf16.msra.mxu0 %v5931
  %5942 = vmatprep.subr.bf16.mxu0 0
  %5943 = vmatpush1.bf16.msra.mxu0 %v5930
  %5944 = vmatprep.subr.bf16.mxu0 0
  %5945 = vmatpush1.bf16.msra.mxu0 %v5929
  %5946 = vmatprep.subr.bf16.mxu0 0
  %5947 = vmatpush1.bf16.msra.mxu0 %v5928
  %5948 = vmatprep.subr.bf16.mxu0 0
  %5949 = vmatpush1.bf16.msra.mxu0 %v5927
  %5950 = vmatprep.subr.bf16.mxu0 0
  %5951 = vmatpush1.bf16.msra.mxu0 %v5926
  %5952 = vmatprep.subr.bf16.mxu0 0
  %5953 = vmatpush1.bf16.msra.mxu0 %v5925
  %5954 = vmatprep.subr.bf16.mxu0 0
  %5955 = vmatpush1.bf16.msra.mxu0 %v5924
  %5956 = vmatprep.subr.bf16.mxu0 0
  %5957 = vmatpush2.bf16.msra.mxu0 0
  %5958 = vmatprep.subr.bf16.mxu0 0
  %5959 = vmatpush2.bf16.msra.mxu0 0
  %5960 = vmatprep.subr.bf16.mxu0 0
  %5961 = vmatpush2.bf16.msra.mxu0 0
  %5962 = vmatprep.subr.bf16.mxu0 0
  %5963 = vmatpush2.bf16.msra.mxu0 0
  %5964 = vmatprep.subr.bf16.mxu0 0
  %5965 = vmatpush2.bf16.msra.mxu0 0
  %5966 = vmatprep.subr.bf16.mxu0 0
  %5967 = vmatpush2.bf16.msra.mxu0 0
  %5968 = vmatprep.subr.bf16.mxu0 0
  %5969 = vmatpush2.bf16.msra.mxu0 0
  %5970 = vmatprep.subr.bf16.mxu0 0
  %5971 = vmatpush2.bf16.msra.mxu0 0
  %5972 = vmatprep.mubr.bf16.mxu0 0
  %5973 = vmatmul.mubr.bf16.gmra.mxu0 %v5868
  %v5974 = vpop.f32.mrf.mxu0
  %v5975 = vadd.f32 %v5890, %v5974
  %v5976 = vpop.f32.mrf.mxu0
  %v5977 = vpop.f32.mrf.mxu0
  %v5978 = vadd.f32 %v5890, %v5977
  %v5979 = vpop.f32.mrf.mxu0
  %5980 = vdwg.mxu0
  %v5981 = vmax.f32 %v5975, 0.0
  %v5982 = vmax.f32 %v5978, 0.0
  %v5983 = vpack.c.bf16 %v5982, %v5981
  %v5984 = vld [vmem:[%s11] sm:$0xf]
  %v5985 = vld [vmem:[%s11 + $0x4] sm:$0xf]
  %v5986 = vld [vmem:[%s11 + $0x8] sm:$0xf]
  %v5987 = vld [vmem:[%s11 + $0xc] sm:$0xf]
  %v5988 = vld [vmem:[%s11 + $0x10] sm:$0xf]
  %v5989 = vld [vmem:[%s11 + $0x14] sm:$0xf]
  %v5990 = vld [vmem:[%s11 + $0x18] sm:$0xf]
  %v5991 = vld [vmem:[%s11 + $0x1c] sm:$0xf]
  %v5992 = vld [vmem:[%s11 + $0x20] sm:$0xf]
  %v5993 = vld [vmem:[%s11 + $0x24] sm:$0xf]
  %v5994 = vld [vmem:[%s11 + $0x28] sm:$0xf]
  %v5995 = vld [vmem:[%s11 + $0x2c] sm:$0xf]
  %v5996 = vld [vmem:[%s11 + $0x30] sm:$0xf]
  %v5997 = vld [vmem:[%s11 + $0x34] sm:$0xf]
  %v5998 = vld [vmem:[%s11 + $0x38] sm:$0xf]
  %v5999 = vld [vmem:[%s11 + $0x3c] sm:$0xf]
  %v6000 = vld [vmem:[%s12] sm:$0x1]
  %v6002 = vlaneseq
  %v6003 = vshrl.u32 %v6002, 7
  %v6004 = vsub.s32 0, %v6003
  %v6005 = vrot.slane %v6000, %v6004
  %v6023 = vunpack.c.l.b16 %v5984
  %v6024 = vunpack.c.l.b16 %v5985
  %v6025 = vunpack.c.l.b16 %v5986
  %v6026 = vunpack.c.l.b16 %v5987
  %v6027 = vunpack.c.l.b16 %v5988
  %v6028 = vunpack.c.l.b16 %v5989
  %v6029 = vunpack.c.l.b16 %v5990
  %v6030 = vunpack.c.l.b16 %v5991
  %v6031 = vunpack.c.l.b16 %v5992
  %v6032 = vunpack.c.l.b16 %v5993
  %v6033 = vunpack.c.l.b16 %v5994
  %v6034 = vunpack.c.l.b16 %v5995
  %v6035 = vunpack.c.l.b16 %v5996
  %v6036 = vunpack.c.l.b16 %v5997
  %v6037 = vunpack.c.l.b16 %v5998
  %v6038 = vunpack.c.l.b16 %v5999
  %v6039 = vpack.c.b16 %v6024, %v6023
  %v6040 = vpack.c.b16 %v6026, %v6025
  %v6041 = vpack.c.b16 %v6028, %v6027
  %v6042 = vpack.c.b16 %v6030, %v6029
  %v6043 = vpack.c.b16 %v6032, %v6031
  %v6044 = vpack.c.b16 %v6034, %v6033
  %v6045 = vpack.c.b16 %v6036, %v6035
  %v6046 = vpack.c.b16 %v6038, %v6037
  %6055 = vmatprep.subr.bf16.mxu0 0
  %6056 = vmatpush1.bf16.msra.mxu0 %v6046
  %6057 = vmatprep.subr.bf16.mxu0 0
  %6058 = vmatpush1.bf16.msra.mxu0 %v6045
  %6059 = vmatprep.subr.bf16.mxu0 0
  %6060 = vmatpush1.bf16.msra.mxu0 %v6044
  %6061 = vmatprep.subr.bf16.mxu0 0
  %6062 = vmatpush1.bf16.msra.mxu0 %v6043
  %6063 = vmatprep.subr.bf16.mxu0 0
  %6064 = vmatpush1.bf16.msra.mxu0 %v6042
  %6065 = vmatprep.subr.bf16.mxu0 0
  %6066 = vmatpush1.bf16.msra.mxu0 %v6041
  %6067 = vmatprep.subr.bf16.mxu0 0
  %6068 = vmatpush1.bf16.msra.mxu0 %v6040
  %6069 = vmatprep.subr.bf16.mxu0 0
  %6070 = vmatpush1.bf16.msra.mxu0 %v6039
  %6071 = vmatprep.subr.bf16.mxu0 0
  %6072 = vmatpush2.bf16.msra.mxu0 0
  %6073 = vmatprep.subr.bf16.mxu0 0
  %6074 = vmatpush2.bf16.msra.mxu0 0
  %6075 = vmatprep.subr.bf16.mxu0 0
  %6076 = vmatpush2.bf16.msra.mxu0 0
  %6077 = vmatprep.subr.bf16.mxu0 0
  %6078 = vmatpush2.bf16.msra.mxu0 0
  %6079 = vmatprep.subr.bf16.mxu0 0
  %6080 = vmatpush2.bf16.msra.mxu0 0
  %6081 = vmatprep.subr.bf16.mxu0 0
  %6082 = vmatpush2.bf16.msra.mxu0 0
  %6083 = vmatprep.subr.bf16.mxu0 0
  %6084 = vmatpush2.bf16.msra.mxu0 0
  %6085 = vmatprep.subr.bf16.mxu0 0
  %6086 = vmatpush2.bf16.msra.mxu0 0
  %6087 = vmatprep.mubr.bf16.mxu0 0
  %6088 = vmatmul.mubr.bf16.gmra.mxu0 %v5983
  %v6089 = vpop.f32.mrf.mxu0
  %v6090 = vadd.f32 %v6005, %v6089
  %v6091 = vpop.f32.mrf.mxu0
  %v6092 = vpop.f32.mrf.mxu0
  %v6093 = vadd.f32 %v6005, %v6092
  %v6094 = vpop.f32.mrf.mxu0
  %6095 = vdwg.mxu0
  %6096 = vst [vmem:[%s13] sm:$0xff] %v6090
  %6097 = vst [vmem:[%s13 + $0x8] sm:$0xff] %v6093
  // Predicated region
  $region54: #{net_forward.1} parent=0 // pred_check
    _
  $region55: #{net_forward.1} parent=0 // pred_check_branch
    %6099 = sbr.rel (0) target = $region57
  $region56: #{net_forward.1} parent=0 // pred_region
    _
  $region57: #{net_forward.1} parent=0 // pred_fallthru
    _
  // Predicated region
  $region58: #{net_forward.1} parent=0 // pred_check
    _
  $region59: #{net_forward.1} parent=0 // pred_check_branch
    %6101 = sbr.rel (0) target = $region61
  $region60: #{net_forward.1} parent=0 // pred_region
    _
  $region61: #{net_forward.1} parent=0 // pred_fallthru
    _

</llo_original>
